<compile_context>
chip_gen: v6e
topology: v6e:2x2x1
jax: 0.10.0
libtpu: 0.0.40
codegen_flags: <defaults>
</compile_context>

<pallas_src>
import math

import jax
import jax.numpy as jnp
import numpy as np
from jax.experimental import pallas as pl
from jax.experimental.pallas import tpu as pltpu


_SQRT_2_OVER_PI = math.sqrt(2.0 / math.pi)


def _gelu_tanh(x):
    # tanh-approximation GELU: the cubic is 3 cheap VPU ops, tanh goes to the EUP.
    # Max abs deviation from torch's exact (erf) GELU is ~3e-4, and every GELU'd
    # branch is scaled by alpha=0.01 in this layer, so end-to-end impact ~1e-5.
    # TODO(synk): switch to lax.erf if exact-erf GELU is required bit-for-bit.
    return 0.5 * x * (1.0 + jnp.tanh(_SQRT_2_OVER_PI * (x + 0.044715 * x * x * x)))


# ----------------------------- Pallas kernel -----------------------------

def _make_decoder_kernel(n_heads):
    H = n_heads

    def kernel(xq_ref, xkv_ref, enc_ref,
               wq, bq, wkv, bkv, wo, bo,            # shared self-attention params
               w1, b1, w2, b2,                      # MLP params
               alpha_ref,                           # (3,) residual alphas in SMEM
               out_ref):
        tq, E = xq_ref.shape[1], xq_ref.shape[2]
        S = xkv_ref.shape[1]
        d = E // H
        bf16 = jnp.bfloat16
        f32 = jnp.float32

        def attention(kv_bf, q_f32):
            # Wide, lane-dense projections (single MXU passes):
            #   Q  : (tq,E) x (E,E)   -- 1/sqrt(d) already folded into wq/bq
            #   KV : (S,E)  x (E,2E)  -- K and V weights fused
            Q = (jnp.dot(q_f32.astype(bf16), wq[...],
                         preferred_element_type=f32) + bq[...]).astype(bf16)
            KV = jnp.dot(kv_bf, wkv[...], preferred_element_type=f32) + bkv[...]
            K = KV[:, :E].astype(bf16)
            V = KV[:, E:].astype(bf16)

            # Per-head attention core (unrolled; each op is a plain 2-D matmul).
            # TODO(synk): masked_fill(mask == 0, -1e9) path not implemented.
            outs = []
            for h in range(H):
                lo = h * d
                s = jnp.einsum("qd,kd->qk", Q[:, lo:lo + d], K[:, lo:lo + d],
                               preferred_element_type=f32)          # (tq, S)
                s = s - jnp.max(s, axis=-1, keepdims=True)
                p = jnp.exp(s)
                p = p * pl.reciprocal(jnp.sum(p, axis=-1, keepdims=True),
                                      approx=True)
                outs.append(jnp.dot(p.astype(bf16), V[:, lo:lo + d],
                                    preferred_element_type=f32))    # (tq, d)

            # Head merge + single full-width output projection (K = E).
            o = jnp.concatenate(outs, axis=-1).astype(bf16)         # (tq, E)
            return _gelu_tanh(jnp.dot(o, wo[...],
                                      preferred_element_type=f32) + bo[...])

        def mlp(xin):
            h = _gelu_tanh(jnp.dot(xin.astype(bf16), w1[...],
                                   preferred_element_type=f32) + b1[...])
            return _gelu_tanh(jnp.dot(h.astype(bf16), w2[...],
                                      preferred_element_type=f32) + b2[...])

        a1 = alpha_ref[0]
        a2 = alpha_ref[1]
        a3 = alpha_ref[2]

        xq = xq_ref[0]                     # (tq, E) f32: query rows + residual base
        xkv_bf = xkv_ref[0].astype(bf16)   # (S, E) bf16: K/V source attn1 (hoisted cast)
        enc_bf = enc_ref[0].astype(bf16)   # (S, E) bf16: K/V source attn2 (hoisted cast)

        # residual 1: masked self-attention (mask=None path); K/V from ORIGINAL x
        x1 = xq + a1 * attention(xkv_bf, xq)
        # residual 2: cross attention -- original PyTorch reuses selfAttention weights
        x2 = x1 + a2 * attention(enc_bf, x1)
        # residual 3: MLP
        out_ref[0] = (x2 + a3 * mlp(x2)).astype(out_ref.dtype)

    return kernel


# ----------------------------- wrapper -----------------------------

def prepare_params(params):
    """One-time weight prep (scale fold, K|V fusion, bf16 casts). Amortize across calls."""
    E = params["wq"].shape[0]
    H = int(params["n_heads"])
    assert E % H == 0, "emb_dim must be divisible by n_heads"
    d = E // H
    inv_scale = 1.0 / math.sqrt(d)
    f32, bf16 = jnp.float32, jnp.bfloat16
    return dict(
        n_heads=H,
        # softmax scale folded into the Q projection
        wq=(params["wq"] * inv_scale).astype(bf16),                       # (E, E)
        bq=(params["bq"] * inv_scale).reshape(1, E).astype(f32),
        # K and V weights fused into one lane-dense (E, 2E) matmul / DMA
        wkv=jnp.concatenate([params["wk"], params["wv"]], axis=1).astype(bf16),
        bkv=jnp.concatenate([params["bk"], params["bv"]]).reshape(1, 2 * E).astype(f32),
        wo=params["wo"].astype(bf16),                                     # (E, E)
        bo=params["bo"].reshape(1, E).astype(f32),
        w1=params["w1"].astype(bf16),                                     # (E, I)
        b1=params["b1"].reshape(1, -1).astype(f32),
        w2=params["w2"].astype(bf16),                                     # (I, E)
        b2=params["b2"].reshape(1, E).astype(f32),
        alphas=params["alphas"].astype(f32),                              # (3,)
    )


def _pick_q_tile(S):
    # Largest "nice" query tile that divides S; fall back to the whole sequence.
    for cand in (512, 256, 128):
        if S > cand and S % cand == 0:
            return cand
    return S


def _vmem_cap_bytes():
    try:
        cap = int(getattr(pltpu.get_tpu_info(), "vmem_capacity_bytes", 0))
        if cap > 0:
            return cap
    except Exception:
        pass
    return 128 * 1024 * 1024   # v5e / v6e physical VMEM


def decoder_layer(x, encoded, prep):
    """x, encoded: (B, S, E) float32. `prep` = prepare_params(params)."""
    B, S, E = x.shape
    H = int(prep["n_heads"])
    I = prep["w1"].shape[1]
    tq = _pick_q_tile(S)
    nq = S // tq

    weight_ops = [prep[k] for k in
                  ("wq", "bq", "wkv", "bkv", "wo", "bo", "w1", "b1", "w2", "b2")]
    # x appears twice: once as the query/residual tile, once as the full K/V source.
    operands = [x, x, encoded] + weight_ops + [prep["alphas"]]

    def invariant(arr):
        nd = arr.ndim
        return pl.BlockSpec(arr.shape, lambda b, q, _n=nd: (0,) * _n)

    in_specs = [
        pl.BlockSpec((1, tq, E), lambda b, q: (b, q, 0)),   # query tile
        pl.BlockSpec((1, S, E), lambda b, q: (b, 0, 0)),    # full x  (K/V, attn1)
        pl.BlockSpec((1, S, E), lambda b, q: (b, 0, 0)),    # full enc (K/V, attn2)
    ]
    in_specs += [invariant(a) for a in weight_ops]           # grid-invariant weights
    in_specs += [pl.BlockSpec(memory_space=pltpu.MemorySpace.SMEM)]  # alphas
    out_spec = pl.BlockSpec((1, tq, E), lambda b, q: (b, q, 0))

    # Scoped-VMEM limit from the actual per-step residency (double-buffered tiles
    # and weights + in-kernel intermediates), clamped to the device capacity.
    tile_bytes = 4 * (2 * tq * E + 2 * S * E)                    # xq + out + xkv + enc (f32)
    weight_bytes = sum(int(np.prod(a.shape)) * a.dtype.itemsize for a in weight_ops)
    inter_bytes = 4 * (3 * tq * E + 3 * S * E + 3 * tq * S + 2 * tq * I)
    need = 2 * tile_bytes + 2 * weight_bytes + inter_bytes
    vmem_limit = int(min(_vmem_cap_bytes(), max(32 * 1024 * 1024, int(1.5 * need))))

    kernel = _make_decoder_kernel(H)

    return pl.pallas_call(
        kernel,
        out_shape=jax.ShapeDtypeStruct((B, S, E), jnp.float32),
        grid=(B, nq),
        in_specs=in_specs,
        out_specs=out_spec,
        compiler_params=pltpu.CompilerParams(
            # (batch, query-tile) both independent -> megacore even when B is odd/1
            dimension_semantics=("parallel", "parallel"),
            vmem_limit_bytes=vmem_limit,
        ),
    )(*operands)


# ----------------------------- plain-JAX reference (for checking) -----------------------------

def _reference(x, encoded, params):
    E = x.shape[-1]
    H = int(params["n_heads"])
    d = E // H
    scale = math.sqrt(d)

    def gelu(v):  # exact (erf) GELU, f32 -- matches torch nn.GELU default
        return 0.5 * v * (1.0 + jax.lax.erf(v / math.sqrt(2.0)))

    def attention(xv, xk, xq):
        Q = xq @ params["wq"] + params["bq"]
        K = xk @ params["wk"] + params["bk"]
        V = xv @ params["wv"] + params["bv"]
        outs = []
        for h in range(H):
            q = Q[..., h * d:(h + 1) * d]
            k = K[..., h * d:(h + 1) * d]
            v = V[..., h * d:(h + 1) * d]
            s = jnp.einsum("bqd,bkd->bqk", q, k) / scale
            p = jax.nn.softmax(s, axis=-1)
            outs.append(jnp.einsum("bqk,bkd->bqd", p, v))
        res = jnp.concatenate(outs, axis=-1)
        return gelu(res @ params["wo"] + params["bo"])

    a = params["alphas"]
    x = x + a[0] * attention(x, x, x)
    x = x + a[1] * attention(encoded, encoded, x)
    h = gelu(x @ params["w1"] + params["b1"])
    y = gelu(h @ params["w2"] + params["b2"])
    return x + a[2] * y


# ----------------------------- parameter init -----------------------------

def _init_linear(key, fan_in, fan_out):
    kw, kb = jax.random.split(key)
    bound = 1.0 / math.sqrt(fan_in)
    w = jax.random.uniform(kw, (fan_in, fan_out), jnp.float32, -bound, bound)
    b = jax.random.uniform(kb, (fan_out,), jnp.float32, -bound, bound)
    return w, b


def init_params(key, emb_dim, intermediate_dim, n_heads):
    ks = jax.random.split(key, 6)
    wq, bq = _init_linear(ks[0], emb_dim, emb_dim)
    wk, bk = _init_linear(ks[1], emb_dim, emb_dim)
    wv, bv = _init_linear(ks[2], emb_dim, emb_dim)
    wo, bo = _init_linear(ks[3], emb_dim, emb_dim)
    w1, b1 = _init_linear(ks[4], emb_dim, intermediate_dim)
    w2, b2 = _init_linear(ks[5], intermediate_dim, emb_dim)
    # encoderAttention params exist in the PyTorch module but are never used in forward.
    return dict(
        wq=wq, bq=bq, wk=wk, bk=bk, wv=wv, bv=bv, wo=wo, bo=bo,
        w1=w1, b1=b1, w2=w2, b2=b2,
        alphas=jnp.array([0.01, 0.01, 0.01], jnp.float32),
        n_heads=n_heads,
    )


# ----------------------------- main -----------------------------

if __name__ == "__main__":
    B, S, E, I, H = 2, 8, 32, 64, 8

    key = jax.random.PRNGKey(0)
    kx, kenc, kp = jax.random.split(key, 3)
    x = jax.random.normal(kx, (B, S, E), jnp.float32)
    encoded = jax.random.normal(kenc, (B, S, E), jnp.float32)
    params = init_params(kp, E, I, H)

    prep = prepare_params(params)   # one-time weight prep, reused across calls
    out = jax.block_until_ready(decoder_layer(x, encoded, prep))

    ref = jax.block_until_ready(_reference(x, encoded, params))
    # Kernel uses bf16 matmul operands (f32 accumulation) + tanh GELU; the
    # alpha=0.01 residual scaling keeps the end-to-end deviation ~1e-4.
    np.testing.assert_allclose(np.asarray(out), np.asarray(ref), rtol=2e-3, atol=2e-3)

    print("KERNEL_OK")
</pallas_src>

<mosaic_0001>
module attributes {stable_mosaic.version = 11 : i64} {
  func.func @kernel(%arg0: i32, %arg1: i32, %arg2: memref<1x8x32xf32, #tpu.memory_space<vmem>>, %arg3: memref<1x8x32xf32, #tpu.memory_space<vmem>>, %arg4: memref<1x8x32xf32, #tpu.memory_space<vmem>>, %arg5: memref<32x32xbf16, #tpu.memory_space<vmem>>, %arg6: memref<1x32xf32, #tpu.memory_space<vmem>>, %arg7: memref<32x64xbf16, #tpu.memory_space<vmem>>, %arg8: memref<1x64xf32, #tpu.memory_space<vmem>>, %arg9: memref<32x32xbf16, #tpu.memory_space<vmem>>, %arg10: memref<1x32xf32, #tpu.memory_space<vmem>>, %arg11: memref<32x64xbf16, #tpu.memory_space<vmem>>, %arg12: memref<1x64xf32, #tpu.memory_space<vmem>>, %arg13: memref<64x32xbf16, #tpu.memory_space<vmem>>, %arg14: memref<1x32xf32, #tpu.memory_space<vmem>>, %arg15: memref<3xf32, #tpu.memory_space<smem>>, %arg16: memref<1x8x32xf32, #tpu.memory_space<vmem>>) attributes {dimension_semantics = [#tpu.dimension_semantics<parallel>, #tpu.dimension_semantics<parallel>], iteration_bounds = array<i64: 2, 1>, scalar_prefetch = 0 : i64, scratch_operands = 0 : i64, tpu.core_type = #tpu.core_type<tc>, window_params = [{transform_indices = @transform_0, window_bounds = array<i64: 1, 8, 32>}, {transform_indices = @transform_1, window_bounds = array<i64: 1, 8, 32>}, {transform_indices = @transform_2, window_bounds = array<i64: 1, 8, 32>}, {pipeline_mode = #tpu.pipeline_mode<synchronous>, transform_indices = @transform_3, window_bounds = array<i64: 32, 32>}, {pipeline_mode = #tpu.pipeline_mode<synchronous>, transform_indices = @transform_4, window_bounds = array<i64: 1, 32>}, {pipeline_mode = #tpu.pipeline_mode<synchronous>, transform_indices = @transform_5, window_bounds = array<i64: 32, 64>}, {pipeline_mode = #tpu.pipeline_mode<synchronous>, transform_indices = @transform_6, window_bounds = array<i64: 1, 64>}, {pipeline_mode = #tpu.pipeline_mode<synchronous>, transform_indices = @transform_7, window_bounds = array<i64: 32, 32>}, {pipeline_mode = #tpu.pipeline_mode<synchronous>, transform_indices = @transform_8, window_bounds = array<i64: 1, 32>}, {pipeline_mode = #tpu.pipeline_mode<synchronous>, transform_indices = @transform_9, window_bounds = array<i64: 32, 64>}, {pipeline_mode = #tpu.pipeline_mode<synchronous>, transform_indices = @transform_10, window_bounds = array<i64: 1, 64>}, {pipeline_mode = #tpu.pipeline_mode<synchronous>, transform_indices = @transform_11, window_bounds = array<i64: 64, 32>}, {pipeline_mode = #tpu.pipeline_mode<synchronous>, transform_indices = @transform_12, window_bounds = array<i64: 1, 32>}, {transform_indices = @transform_13, window_bounds = array<i64: 3>}, {transform_indices = @transform_14, window_bounds = array<i64: 1, 8, 32>}]} {
    %c0 = arith.constant 0 : index
    %0 = memref.load %arg15[%c0] : memref<3xf32, #tpu.memory_space<smem>>
    %c1 = arith.constant 1 : index
    %1 = memref.load %arg15[%c1] : memref<3xf32, #tpu.memory_space<smem>>
    %c2 = arith.constant 2 : index
    %2 = memref.load %arg15[%c2] : memref<3xf32, #tpu.memory_space<smem>>
    %c0_0 = arith.constant 0 : index
    %c0_1 = arith.constant 0 : index
    %c0_2 = arith.constant 0 : index
    %3 = vector.load %arg2[%c0_0, %c0_1, %c0_2] : memref<1x8x32xf32, #tpu.memory_space<vmem>>, vector<1x8x32xf32>
    %4 = vector.shape_cast %3 : vector<1x8x32xf32> to vector<8x32xf32>
    %c0_3 = arith.constant 0 : index
    %c0_4 = arith.constant 0 : index
    %c0_5 = arith.constant 0 : index
    %5 = vector.load %arg3[%c0_3, %c0_4, %c0_5] : memref<1x8x32xf32, #tpu.memory_space<vmem>>, vector<1x8x32xf32>
    %6 = vector.shape_cast %5 : vector<1x8x32xf32> to vector<8x32xf32>
    %7 = arith.truncf %6 : vector<8x32xf32> to vector<8x32xbf16>
    %c0_6 = arith.constant 0 : index
    %c0_7 = arith.constant 0 : index
    %c0_8 = arith.constant 0 : index
    %8 = vector.load %arg4[%c0_6, %c0_7, %c0_8] : memref<1x8x32xf32, #tpu.memory_space<vmem>>, vector<1x8x32xf32>
    %9 = vector.shape_cast %8 : vector<1x8x32xf32> to vector<8x32xf32>
    %10 = arith.truncf %9 : vector<8x32xf32> to vector<8x32xbf16>
    %11 = arith.truncf %4 : vector<8x32xf32> to vector<8x32xbf16>
    %c0_9 = arith.constant 0 : index
    %c0_10 = arith.constant 0 : index
    %12 = vector.load %arg5[%c0_9, %c0_10] : memref<32x32xbf16, #tpu.memory_space<vmem>>, vector<32x32xbf16>
    %cst = arith.constant dense<0.000000e+00> : vector<8x32xf32>
    %13 = tpu.matmul %11, %12, %cst {dimension_numbers = #tpu.dot_dimension_numbers<[1], [0], [0], [1], [0, 0, 1, 1], [], []>} : vector<8x32xbf16>, vector<32x32xbf16>, vector<8x32xf32> -> vector<8x32xf32>
    %c0_11 = arith.constant 0 : index
    %c0_12 = arith.constant 0 : index
    %14 = vector.load %arg6[%c0_11, %c0_12] : memref<1x32xf32, #tpu.memory_space<vmem>>, vector<1x32xf32>
    %15 = vector.broadcast %14 : vector<1x32xf32> to vector<8x32xf32>
    %16 = arith.addf %13, %15 : vector<8x32xf32>
    %17 = arith.truncf %16 : vector<8x32xf32> to vector<8x32xbf16>
    %c0_13 = arith.constant 0 : index
    %c0_14 = arith.constant 0 : index
    %18 = vector.load %arg7[%c0_13, %c0_14] : memref<32x64xbf16, #tpu.memory_space<vmem>>, vector<32x64xbf16>
    %cst_15 = arith.constant dense<0.000000e+00> : vector<8x64xf32>
    %19 = tpu.matmul %7, %18, %cst_15 {dimension_numbers = #tpu.dot_dimension_numbers<[1], [0], [0], [1], [0, 0, 1, 1], [], []>} : vector<8x32xbf16>, vector<32x64xbf16>, vector<8x64xf32> -> vector<8x64xf32>
    %c0_16 = arith.constant 0 : index
    %c0_17 = arith.constant 0 : index
    %20 = vector.load %arg8[%c0_16, %c0_17] : memref<1x64xf32, #tpu.memory_space<vmem>>, vector<1x64xf32>
    %21 = vector.broadcast %20 : vector<1x64xf32> to vector<8x64xf32>
    %22 = arith.addf %19, %21 : vector<8x64xf32>
    %23 = vector.extract_strided_slice %22 {offsets = [0, 0], sizes = [8, 32], strides = [1, 1]} : vector<8x64xf32> to vector<8x32xf32>
    %24 = arith.truncf %23 : vector<8x32xf32> to vector<8x32xbf16>
    %25 = vector.extract_strided_slice %22 {offsets = [0, 32], sizes = [8, 32], strides = [1, 1]} : vector<8x64xf32> to vector<8x32xf32>
    %26 = arith.truncf %25 : vector<8x32xf32> to vector<8x32xbf16>
    %27 = vector.extract_strided_slice %17 {offsets = [0, 0], sizes = [8, 4], strides = [1, 1]} : vector<8x32xbf16> to vector<8x4xbf16>
    %28 = vector.extract_strided_slice %24 {offsets = [0, 0], sizes = [8, 4], strides = [1, 1]} : vector<8x32xbf16> to vector<8x4xbf16>
    "tpu.trace_start"() <{level = 10 : i32, message = "qd,kd->qk"}> : () -> ()
    %cst_18 = arith.constant dense<0.000000e+00> : vector<8x8xf32>
    %29 = tpu.matmul %27, %28, %cst_18 {dimension_numbers = #tpu.dot_dimension_numbers<[1], [1], [0], [0], [0, 0, 1, 0], [], []>} : vector<8x4xbf16>, vector<8x4xbf16>, vector<8x8xf32> -> vector<8x8xf32>
    "tpu.trace_stop"() : () -> ()
    %cst_19 = arith.constant dense<0xFF800000> : vector<8xf32>
    %30 = vector.multi_reduction <maximumf>, %29, %cst_19 [1] : vector<8x8xf32> to vector<8xf32>
    %31 = vector.shape_cast %30 : vector<8xf32> to vector<8x1xf32>
    %32 = vector.broadcast %31 : vector<8x1xf32> to vector<8x8xf32>
    %33 = arith.subf %29, %32 : vector<8x8xf32>
    %34 = math.exp %33 : vector<8x8xf32>
    %cst_20 = arith.constant dense<0.000000e+00> : vector<8xf32>
    %35 = vector.multi_reduction <add>, %34, %cst_20 [1] : vector<8x8xf32> to vector<8xf32>
    %36 = vector.shape_cast %35 : vector<8xf32> to vector<8x1xf32>
    %37 = tpu.reciprocal %36 {approx = true} : vector<8x1xf32> -> vector<8x1xf32>
    %38 = vector.broadcast %37 : vector<8x1xf32> to vector<8x8xf32>
    %39 = arith.mulf %34, %38 : vector<8x8xf32>
    %40 = arith.truncf %39 : vector<8x8xf32> to vector<8x8xbf16>
    %41 = vector.extract_strided_slice %26 {offsets = [0, 0], sizes = [8, 4], strides = [1, 1]} : vector<8x32xbf16> to vector<8x4xbf16>
    %cst_21 = arith.constant dense<0.000000e+00> : vector<8x4xf32>
    %42 = tpu.matmul %40, %41, %cst_21 {dimension_numbers = #tpu.dot_dimension_numbers<[1], [0], [0], [1], [0, 0, 1, 1], [], []>} : vector<8x8xbf16>, vector<8x4xbf16>, vector<8x4xf32> -> vector<8x4xf32>
    %43 = vector.extract_strided_slice %17 {offsets = [0, 4], sizes = [8, 4], strides = [1, 1]} : vector<8x32xbf16> to vector<8x4xbf16>
    %44 = vector.extract_strided_slice %24 {offsets = [0, 4], sizes = [8, 4], strides = [1, 1]} : vector<8x32xbf16> to vector<8x4xbf16>
    "tpu.trace_start"() <{level = 10 : i32, message = "qd,kd->qk"}> : () -> ()
    %cst_22 = arith.constant dense<0.000000e+00> : vector<8x8xf32>
    %45 = tpu.matmul %43, %44, %cst_22 {dimension_numbers = #tpu.dot_dimension_numbers<[1], [1], [0], [0], [0, 0, 1, 0], [], []>} : vector<8x4xbf16>, vector<8x4xbf16>, vector<8x8xf32> -> vector<8x8xf32>
    "tpu.trace_stop"() : () -> ()
    %cst_23 = arith.constant dense<0xFF800000> : vector<8xf32>
    %46 = vector.multi_reduction <maximumf>, %45, %cst_23 [1] : vector<8x8xf32> to vector<8xf32>
    %47 = vector.shape_cast %46 : vector<8xf32> to vector<8x1xf32>
    %48 = vector.broadcast %47 : vector<8x1xf32> to vector<8x8xf32>
    %49 = arith.subf %45, %48 : vector<8x8xf32>
    %50 = math.exp %49 : vector<8x8xf32>
    %cst_24 = arith.constant dense<0.000000e+00> : vector<8xf32>
    %51 = vector.multi_reduction <add>, %50, %cst_24 [1] : vector<8x8xf32> to vector<8xf32>
    %52 = vector.shape_cast %51 : vector<8xf32> to vector<8x1xf32>
    %53 = tpu.reciprocal %52 {approx = true} : vector<8x1xf32> -> vector<8x1xf32>
    %54 = vector.broadcast %53 : vector<8x1xf32> to vector<8x8xf32>
    %55 = arith.mulf %50, %54 : vector<8x8xf32>
    %56 = arith.truncf %55 : vector<8x8xf32> to vector<8x8xbf16>
    %57 = vector.extract_strided_slice %26 {offsets = [0, 4], sizes = [8, 4], strides = [1, 1]} : vector<8x32xbf16> to vector<8x4xbf16>
    %cst_25 = arith.constant dense<0.000000e+00> : vector<8x4xf32>
    %58 = tpu.matmul %56, %57, %cst_25 {dimension_numbers = #tpu.dot_dimension_numbers<[1], [0], [0], [1], [0, 0, 1, 1], [], []>} : vector<8x8xbf16>, vector<8x4xbf16>, vector<8x4xf32> -> vector<8x4xf32>
    %59 = vector.extract_strided_slice %17 {offsets = [0, 8], sizes = [8, 4], strides = [1, 1]} : vector<8x32xbf16> to vector<8x4xbf16>
    %60 = vector.extract_strided_slice %24 {offsets = [0, 8], sizes = [8, 4], strides = [1, 1]} : vector<8x32xbf16> to vector<8x4xbf16>
    "tpu.trace_start"() <{level = 10 : i32, message = "qd,kd->qk"}> : () -> ()
    %cst_26 = arith.constant dense<0.000000e+00> : vector<8x8xf32>
    %61 = tpu.matmul %59, %60, %cst_26 {dimension_numbers = #tpu.dot_dimension_numbers<[1], [1], [0], [0], [0, 0, 1, 0], [], []>} : vector<8x4xbf16>, vector<8x4xbf16>, vector<8x8xf32> -> vector<8x8xf32>
    "tpu.trace_stop"() : () -> ()
    %cst_27 = arith.constant dense<0xFF800000> : vector<8xf32>
    %62 = vector.multi_reduction <maximumf>, %61, %cst_27 [1] : vector<8x8xf32> to vector<8xf32>
    %63 = vector.shape_cast %62 : vector<8xf32> to vector<8x1xf32>
    %64 = vector.broadcast %63 : vector<8x1xf32> to vector<8x8xf32>
    %65 = arith.subf %61, %64 : vector<8x8xf32>
    %66 = math.exp %65 : vector<8x8xf32>
    %cst_28 = arith.constant dense<0.000000e+00> : vector<8xf32>
    %67 = vector.multi_reduction <add>, %66, %cst_28 [1] : vector<8x8xf32> to vector<8xf32>
    %68 = vector.shape_cast %67 : vector<8xf32> to vector<8x1xf32>
    %69 = tpu.reciprocal %68 {approx = true} : vector<8x1xf32> -> vector<8x1xf32>
    %70 = vector.broadcast %69 : vector<8x1xf32> to vector<8x8xf32>
    %71 = arith.mulf %66, %70 : vector<8x8xf32>
    %72 = arith.truncf %71 : vector<8x8xf32> to vector<8x8xbf16>
    %73 = vector.extract_strided_slice %26 {offsets = [0, 8], sizes = [8, 4], strides = [1, 1]} : vector<8x32xbf16> to vector<8x4xbf16>
    %cst_29 = arith.constant dense<0.000000e+00> : vector<8x4xf32>
    %74 = tpu.matmul %72, %73, %cst_29 {dimension_numbers = #tpu.dot_dimension_numbers<[1], [0], [0], [1], [0, 0, 1, 1], [], []>} : vector<8x8xbf16>, vector<8x4xbf16>, vector<8x4xf32> -> vector<8x4xf32>
    %75 = vector.extract_strided_slice %17 {offsets = [0, 12], sizes = [8, 4], strides = [1, 1]} : vector<8x32xbf16> to vector<8x4xbf16>
    %76 = vector.extract_strided_slice %24 {offsets = [0, 12], sizes = [8, 4], strides = [1, 1]} : vector<8x32xbf16> to vector<8x4xbf16>
    "tpu.trace_start"() <{level = 10 : i32, message = "qd,kd->qk"}> : () -> ()
    %cst_30 = arith.constant dense<0.000000e+00> : vector<8x8xf32>
    %77 = tpu.matmul %75, %76, %cst_30 {dimension_numbers = #tpu.dot_dimension_numbers<[1], [1], [0], [0], [0, 0, 1, 0], [], []>} : vector<8x4xbf16>, vector<8x4xbf16>, vector<8x8xf32> -> vector<8x8xf32>
    "tpu.trace_stop"() : () -> ()
    %cst_31 = arith.constant dense<0xFF800000> : vector<8xf32>
    %78 = vector.multi_reduction <maximumf>, %77, %cst_31 [1] : vector<8x8xf32> to vector<8xf32>
    %79 = vector.shape_cast %78 : vector<8xf32> to vector<8x1xf32>
    %80 = vector.broadcast %79 : vector<8x1xf32> to vector<8x8xf32>
    %81 = arith.subf %77, %80 : vector<8x8xf32>
    %82 = math.exp %81 : vector<8x8xf32>
    %cst_32 = arith.constant dense<0.000000e+00> : vector<8xf32>
    %83 = vector.multi_reduction <add>, %82, %cst_32 [1] : vector<8x8xf32> to vector<8xf32>
    %84 = vector.shape_cast %83 : vector<8xf32> to vector<8x1xf32>
    %85 = tpu.reciprocal %84 {approx = true} : vector<8x1xf32> -> vector<8x1xf32>
    %86 = vector.broadcast %85 : vector<8x1xf32> to vector<8x8xf32>
    %87 = arith.mulf %82, %86 : vector<8x8xf32>
    %88 = arith.truncf %87 : vector<8x8xf32> to vector<8x8xbf16>
    %89 = vector.extract_strided_slice %26 {offsets = [0, 12], sizes = [8, 4], strides = [1, 1]} : vector<8x32xbf16> to vector<8x4xbf16>
    %cst_33 = arith.constant dense<0.000000e+00> : vector<8x4xf32>
    %90 = tpu.matmul %88, %89, %cst_33 {dimension_numbers = #tpu.dot_dimension_numbers<[1], [0], [0], [1], [0, 0, 1, 1], [], []>} : vector<8x8xbf16>, vector<8x4xbf16>, vector<8x4xf32> -> vector<8x4xf32>
    %91 = vector.extract_strided_slice %17 {offsets = [0, 16], sizes = [8, 4], strides = [1, 1]} : vector<8x32xbf16> to vector<8x4xbf16>
    %92 = vector.extract_strided_slice %24 {offsets = [0, 16], sizes = [8, 4], strides = [1, 1]} : vector<8x32xbf16> to vector<8x4xbf16>
    "tpu.trace_start"() <{level = 10 : i32, message = "qd,kd->qk"}> : () -> ()
    %cst_34 = arith.constant dense<0.000000e+00> : vector<8x8xf32>
    %93 = tpu.matmul %91, %92, %cst_34 {dimension_numbers = #tpu.dot_dimension_numbers<[1], [1], [0], [0], [0, 0, 1, 0], [], []>} : vector<8x4xbf16>, vector<8x4xbf16>, vector<8x8xf32> -> vector<8x8xf32>
    "tpu.trace_stop"() : () -> ()
    %cst_35 = arith.constant dense<0xFF800000> : vector<8xf32>
    %94 = vector.multi_reduction <maximumf>, %93, %cst_35 [1] : vector<8x8xf32> to vector<8xf32>
    %95 = vector.shape_cast %94 : vector<8xf32> to vector<8x1xf32>
    %96 = vector.broadcast %95 : vector<8x1xf32> to vector<8x8xf32>
    %97 = arith.subf %93, %96 : vector<8x8xf32>
    %98 = math.exp %97 : vector<8x8xf32>
    %cst_36 = arith.constant dense<0.000000e+00> : vector<8xf32>
    %99 = vector.multi_reduction <add>, %98, %cst_36 [1] : vector<8x8xf32> to vector<8xf32>
    %100 = vector.shape_cast %99 : vector<8xf32> to vector<8x1xf32>
    %101 = tpu.reciprocal %100 {approx = true} : vector<8x1xf32> -> vector<8x1xf32>
    %102 = vector.broadcast %101 : vector<8x1xf32> to vector<8x8xf32>
    %103 = arith.mulf %98, %102 : vector<8x8xf32>
    %104 = arith.truncf %103 : vector<8x8xf32> to vector<8x8xbf16>
    %105 = vector.extract_strided_slice %26 {offsets = [0, 16], sizes = [8, 4], strides = [1, 1]} : vector<8x32xbf16> to vector<8x4xbf16>
    %cst_37 = arith.constant dense<0.000000e+00> : vector<8x4xf32>
    %106 = tpu.matmul %104, %105, %cst_37 {dimension_numbers = #tpu.dot_dimension_numbers<[1], [0], [0], [1], [0, 0, 1, 1], [], []>} : vector<8x8xbf16>, vector<8x4xbf16>, vector<8x4xf32> -> vector<8x4xf32>
    %107 = vector.extract_strided_slice %17 {offsets = [0, 20], sizes = [8, 4], strides = [1, 1]} : vector<8x32xbf16> to vector<8x4xbf16>
    %108 = vector.extract_strided_slice %24 {offsets = [0, 20], sizes = [8, 4], strides = [1, 1]} : vector<8x32xbf16> to vector<8x4xbf16>
    "tpu.trace_start"() <{level = 10 : i32, message = "qd,kd->qk"}> : () -> ()
    %cst_38 = arith.constant dense<0.000000e+00> : vector<8x8xf32>
    %109 = tpu.matmul %107, %108, %cst_38 {dimension_numbers = #tpu.dot_dimension_numbers<[1], [1], [0], [0], [0, 0, 1, 0], [], []>} : vector<8x4xbf16>, vector<8x4xbf16>, vector<8x8xf32> -> vector<8x8xf32>
    "tpu.trace_stop"() : () -> ()
    %cst_39 = arith.constant dense<0xFF800000> : vector<8xf32>
    %110 = vector.multi_reduction <maximumf>, %109, %cst_39 [1] : vector<8x8xf32> to vector<8xf32>
    %111 = vector.shape_cast %110 : vector<8xf32> to vector<8x1xf32>
    %112 = vector.broadcast %111 : vector<8x1xf32> to vector<8x8xf32>
    %113 = arith.subf %109, %112 : vector<8x8xf32>
    %114 = math.exp %113 : vector<8x8xf32>
    %cst_40 = arith.constant dense<0.000000e+00> : vector<8xf32>
    %115 = vector.multi_reduction <add>, %114, %cst_40 [1] : vector<8x8xf32> to vector<8xf32>
    %116 = vector.shape_cast %115 : vector<8xf32> to vector<8x1xf32>
    %117 = tpu.reciprocal %116 {approx = true} : vector<8x1xf32> -> vector<8x1xf32>
    %118 = vector.broadcast %117 : vector<8x1xf32> to vector<8x8xf32>
    %119 = arith.mulf %114, %118 : vector<8x8xf32>
    %120 = arith.truncf %119 : vector<8x8xf32> to vector<8x8xbf16>
    %121 = vector.extract_strided_slice %26 {offsets = [0, 20], sizes = [8, 4], strides = [1, 1]} : vector<8x32xbf16> to vector<8x4xbf16>
    %cst_41 = arith.constant dense<0.000000e+00> : vector<8x4xf32>
    %122 = tpu.matmul %120, %121, %cst_41 {dimension_numbers = #tpu.dot_dimension_numbers<[1], [0], [0], [1], [0, 0, 1, 1], [], []>} : vector<8x8xbf16>, vector<8x4xbf16>, vector<8x4xf32> -> vector<8x4xf32>
    %123 = vector.extract_strided_slice %17 {offsets = [0, 24], sizes = [8, 4], strides = [1, 1]} : vector<8x32xbf16> to vector<8x4xbf16>
    %124 = vector.extract_strided_slice %24 {offsets = [0, 24], sizes = [8, 4], strides = [1, 1]} : vector<8x32xbf16> to vector<8x4xbf16>
    "tpu.trace_start"() <{level = 10 : i32, message = "qd,kd->qk"}> : () -> ()
    %cst_42 = arith.constant dense<0.000000e+00> : vector<8x8xf32>
    %125 = tpu.matmul %123, %124, %cst_42 {dimension_numbers = #tpu.dot_dimension_numbers<[1], [1], [0], [0], [0, 0, 1, 0], [], []>} : vector<8x4xbf16>, vector<8x4xbf16>, vector<8x8xf32> -> vector<8x8xf32>
    "tpu.trace_stop"() : () -> ()
    %cst_43 = arith.constant dense<0xFF800000> : vector<8xf32>
    %126 = vector.multi_reduction <maximumf>, %125, %cst_43 [1] : vector<8x8xf32> to vector<8xf32>
    %127 = vector.shape_cast %126 : vector<8xf32> to vector<8x1xf32>
    %128 = vector.broadcast %127 : vector<8x1xf32> to vector<8x8xf32>
    %129 = arith.subf %125, %128 : vector<8x8xf32>
    %130 = math.exp %129 : vector<8x8xf32>
    %cst_44 = arith.constant dense<0.000000e+00> : vector<8xf32>
    %131 = vector.multi_reduction <add>, %130, %cst_44 [1] : vector<8x8xf32> to vector<8xf32>
    %132 = vector.shape_cast %131 : vector<8xf32> to vector<8x1xf32>
    %133 = tpu.reciprocal %132 {approx = true} : vector<8x1xf32> -> vector<8x1xf32>
    %134 = vector.broadcast %133 : vector<8x1xf32> to vector<8x8xf32>
    %135 = arith.mulf %130, %134 : vector<8x8xf32>
    %136 = arith.truncf %135 : vector<8x8xf32> to vector<8x8xbf16>
    %137 = vector.extract_strided_slice %26 {offsets = [0, 24], sizes = [8, 4], strides = [1, 1]} : vector<8x32xbf16> to vector<8x4xbf16>
    %cst_45 = arith.constant dense<0.000000e+00> : vector<8x4xf32>
    %138 = tpu.matmul %136, %137, %cst_45 {dimension_numbers = #tpu.dot_dimension_numbers<[1], [0], [0], [1], [0, 0, 1, 1], [], []>} : vector<8x8xbf16>, vector<8x4xbf16>, vector<8x4xf32> -> vector<8x4xf32>
    %139 = vector.extract_strided_slice %17 {offsets = [0, 28], sizes = [8, 4], strides = [1, 1]} : vector<8x32xbf16> to vector<8x4xbf16>
    %140 = vector.extract_strided_slice %24 {offsets = [0, 28], sizes = [8, 4], strides = [1, 1]} : vector<8x32xbf16> to vector<8x4xbf16>
    "tpu.trace_start"() <{level = 10 : i32, message = "qd,kd->qk"}> : () -> ()
    %cst_46 = arith.constant dense<0.000000e+00> : vector<8x8xf32>
    %141 = tpu.matmul %139, %140, %cst_46 {dimension_numbers = #tpu.dot_dimension_numbers<[1], [1], [0], [0], [0, 0, 1, 0], [], []>} : vector<8x4xbf16>, vector<8x4xbf16>, vector<8x8xf32> -> vector<8x8xf32>
    "tpu.trace_stop"() : () -> ()
    %cst_47 = arith.constant dense<0xFF800000> : vector<8xf32>
    %142 = vector.multi_reduction <maximumf>, %141, %cst_47 [1] : vector<8x8xf32> to vector<8xf32>
    %143 = vector.shape_cast %142 : vector<8xf32> to vector<8x1xf32>
    %144 = vector.broadcast %143 : vector<8x1xf32> to vector<8x8xf32>
    %145 = arith.subf %141, %144 : vector<8x8xf32>
    %146 = math.exp %145 : vector<8x8xf32>
    %cst_48 = arith.constant dense<0.000000e+00> : vector<8xf32>
    %147 = vector.multi_reduction <add>, %146, %cst_48 [1] : vector<8x8xf32> to vector<8xf32>
    %148 = vector.shape_cast %147 : vector<8xf32> to vector<8x1xf32>
    %149 = tpu.reciprocal %148 {approx = true} : vector<8x1xf32> -> vector<8x1xf32>
    %150 = vector.broadcast %149 : vector<8x1xf32> to vector<8x8xf32>
    %151 = arith.mulf %146, %150 : vector<8x8xf32>
    %152 = arith.truncf %151 : vector<8x8xf32> to vector<8x8xbf16>
    %153 = vector.extract_strided_slice %26 {offsets = [0, 28], sizes = [8, 4], strides = [1, 1]} : vector<8x32xbf16> to vector<8x4xbf16>
    %cst_49 = arith.constant dense<0.000000e+00> : vector<8x4xf32>
    %154 = tpu.matmul %152, %153, %cst_49 {dimension_numbers = #tpu.dot_dimension_numbers<[1], [0], [0], [1], [0, 0, 1, 1], [], []>} : vector<8x8xbf16>, vector<8x4xbf16>, vector<8x4xf32> -> vector<8x4xf32>
    %155 = tpu.concatenate %42, %58, %74, %90, %106, %122, %138, %154 in 1 : vector<8x4xf32>, vector<8x4xf32>, vector<8x4xf32>, vector<8x4xf32>, vector<8x4xf32>, vector<8x4xf32>, vector<8x4xf32>, vector<8x4xf32> -> vector<8x32xf32>
    %156 = arith.truncf %155 : vector<8x32xf32> to vector<8x32xbf16>
    %c0_50 = arith.constant 0 : index
    %c0_51 = arith.constant 0 : index
    %157 = vector.load %arg9[%c0_50, %c0_51] : memref<32x32xbf16, #tpu.memory_space<vmem>>, vector<32x32xbf16>
    %cst_52 = arith.constant dense<0.000000e+00> : vector<8x32xf32>
    %158 = tpu.matmul %156, %157, %cst_52 {dimension_numbers = #tpu.dot_dimension_numbers<[1], [0], [0], [1], [0, 0, 1, 1], [], []>} : vector<8x32xbf16>, vector<32x32xbf16>, vector<8x32xf32> -> vector<8x32xf32>
    %c0_53 = arith.constant 0 : index
    %c0_54 = arith.constant 0 : index
    %159 = vector.load %arg10[%c0_53, %c0_54] : memref<1x32xf32, #tpu.memory_space<vmem>>, vector<1x32xf32>
    %160 = vector.broadcast %159 : vector<1x32xf32> to vector<8x32xf32>
    %161 = arith.addf %158, %160 : vector<8x32xf32>
    %cst_55 = arith.constant 5.000000e-01 : f32
    %162 = vector.broadcast %cst_55 : f32 to vector<8x32xf32>
    %163 = arith.mulf %162, %161 : vector<8x32xf32>
    %cst_56 = arith.constant 4.471500e-02 : f32
    %164 = vector.broadcast %cst_56 : f32 to vector<8x32xf32>
    %165 = arith.mulf %164, %161 : vector<8x32xf32>
    %166 = arith.mulf %165, %161 : vector<8x32xf32>
    %167 = arith.mulf %166, %161 : vector<8x32xf32>
    %168 = arith.addf %161, %167 : vector<8x32xf32>
    %cst_57 = arith.constant 0.797884583 : f32
    %169 = vector.broadcast %cst_57 : f32 to vector<8x32xf32>
    %170 = arith.mulf %169, %168 : vector<8x32xf32>
    %171 = math.tanh %170 : vector<8x32xf32>
    %cst_58 = arith.constant 1.000000e+00 : f32
    %172 = vector.broadcast %cst_58 : f32 to vector<8x32xf32>
    %173 = arith.addf %172, %171 : vector<8x32xf32>
    %174 = arith.mulf %163, %173 : vector<8x32xf32>
    %175 = vector.broadcast %0 : f32 to vector<8x32xf32>
    %176 = arith.mulf %175, %174 : vector<8x32xf32>
    %177 = arith.addf %4, %176 : vector<8x32xf32>
    %178 = arith.truncf %177 : vector<8x32xf32> to vector<8x32xbf16>
    %c0_59 = arith.constant 0 : index
    %c0_60 = arith.constant 0 : index
    %179 = vector.load %arg5[%c0_59, %c0_60] : memref<32x32xbf16, #tpu.memory_space<vmem>>, vector<32x32xbf16>
    %cst_61 = arith.constant dense<0.000000e+00> : vector<8x32xf32>
    %180 = tpu.matmul %178, %179, %cst_61 {dimension_numbers = #tpu.dot_dimension_numbers<[1], [0], [0], [1], [0, 0, 1, 1], [], []>} : vector<8x32xbf16>, vector<32x32xbf16>, vector<8x32xf32> -> vector<8x32xf32>
    %c0_62 = arith.constant 0 : index
    %c0_63 = arith.constant 0 : index
    %181 = vector.load %arg6[%c0_62, %c0_63] : memref<1x32xf32, #tpu.memory_space<vmem>>, vector<1x32xf32>
    %182 = vector.broadcast %181 : vector<1x32xf32> to vector<8x32xf32>
    %183 = arith.addf %180, %182 : vector<8x32xf32>
    %184 = arith.truncf %183 : vector<8x32xf32> to vector<8x32xbf16>
    %c0_64 = arith.constant 0 : index
    %c0_65 = arith.constant 0 : index
    %185 = vector.load %arg7[%c0_64, %c0_65] : memref<32x64xbf16, #tpu.memory_space<vmem>>, vector<32x64xbf16>
    %cst_66 = arith.constant dense<0.000000e+00> : vector<8x64xf32>
    %186 = tpu.matmul %10, %185, %cst_66 {dimension_numbers = #tpu.dot_dimension_numbers<[1], [0], [0], [1], [0, 0, 1, 1], [], []>} : vector<8x32xbf16>, vector<32x64xbf16>, vector<8x64xf32> -> vector<8x64xf32>
    %c0_67 = arith.constant 0 : index
    %c0_68 = arith.constant 0 : index
    %187 = vector.load %arg8[%c0_67, %c0_68] : memref<1x64xf32, #tpu.memory_space<vmem>>, vector<1x64xf32>
    %188 = vector.broadcast %187 : vector<1x64xf32> to vector<8x64xf32>
    %189 = arith.addf %186, %188 : vector<8x64xf32>
    %190 = vector.extract_strided_slice %189 {offsets = [0, 0], sizes = [8, 32], strides = [1, 1]} : vector<8x64xf32> to vector<8x32xf32>
    %191 = arith.truncf %190 : vector<8x32xf32> to vector<8x32xbf16>
    %192 = vector.extract_strided_slice %189 {offsets = [0, 32], sizes = [8, 32], strides = [1, 1]} : vector<8x64xf32> to vector<8x32xf32>
    %193 = arith.truncf %192 : vector<8x32xf32> to vector<8x32xbf16>
    %194 = vector.extract_strided_slice %184 {offsets = [0, 0], sizes = [8, 4], strides = [1, 1]} : vector<8x32xbf16> to vector<8x4xbf16>
    %195 = vector.extract_strided_slice %191 {offsets = [0, 0], sizes = [8, 4], strides = [1, 1]} : vector<8x32xbf16> to vector<8x4xbf16>
    "tpu.trace_start"() <{level = 10 : i32, message = "qd,kd->qk"}> : () -> ()
    %cst_69 = arith.constant dense<0.000000e+00> : vector<8x8xf32>
    %196 = tpu.matmul %194, %195, %cst_69 {dimension_numbers = #tpu.dot_dimension_numbers<[1], [1], [0], [0], [0, 0, 1, 0], [], []>} : vector<8x4xbf16>, vector<8x4xbf16>, vector<8x8xf32> -> vector<8x8xf32>
    "tpu.trace_stop"() : () -> ()
    %cst_70 = arith.constant dense<0xFF800000> : vector<8xf32>
    %197 = vector.multi_reduction <maximumf>, %196, %cst_70 [1] : vector<8x8xf32> to vector<8xf32>
    %198 = vector.shape_cast %197 : vector<8xf32> to vector<8x1xf32>
    %199 = vector.broadcast %198 : vector<8x1xf32> to vector<8x8xf32>
    %200 = arith.subf %196, %199 : vector<8x8xf32>
    %201 = math.exp %200 : vector<8x8xf32>
    %cst_71 = arith.constant dense<0.000000e+00> : vector<8xf32>
    %202 = vector.multi_reduction <add>, %201, %cst_71 [1] : vector<8x8xf32> to vector<8xf32>
    %203 = vector.shape_cast %202 : vector<8xf32> to vector<8x1xf32>
    %204 = tpu.reciprocal %203 {approx = true} : vector<8x1xf32> -> vector<8x1xf32>
    %205 = vector.broadcast %204 : vector<8x1xf32> to vector<8x8xf32>
    %206 = arith.mulf %201, %205 : vector<8x8xf32>
    %207 = arith.truncf %206 : vector<8x8xf32> to vector<8x8xbf16>
    %208 = vector.extract_strided_slice %193 {offsets = [0, 0], sizes = [8, 4], strides = [1, 1]} : vector<8x32xbf16> to vector<8x4xbf16>
    %cst_72 = arith.constant dense<0.000000e+00> : vector<8x4xf32>
    %209 = tpu.matmul %207, %208, %cst_72 {dimension_numbers = #tpu.dot_dimension_numbers<[1], [0], [0], [1], [0, 0, 1, 1], [], []>} : vector<8x8xbf16>, vector<8x4xbf16>, vector<8x4xf32> -> vector<8x4xf32>
    %210 = vector.extract_strided_slice %184 {offsets = [0, 4], sizes = [8, 4], strides = [1, 1]} : vector<8x32xbf16> to vector<8x4xbf16>
    %211 = vector.extract_strided_slice %191 {offsets = [0, 4], sizes = [8, 4], strides = [1, 1]} : vector<8x32xbf16> to vector<8x4xbf16>
    "tpu.trace_start"() <{level = 10 : i32, message = "qd,kd->qk"}> : () -> ()
    %cst_73 = arith.constant dense<0.000000e+00> : vector<8x8xf32>
    %212 = tpu.matmul %210, %211, %cst_73 {dimension_numbers = #tpu.dot_dimension_numbers<[1], [1], [0], [0], [0, 0, 1, 0], [], []>} : vector<8x4xbf16>, vector<8x4xbf16>, vector<8x8xf32> -> vector<8x8xf32>
    "tpu.trace_stop"() : () -> ()
    %cst_74 = arith.constant dense<0xFF800000> : vector<8xf32>
    %213 = vector.multi_reduction <maximumf>, %212, %cst_74 [1] : vector<8x8xf32> to vector<8xf32>
    %214 = vector.shape_cast %213 : vector<8xf32> to vector<8x1xf32>
    %215 = vector.broadcast %214 : vector<8x1xf32> to vector<8x8xf32>
    %216 = arith.subf %212, %215 : vector<8x8xf32>
    %217 = math.exp %216 : vector<8x8xf32>
    %cst_75 = arith.constant dense<0.000000e+00> : vector<8xf32>
    %218 = vector.multi_reduction <add>, %217, %cst_75 [1] : vector<8x8xf32> to vector<8xf32>
    %219 = vector.shape_cast %218 : vector<8xf32> to vector<8x1xf32>
    %220 = tpu.reciprocal %219 {approx = true} : vector<8x1xf32> -> vector<8x1xf32>
    %221 = vector.broadcast %220 : vector<8x1xf32> to vector<8x8xf32>
    %222 = arith.mulf %217, %221 : vector<8x8xf32>
    %223 = arith.truncf %222 : vector<8x8xf32> to vector<8x8xbf16>
    %224 = vector.extract_strided_slice %193 {offsets = [0, 4], sizes = [8, 4], strides = [1, 1]} : vector<8x32xbf16> to vector<8x4xbf16>
    %cst_76 = arith.constant dense<0.000000e+00> : vector<8x4xf32>
    %225 = tpu.matmul %223, %224, %cst_76 {dimension_numbers = #tpu.dot_dimension_numbers<[1], [0], [0], [1], [0, 0, 1, 1], [], []>} : vector<8x8xbf16>, vector<8x4xbf16>, vector<8x4xf32> -> vector<8x4xf32>
    %226 = vector.extract_strided_slice %184 {offsets = [0, 8], sizes = [8, 4], strides = [1, 1]} : vector<8x32xbf16> to vector<8x4xbf16>
    %227 = vector.extract_strided_slice %191 {offsets = [0, 8], sizes = [8, 4], strides = [1, 1]} : vector<8x32xbf16> to vector<8x4xbf16>
    "tpu.trace_start"() <{level = 10 : i32, message = "qd,kd->qk"}> : () -> ()
    %cst_77 = arith.constant dense<0.000000e+00> : vector<8x8xf32>
    %228 = tpu.matmul %226, %227, %cst_77 {dimension_numbers = #tpu.dot_dimension_numbers<[1], [1], [0], [0], [0, 0, 1, 0], [], []>} : vector<8x4xbf16>, vector<8x4xbf16>, vector<8x8xf32> -> vector<8x8xf32>
    "tpu.trace_stop"() : () -> ()
    %cst_78 = arith.constant dense<0xFF800000> : vector<8xf32>
    %229 = vector.multi_reduction <maximumf>, %228, %cst_78 [1] : vector<8x8xf32> to vector<8xf32>
    %230 = vector.shape_cast %229 : vector<8xf32> to vector<8x1xf32>
    %231 = vector.broadcast %230 : vector<8x1xf32> to vector<8x8xf32>
    %232 = arith.subf %228, %231 : vector<8x8xf32>
    %233 = math.exp %232 : vector<8x8xf32>
    %cst_79 = arith.constant dense<0.000000e+00> : vector<8xf32>
    %234 = vector.multi_reduction <add>, %233, %cst_79 [1] : vector<8x8xf32> to vector<8xf32>
    %235 = vector.shape_cast %234 : vector<8xf32> to vector<8x1xf32>
    %236 = tpu.reciprocal %235 {approx = true} : vector<8x1xf32> -> vector<8x1xf32>
    %237 = vector.broadcast %236 : vector<8x1xf32> to vector<8x8xf32>
    %238 = arith.mulf %233, %237 : vector<8x8xf32>
    %239 = arith.truncf %238 : vector<8x8xf32> to vector<8x8xbf16>
    %240 = vector.extract_strided_slice %193 {offsets = [0, 8], sizes = [8, 4], strides = [1, 1]} : vector<8x32xbf16> to vector<8x4xbf16>
    %cst_80 = arith.constant dense<0.000000e+00> : vector<8x4xf32>
    %241 = tpu.matmul %239, %240, %cst_80 {dimension_numbers = #tpu.dot_dimension_numbers<[1], [0], [0], [1], [0, 0, 1, 1], [], []>} : vector<8x8xbf16>, vector<8x4xbf16>, vector<8x4xf32> -> vector<8x4xf32>
    %242 = vector.extract_strided_slice %184 {offsets = [0, 12], sizes = [8, 4], strides = [1, 1]} : vector<8x32xbf16> to vector<8x4xbf16>
    %243 = vector.extract_strided_slice %191 {offsets = [0, 12], sizes = [8, 4], strides = [1, 1]} : vector<8x32xbf16> to vector<8x4xbf16>
    "tpu.trace_start"() <{level = 10 : i32, message = "qd,kd->qk"}> : () -> ()
    %cst_81 = arith.constant dense<0.000000e+00> : vector<8x8xf32>
    %244 = tpu.matmul %242, %243, %cst_81 {dimension_numbers = #tpu.dot_dimension_numbers<[1], [1], [0], [0], [0, 0, 1, 0], [], []>} : vector<8x4xbf16>, vector<8x4xbf16>, vector<8x8xf32> -> vector<8x8xf32>
    "tpu.trace_stop"() : () -> ()
    %cst_82 = arith.constant dense<0xFF800000> : vector<8xf32>
    %245 = vector.multi_reduction <maximumf>, %244, %cst_82 [1] : vector<8x8xf32> to vector<8xf32>
    %246 = vector.shape_cast %245 : vector<8xf32> to vector<8x1xf32>
    %247 = vector.broadcast %246 : vector<8x1xf32> to vector<8x8xf32>
    %248 = arith.subf %244, %247 : vector<8x8xf32>
    %249 = math.exp %248 : vector<8x8xf32>
    %cst_83 = arith.constant dense<0.000000e+00> : vector<8xf32>
    %250 = vector.multi_reduction <add>, %249, %cst_83 [1] : vector<8x8xf32> to vector<8xf32>
    %251 = vector.shape_cast %250 : vector<8xf32> to vector<8x1xf32>
    %252 = tpu.reciprocal %251 {approx = true} : vector<8x1xf32> -> vector<8x1xf32>
    %253 = vector.broadcast %252 : vector<8x1xf32> to vector<8x8xf32>
    %254 = arith.mulf %249, %253 : vector<8x8xf32>
    %255 = arith.truncf %254 : vector<8x8xf32> to vector<8x8xbf16>
    %256 = vector.extract_strided_slice %193 {offsets = [0, 12], sizes = [8, 4], strides = [1, 1]} : vector<8x32xbf16> to vector<8x4xbf16>
    %cst_84 = arith.constant dense<0.000000e+00> : vector<8x4xf32>
    %257 = tpu.matmul %255, %256, %cst_84 {dimension_numbers = #tpu.dot_dimension_numbers<[1], [0], [0], [1], [0, 0, 1, 1], [], []>} : vector<8x8xbf16>, vector<8x4xbf16>, vector<8x4xf32> -> vector<8x4xf32>
    %258 = vector.extract_strided_slice %184 {offsets = [0, 16], sizes = [8, 4], strides = [1, 1]} : vector<8x32xbf16> to vector<8x4xbf16>
    %259 = vector.extract_strided_slice %191 {offsets = [0, 16], sizes = [8, 4], strides = [1, 1]} : vector<8x32xbf16> to vector<8x4xbf16>
    "tpu.trace_start"() <{level = 10 : i32, message = "qd,kd->qk"}> : () -> ()
    %cst_85 = arith.constant dense<0.000000e+00> : vector<8x8xf32>
    %260 = tpu.matmul %258, %259, %cst_85 {dimension_numbers = #tpu.dot_dimension_numbers<[1], [1], [0], [0], [0, 0, 1, 0], [], []>} : vector<8x4xbf16>, vector<8x4xbf16>, vector<8x8xf32> -> vector<8x8xf32>
    "tpu.trace_stop"() : () -> ()
    %cst_86 = arith.constant dense<0xFF800000> : vector<8xf32>
    %261 = vector.multi_reduction <maximumf>, %260, %cst_86 [1] : vector<8x8xf32> to vector<8xf32>
    %262 = vector.shape_cast %261 : vector<8xf32> to vector<8x1xf32>
    %263 = vector.broadcast %262 : vector<8x1xf32> to vector<8x8xf32>
    %264 = arith.subf %260, %263 : vector<8x8xf32>
    %265 = math.exp %264 : vector<8x8xf32>
    %cst_87 = arith.constant dense<0.000000e+00> : vector<8xf32>
    %266 = vector.multi_reduction <add>, %265, %cst_87 [1] : vector<8x8xf32> to vector<8xf32>
    %267 = vector.shape_cast %266 : vector<8xf32> to vector<8x1xf32>
    %268 = tpu.reciprocal %267 {approx = true} : vector<8x1xf32> -> vector<8x1xf32>
    %269 = vector.broadcast %268 : vector<8x1xf32> to vector<8x8xf32>
    %270 = arith.mulf %265, %269 : vector<8x8xf32>
    %271 = arith.truncf %270 : vector<8x8xf32> to vector<8x8xbf16>
    %272 = vector.extract_strided_slice %193 {offsets = [0, 16], sizes = [8, 4], strides = [1, 1]} : vector<8x32xbf16> to vector<8x4xbf16>
    %cst_88 = arith.constant dense<0.000000e+00> : vector<8x4xf32>
    %273 = tpu.matmul %271, %272, %cst_88 {dimension_numbers = #tpu.dot_dimension_numbers<[1], [0], [0], [1], [0, 0, 1, 1], [], []>} : vector<8x8xbf16>, vector<8x4xbf16>, vector<8x4xf32> -> vector<8x4xf32>
    %274 = vector.extract_strided_slice %184 {offsets = [0, 20], sizes = [8, 4], strides = [1, 1]} : vector<8x32xbf16> to vector<8x4xbf16>
    %275 = vector.extract_strided_slice %191 {offsets = [0, 20], sizes = [8, 4], strides = [1, 1]} : vector<8x32xbf16> to vector<8x4xbf16>
    "tpu.trace_start"() <{level = 10 : i32, message = "qd,kd->qk"}> : () -> ()
    %cst_89 = arith.constant dense<0.000000e+00> : vector<8x8xf32>
    %276 = tpu.matmul %274, %275, %cst_89 {dimension_numbers = #tpu.dot_dimension_numbers<[1], [1], [0], [0], [0, 0, 1, 0], [], []>} : vector<8x4xbf16>, vector<8x4xbf16>, vector<8x8xf32> -> vector<8x8xf32>
    "tpu.trace_stop"() : () -> ()
    %cst_90 = arith.constant dense<0xFF800000> : vector<8xf32>
    %277 = vector.multi_reduction <maximumf>, %276, %cst_90 [1] : vector<8x8xf32> to vector<8xf32>
    %278 = vector.shape_cast %277 : vector<8xf32> to vector<8x1xf32>
    %279 = vector.broadcast %278 : vector<8x1xf32> to vector<8x8xf32>
    %280 = arith.subf %276, %279 : vector<8x8xf32>
    %281 = math.exp %280 : vector<8x8xf32>
    %cst_91 = arith.constant dense<0.000000e+00> : vector<8xf32>
    %282 = vector.multi_reduction <add>, %281, %cst_91 [1] : vector<8x8xf32> to vector<8xf32>
    %283 = vector.shape_cast %282 : vector<8xf32> to vector<8x1xf32>
    %284 = tpu.reciprocal %283 {approx = true} : vector<8x1xf32> -> vector<8x1xf32>
    %285 = vector.broadcast %284 : vector<8x1xf32> to vector<8x8xf32>
    %286 = arith.mulf %281, %285 : vector<8x8xf32>
    %287 = arith.truncf %286 : vector<8x8xf32> to vector<8x8xbf16>
    %288 = vector.extract_strided_slice %193 {offsets = [0, 20], sizes = [8, 4], strides = [1, 1]} : vector<8x32xbf16> to vector<8x4xbf16>
    %cst_92 = arith.constant dense<0.000000e+00> : vector<8x4xf32>
    %289 = tpu.matmul %287, %288, %cst_92 {dimension_numbers = #tpu.dot_dimension_numbers<[1], [0], [0], [1], [0, 0, 1, 1], [], []>} : vector<8x8xbf16>, vector<8x4xbf16>, vector<8x4xf32> -> vector<8x4xf32>
    %290 = vector.extract_strided_slice %184 {offsets = [0, 24], sizes = [8, 4], strides = [1, 1]} : vector<8x32xbf16> to vector<8x4xbf16>
    %291 = vector.extract_strided_slice %191 {offsets = [0, 24], sizes = [8, 4], strides = [1, 1]} : vector<8x32xbf16> to vector<8x4xbf16>
    "tpu.trace_start"() <{level = 10 : i32, message = "qd,kd->qk"}> : () -> ()
    %cst_93 = arith.constant dense<0.000000e+00> : vector<8x8xf32>
    %292 = tpu.matmul %290, %291, %cst_93 {dimension_numbers = #tpu.dot_dimension_numbers<[1], [1], [0], [0], [0, 0, 1, 0], [], []>} : vector<8x4xbf16>, vector<8x4xbf16>, vector<8x8xf32> -> vector<8x8xf32>
    "tpu.trace_stop"() : () -> ()
    %cst_94 = arith.constant dense<0xFF800000> : vector<8xf32>
    %293 = vector.multi_reduction <maximumf>, %292, %cst_94 [1] : vector<8x8xf32> to vector<8xf32>
    %294 = vector.shape_cast %293 : vector<8xf32> to vector<8x1xf32>
    %295 = vector.broadcast %294 : vector<8x1xf32> to vector<8x8xf32>
    %296 = arith.subf %292, %295 : vector<8x8xf32>
    %297 = math.exp %296 : vector<8x8xf32>
    %cst_95 = arith.constant dense<0.000000e+00> : vector<8xf32>
    %298 = vector.multi_reduction <add>, %297, %cst_95 [1] : vector<8x8xf32> to vector<8xf32>
    %299 = vector.shape_cast %298 : vector<8xf32> to vector<8x1xf32>
    %300 = tpu.reciprocal %299 {approx = true} : vector<8x1xf32> -> vector<8x1xf32>
    %301 = vector.broadcast %300 : vector<8x1xf32> to vector<8x8xf32>
    %302 = arith.mulf %297, %301 : vector<8x8xf32>
    %303 = arith.truncf %302 : vector<8x8xf32> to vector<8x8xbf16>
    %304 = vector.extract_strided_slice %193 {offsets = [0, 24], sizes = [8, 4], strides = [1, 1]} : vector<8x32xbf16> to vector<8x4xbf16>
    %cst_96 = arith.constant dense<0.000000e+00> : vector<8x4xf32>
    %305 = tpu.matmul %303, %304, %cst_96 {dimension_numbers = #tpu.dot_dimension_numbers<[1], [0], [0], [1], [0, 0, 1, 1], [], []>} : vector<8x8xbf16>, vector<8x4xbf16>, vector<8x4xf32> -> vector<8x4xf32>
    %306 = vector.extract_strided_slice %184 {offsets = [0, 28], sizes = [8, 4], strides = [1, 1]} : vector<8x32xbf16> to vector<8x4xbf16>
    %307 = vector.extract_strided_slice %191 {offsets = [0, 28], sizes = [8, 4], strides = [1, 1]} : vector<8x32xbf16> to vector<8x4xbf16>
    "tpu.trace_start"() <{level = 10 : i32, message = "qd,kd->qk"}> : () -> ()
    %cst_97 = arith.constant dense<0.000000e+00> : vector<8x8xf32>
    %308 = tpu.matmul %306, %307, %cst_97 {dimension_numbers = #tpu.dot_dimension_numbers<[1], [1], [0], [0], [0, 0, 1, 0], [], []>} : vector<8x4xbf16>, vector<8x4xbf16>, vector<8x8xf32> -> vector<8x8xf32>
    "tpu.trace_stop"() : () -> ()
    %cst_98 = arith.constant dense<0xFF800000> : vector<8xf32>
    %309 = vector.multi_reduction <maximumf>, %308, %cst_98 [1] : vector<8x8xf32> to vector<8xf32>
    %310 = vector.shape_cast %309 : vector<8xf32> to vector<8x1xf32>
    %311 = vector.broadcast %310 : vector<8x1xf32> to vector<8x8xf32>
    %312 = arith.subf %308, %311 : vector<8x8xf32>
    %313 = math.exp %312 : vector<8x8xf32>
    %cst_99 = arith.constant dense<0.000000e+00> : vector<8xf32>
    %314 = vector.multi_reduction <add>, %313, %cst_99 [1] : vector<8x8xf32> to vector<8xf32>
    %315 = vector.shape_cast %314 : vector<8xf32> to vector<8x1xf32>
    %316 = tpu.reciprocal %315 {approx = true} : vector<8x1xf32> -> vector<8x1xf32>
    %317 = vector.broadcast %316 : vector<8x1xf32> to vector<8x8xf32>
    %318 = arith.mulf %313, %317 : vector<8x8xf32>
    %319 = arith.truncf %318 : vector<8x8xf32> to vector<8x8xbf16>
    %320 = vector.extract_strided_slice %193 {offsets = [0, 28], sizes = [8, 4], strides = [1, 1]} : vector<8x32xbf16> to vector<8x4xbf16>
    %cst_100 = arith.constant dense<0.000000e+00> : vector<8x4xf32>
    %321 = tpu.matmul %319, %320, %cst_100 {dimension_numbers = #tpu.dot_dimension_numbers<[1], [0], [0], [1], [0, 0, 1, 1], [], []>} : vector<8x8xbf16>, vector<8x4xbf16>, vector<8x4xf32> -> vector<8x4xf32>
    %322 = tpu.concatenate %209, %225, %241, %257, %273, %289, %305, %321 in 1 : vector<8x4xf32>, vector<8x4xf32>, vector<8x4xf32>, vector<8x4xf32>, vector<8x4xf32>, vector<8x4xf32>, vector<8x4xf32>, vector<8x4xf32> -> vector<8x32xf32>
    %323 = arith.truncf %322 : vector<8x32xf32> to vector<8x32xbf16>
    %c0_101 = arith.constant 0 : index
    %c0_102 = arith.constant 0 : index
    %324 = vector.load %arg9[%c0_101, %c0_102] : memref<32x32xbf16, #tpu.memory_space<vmem>>, vector<32x32xbf16>
    %cst_103 = arith.constant dense<0.000000e+00> : vector<8x32xf32>
    %325 = tpu.matmul %323, %324, %cst_103 {dimension_numbers = #tpu.dot_dimension_numbers<[1], [0], [0], [1], [0, 0, 1, 1], [], []>} : vector<8x32xbf16>, vector<32x32xbf16>, vector<8x32xf32> -> vector<8x32xf32>
    %c0_104 = arith.constant 0 : index
    %c0_105 = arith.constant 0 : index
    %326 = vector.load %arg10[%c0_104, %c0_105] : memref<1x32xf32, #tpu.memory_space<vmem>>, vector<1x32xf32>
    %327 = vector.broadcast %326 : vector<1x32xf32> to vector<8x32xf32>
    %328 = arith.addf %325, %327 : vector<8x32xf32>
    %cst_106 = arith.constant 5.000000e-01 : f32
    %329 = vector.broadcast %cst_106 : f32 to vector<8x32xf32>
    %330 = arith.mulf %329, %328 : vector<8x32xf32>
    %cst_107 = arith.constant 4.471500e-02 : f32
    %331 = vector.broadcast %cst_107 : f32 to vector<8x32xf32>
    %332 = arith.mulf %331, %328 : vector<8x32xf32>
    %333 = arith.mulf %332, %328 : vector<8x32xf32>
    %334 = arith.mulf %333, %328 : vector<8x32xf32>
    %335 = arith.addf %328, %334 : vector<8x32xf32>
    %cst_108 = arith.constant 0.797884583 : f32
    %336 = vector.broadcast %cst_108 : f32 to vector<8x32xf32>
    %337 = arith.mulf %336, %335 : vector<8x32xf32>
    %338 = math.tanh %337 : vector<8x32xf32>
    %cst_109 = arith.constant 1.000000e+00 : f32
    %339 = vector.broadcast %cst_109 : f32 to vector<8x32xf32>
    %340 = arith.addf %339, %338 : vector<8x32xf32>
    %341 = arith.mulf %330, %340 : vector<8x32xf32>
    %342 = vector.broadcast %1 : f32 to vector<8x32xf32>
    %343 = arith.mulf %342, %341 : vector<8x32xf32>
    %344 = arith.addf %177, %343 : vector<8x32xf32>
    %345 = arith.truncf %344 : vector<8x32xf32> to vector<8x32xbf16>
    %c0_110 = arith.constant 0 : index
    %c0_111 = arith.constant 0 : index
    %346 = vector.load %arg11[%c0_110, %c0_111] : memref<32x64xbf16, #tpu.memory_space<vmem>>, vector<32x64xbf16>
    %cst_112 = arith.constant dense<0.000000e+00> : vector<8x64xf32>
    %347 = tpu.matmul %345, %346, %cst_112 {dimension_numbers = #tpu.dot_dimension_numbers<[1], [0], [0], [1], [0, 0, 1, 1], [], []>} : vector<8x32xbf16>, vector<32x64xbf16>, vector<8x64xf32> -> vector<8x64xf32>
    %c0_113 = arith.constant 0 : index
    %c0_114 = arith.constant 0 : index
    %348 = vector.load %arg12[%c0_113, %c0_114] : memref<1x64xf32, #tpu.memory_space<vmem>>, vector<1x64xf32>
    %349 = vector.broadcast %348 : vector<1x64xf32> to vector<8x64xf32>
    %350 = arith.addf %347, %349 : vector<8x64xf32>
    %cst_115 = arith.constant 5.000000e-01 : f32
    %351 = vector.broadcast %cst_115 : f32 to vector<8x64xf32>
    %352 = arith.mulf %351, %350 : vector<8x64xf32>
    %cst_116 = arith.constant 4.471500e-02 : f32
    %353 = vector.broadcast %cst_116 : f32 to vector<8x64xf32>
    %354 = arith.mulf %353, %350 : vector<8x64xf32>
    %355 = arith.mulf %354, %350 : vector<8x64xf32>
    %356 = arith.mulf %355, %350 : vector<8x64xf32>
    %357 = arith.addf %350, %356 : vector<8x64xf32>
    %cst_117 = arith.constant 0.797884583 : f32
    %358 = vector.broadcast %cst_117 : f32 to vector<8x64xf32>
    %359 = arith.mulf %358, %357 : vector<8x64xf32>
    %360 = math.tanh %359 : vector<8x64xf32>
    %cst_118 = arith.constant 1.000000e+00 : f32
    %361 = vector.broadcast %cst_118 : f32 to vector<8x64xf32>
    %362 = arith.addf %361, %360 : vector<8x64xf32>
    %363 = arith.mulf %352, %362 : vector<8x64xf32>
    %364 = arith.truncf %363 : vector<8x64xf32> to vector<8x64xbf16>
    %c0_119 = arith.constant 0 : index
    %c0_120 = arith.constant 0 : index
    %365 = vector.load %arg13[%c0_119, %c0_120] : memref<64x32xbf16, #tpu.memory_space<vmem>>, vector<64x32xbf16>
    %cst_121 = arith.constant dense<0.000000e+00> : vector<8x32xf32>
    %366 = tpu.matmul %364, %365, %cst_121 {dimension_numbers = #tpu.dot_dimension_numbers<[1], [0], [0], [1], [0, 0, 1, 1], [], []>} : vector<8x64xbf16>, vector<64x32xbf16>, vector<8x32xf32> -> vector<8x32xf32>
    %c0_122 = arith.constant 0 : index
    %c0_123 = arith.constant 0 : index
    %367 = vector.load %arg14[%c0_122, %c0_123] : memref<1x32xf32, #tpu.memory_space<vmem>>, vector<1x32xf32>
    %368 = vector.broadcast %367 : vector<1x32xf32> to vector<8x32xf32>
    %369 = arith.addf %366, %368 : vector<8x32xf32>
    %cst_124 = arith.constant 5.000000e-01 : f32
    %370 = vector.broadcast %cst_124 : f32 to vector<8x32xf32>
    %371 = arith.mulf %370, %369 : vector<8x32xf32>
    %cst_125 = arith.constant 4.471500e-02 : f32
    %372 = vector.broadcast %cst_125 : f32 to vector<8x32xf32>
    %373 = arith.mulf %372, %369 : vector<8x32xf32>
    %374 = arith.mulf %373, %369 : vector<8x32xf32>
    %375 = arith.mulf %374, %369 : vector<8x32xf32>
    %376 = arith.addf %369, %375 : vector<8x32xf32>
    %cst_126 = arith.constant 0.797884583 : f32
    %377 = vector.broadcast %cst_126 : f32 to vector<8x32xf32>
    %378 = arith.mulf %377, %376 : vector<8x32xf32>
    %379 = math.tanh %378 : vector<8x32xf32>
    %cst_127 = arith.constant 1.000000e+00 : f32
    %380 = vector.broadcast %cst_127 : f32 to vector<8x32xf32>
    %381 = arith.addf %380, %379 : vector<8x32xf32>
    %382 = arith.mulf %371, %381 : vector<8x32xf32>
    %383 = vector.broadcast %2 : f32 to vector<8x32xf32>
    %384 = arith.mulf %383, %382 : vector<8x32xf32>
    %385 = arith.addf %344, %384 : vector<8x32xf32>
    %c0_128 = arith.constant 0 : index
    %c0_129 = arith.constant 0 : index
    %c0_130 = arith.constant 0 : index
    %386 = vector.load %arg16[%c0_128, %c0_129, %c0_130] : memref<1x8x32xf32, #tpu.memory_space<vmem>>, vector<1x8x32xf32>
    %387 = vector.shape_cast %386 : vector<1x8x32xf32> to vector<8x32xf32>
    %388 = vector.shape_cast %385 : vector<8x32xf32> to vector<1x8x32xf32>
    tpu.vector_store %arg16[%c0_128, %c0_129, %c0_130], %388 {strides = array<i32>} : memref<1x8x32xf32, #tpu.memory_space<vmem>>, vector<1x8x32xf32>,
    return
  }
  func.func @transform_0(%arg0: i32, %arg1: i32) -> (i32, i32, i32) {
    %c0_i32 = arith.constant 0 : i32
    %c0_i32_0 = arith.constant 0 : i32
    return %arg0, %arg1, %c0_i32 : i32, i32, i32
  }
  func.func @transform_1(%arg0: i32, %arg1: i32) -> (i32, i32, i32) {
    %c0_i32 = arith.constant 0 : i32
    %c0_i32_0 = arith.constant 0 : i32
    %c0_i32_1 = arith.constant 0 : i32
    return %arg0, %c0_i32, %c0_i32_0 : i32, i32, i32
  }
  func.func @transform_2(%arg0: i32, %arg1: i32) -> (i32, i32, i32) {
    %c0_i32 = arith.constant 0 : i32
    %c0_i32_0 = arith.constant 0 : i32
    %c0_i32_1 = arith.constant 0 : i32
    return %arg0, %c0_i32, %c0_i32_0 : i32, i32, i32
  }
  func.func @transform_3(%arg0: i32, %arg1: i32) -> (i32, i32) {
    %c0_i32 = arith.constant 0 : i32
    %c0_i32_0 = arith.constant 0 : i32
    %c0_i32_1 = arith.constant 0 : i32
    return %c0_i32, %c0_i32_0 : i32, i32
  }
  func.func @transform_4(%arg0: i32, %arg1: i32) -> (i32, i32) {
    %c0_i32 = arith.constant 0 : i32
    %c0_i32_0 = arith.constant 0 : i32
    %c0_i32_1 = arith.constant 0 : i32
    return %c0_i32, %c0_i32_0 : i32, i32
  }
  func.func @transform_5(%arg0: i32, %arg1: i32) -> (i32, i32) {
    %c0_i32 = arith.constant 0 : i32
    %c0_i32_0 = arith.constant 0 : i32
    %c0_i32_1 = arith.constant 0 : i32
    return %c0_i32, %c0_i32_0 : i32, i32
  }
  func.func @transform_6(%arg0: i32, %arg1: i32) -> (i32, i32) {
    %c0_i32 = arith.constant 0 : i32
    %c0_i32_0 = arith.constant 0 : i32
    %c0_i32_1 = arith.constant 0 : i32
    return %c0_i32, %c0_i32_0 : i32, i32
  }
  func.func @transform_7(%arg0: i32, %arg1: i32) -> (i32, i32) {
    %c0_i32 = arith.constant 0 : i32
    %c0_i32_0 = arith.constant 0 : i32
    %c0_i32_1 = arith.constant 0 : i32
    return %c0_i32, %c0_i32_0 : i32, i32
  }
  func.func @transform_8(%arg0: i32, %arg1: i32) -> (i32, i32) {
    %c0_i32 = arith.constant 0 : i32
    %c0_i32_0 = arith.constant 0 : i32
    %c0_i32_1 = arith.constant 0 : i32
    return %c0_i32, %c0_i32_0 : i32, i32
  }
  func.func @transform_9(%arg0: i32, %arg1: i32) -> (i32, i32) {
    %c0_i32 = arith.constant 0 : i32
    %c0_i32_0 = arith.constant 0 : i32
    %c0_i32_1 = arith.constant 0 : i32
    return %c0_i32, %c0_i32_0 : i32, i32
  }
  func.func @transform_10(%arg0: i32, %arg1: i32) -> (i32, i32) {
    %c0_i32 = arith.constant 0 : i32
    %c0_i32_0 = arith.constant 0 : i32
    %c0_i32_1 = arith.constant 0 : i32
    return %c0_i32, %c0_i32_0 : i32, i32
  }
  func.func @transform_11(%arg0: i32, %arg1: i32) -> (i32, i32) {
    %c0_i32 = arith.constant 0 : i32
    %c0_i32_0 = arith.constant 0 : i32
    %c0_i32_1 = arith.constant 0 : i32
    return %c0_i32, %c0_i32_0 : i32, i32
  }
  func.func @transform_12(%arg0: i32, %arg1: i32) -> (i32, i32) {
    %c0_i32 = arith.constant 0 : i32
    %c0_i32_0 = arith.constant 0 : i32
    %c0_i32_1 = arith.constant 0 : i32
    return %c0_i32, %c0_i32_0 : i32, i32
  }
  func.func @transform_13(%arg0: i32, %arg1: i32) -> i32 {
    %c0_i32 = arith.constant 0 : i32
    %c0_i32_0 = arith.constant 0 : i32
    return %c0_i32 : i32
  }
  func.func @transform_14(%arg0: i32, %arg1: i32) -> (i32, i32, i32) {
    %c0_i32 = arith.constant 0 : i32
    %c0_i32_0 = arith.constant 0 : i32
    return %arg0, %arg1, %c0_i32 : i32, i32, i32
  }
}

</mosaic_0001>

<llo_original>
// kernel: tpu_custom_call.1
$region0: #{tpu_custom_call.1}
  #allocation0 [shape = 'u32[]', space=smem, size = 0x4, offset = 0x4, fixed_abs, tag = 'smem constant byte address 0x4 - core index']
  #allocation1 [shape = 'u32[144,128]{1,0:T(1,128)}', space=vmem, size = 0x12000, scoped, tag = 'internal scratch']
  %s0 = inlined_call_operand.vmem [shape: f32[2,8,32], index: 0, kind: input, shape index: {}]
  %s1 = inlined_call_operand.vmem [shape: f32[2,8,32], index: 1, kind: input, shape index: {}]
  %s2 = inlined_call_operand.vmem [shape: f32[2,8,32], index: 2, kind: input, shape index: {}]
  %s3 = inlined_call_operand.hbm [shape: bf16[32,32], index: 3, kind: input, shape index: {}]
  %s4 = inlined_call_operand.vmem [shape: f32[1,32], index: 4, kind: input, shape index: {}]
  %s5 = inlined_call_operand.hbm [shape: bf16[32,64], index: 5, kind: input, shape index: {}]
  %s6 = inlined_call_operand.vmem [shape: f32[1,64], index: 6, kind: input, shape index: {}]
  %s7 = inlined_call_operand.hbm [shape: bf16[32,32], index: 7, kind: input, shape index: {}]
  %s8 = inlined_call_operand.vmem [shape: f32[1,32], index: 8, kind: input, shape index: {}]
  %s9 = inlined_call_operand.hbm [shape: bf16[32,64], index: 9, kind: input, shape index: {}]
  %s10 = inlined_call_operand.vmem [shape: f32[1,64], index: 10, kind: input, shape index: {}]
  %s11 = inlined_call_operand.vmem [shape: bf16[64,32], index: 11, kind: input, shape index: {}]
  %s12 = inlined_call_operand.vmem [shape: f32[1,32], index: 12, kind: input, shape index: {}]
  %s13 = inlined_call_operand.vmem [shape: f32[3], index: 13, kind: input, shape index: {}]
  %s14 = inlined_call_operand.hbm [shape: f32[2,8,32], index: 14, kind: output, shape index: {}]
  %s15 = sld [smem:[#allocation0]]
  $region109: #{tpu_custom_call.1} parent=0
    _
  %s17 = ssub.s32 1, %s15
  %s18 = scalar_select 0, %s17, %s15
  $region1: #{tpu_custom_call.1} parent=0
    #allocation2 [shape = 'u8[8192]{0}', space=vmem, size = 0x2000, scoped, tag = 'input window, operand 3, single buffered']
    #allocation3 [shape = 's32[2]{0}', space=sflag, size = 0x8, scoped, tag = 'scoped memory for tpu_custom_call.1']
    #allocation4 [shape = 's32[2]{0}', space=sflag, size = 0x8, scoped, tag = 'scoped memory for tpu_custom_call.1']
    #allocation5 [shape = 's32[2]{0}', space=sflag, size = 0x8, scoped, tag = 'scoped memory for tpu_custom_call.1']
    #allocation6 [shape = 'u8[8192]{0}', space=vmem, size = 0x2000, scoped, tag = 'input window, operand 5, single buffered']
    #allocation7 [shape = 's32[1]{0}', space=sflag, size = 0x4, scoped, tag = 'scoped memory for tpu_custom_call.1']
    #allocation8 [shape = 'u8[8192]{0}', space=vmem, size = 0x2000, scoped, tag = 'input window, operand 7, single buffered']
    #allocation9 [shape = 'u8[8192]{0}', space=vmem, size = 0x2000, scoped, tag = 'input window, operand 9, single buffered']
    #allocation10 [shape = 's32[1]{0}', space=sflag, size = 0x4, scoped, tag = 'scoped memory for tpu_custom_call.1']
    #allocation11 [shape = 'u8[512]{0}', space=smem, size = 0x200, scoped, tag = 'input window, operand 13, single buffered']
    #allocation12 [shape = 'u8[8192]{0}', space=vmem, size = 0x2000, scoped, tag = 'output window, operand 0']
    %19 = vsyncpa [#allocation3], 0
    %20 = vsyncpa [#allocation7], 0
    %21 = vsyncpa [#allocation10], 0
    %22 = vsyncpa [#allocation5], 0
    %23 = vsyncpa [#allocation4], 0
    %s24 = scalar_lea.sflag [#allocation4], 1
    %25 = vsyncpa %s24, 0
    loop: start=0, step=1, limit=4
    $region2: #{tpu_custom_call.1} parent=1 // loop_pre_header
      _
    $region3: #{tpu_custom_call.1} parent=1 // loop_header
      %s27 = sphi 0, %s31
      %p28 = scmp.ge.s32.totalorder %s27, 4
      %s34 = sphi 0, %s46
      %s35 = sphi 0, %s42
      %s36 = sphi 0, %s34
      %s37 = sphi 0, %s35
      %s38 = sphi 0, %s36
      %s39 = sphi 0, %s37
      %s51 = sphi 0, %s53
      %s54 = sphi 0, %s51
      %s55 = sphi 0, %s54
      %s71 = sphi 0, %s55
      %s77 = sphi 0, %s79
      %s80 = sphi 0, %s77
      %s81 = sphi 0, %s80
      %s97 = sphi 0, %s81
      %s103 = sphi 0, %s105
      %s106 = sphi 0, %s103
      %s107 = sphi 0, %s106
      %s123 = sphi 0, %s107
      %s127 = sphi 0, %s127
      %s129 = sphi 0, %s127
      %s130 = sphi 0, %s129
      %s144 = sphi 0, %s130
      %s148 = sphi 0, %s148
      %s150 = sphi 0, %s148
      %s151 = sphi 0, %s150
      %s165 = sphi 0, %s151
      %s169 = sphi 0, %s169
      %s171 = sphi 0, %s169
      %s172 = sphi 0, %s171
      %s186 = sphi 0, %s172
      %s190 = sphi 0, %s190
      %s192 = sphi 0, %s190
      %s193 = sphi 0, %s192
      %s207 = sphi 0, %s193
      %s211 = sphi 0, %s211
      %s213 = sphi 0, %s211
      %s214 = sphi 0, %s213
      %s228 = sphi 0, %s214
      %s232 = sphi 0, %s232
      %s234 = sphi 0, %s232
      %s235 = sphi 0, %s234
      %s249 = sphi 0, %s235
      %s253 = sphi 0, %s253
      %s255 = sphi 0, %s253
      %s256 = sphi 0, %s255
      %s270 = sphi 0, %s256
      %s274 = sphi 0, %s274
      %s276 = sphi 0, %s274
      %s277 = sphi 0, %s276
      %s291 = sphi 0, %s277
      %s295 = sphi 0, %s295
      %s297 = sphi 0, %s295
      %s298 = sphi 0, %s297
      %s312 = sphi 0, %s298
      %s316 = sphi 0, %s316
      %s318 = sphi 0, %s316
      %s319 = sphi 0, %s318
      %s333 = sphi 0, %s319
      %s337 = sphi 0, %s337
      %s339 = sphi 0, %s337
      %s340 = sphi 0, %s339
      %s354 = sphi 0, %s340
      %s362 = sphi 0, %s364
      %s365 = sphi 0, %s362
      %s366 = sphi 0, %s365
      %s382 = sphi 0, %s366
    $region4: #{tpu_custom_call.1} parent=1 // loop_header_branch
      %30 = sbr.rel (%p28) target = $region8
    $region5: #{tpu_custom_call.1} parent=1 // loop_body
      %s32 = ssub.s32 %s27, 1
      %s33 = ssub.s32 %s27, 2
      %s40 = sadd.s32 1, %s35
      %p41 = scmp.ge.s32.totalorder %s40, 1
      %s42 = scalar_select %p41, 0, %s40
      %s43 = sadd.s32 1, %s34
      %s44 = scalar_select %p41, %s43, %s34
      %p45 = scmp.ge.s32.totalorder %s44, 2
      %s46 = scalar_select %p45, 0, %s44
      %s47 = ssub.s32 %s34, %s46
      %s48 = ssub.s32 %s35, %s42
      %s49 = sor.u32 %s47, %s48
      %p50 = scmp.eq.s32.totalorder %s49, 0
      %s52 = sadd.s32 %s51, 1
      %s53 = scalar_select %p50, %s51, %s52
      %p56 = pneg %p50
      %p57 = scmp.eq.s32.totalorder %s27, 1
      %p58 = por %p56, %p57
      %p59 = scmp.ne.s32.totalorder %s51, %s54
      %p60 = scmp.eq.s32.totalorder %s27, 0
      %p61 = por %p59, %p60
      %p62 = scmp.ne.s32.totalorder %s51, %s54
      %p63 = scmp.eq.s32.totalorder %s32, 1
      %p64 = por %p62, %p63
      %p65 = scmp.ne.s32.totalorder %s54, %s55
      %p66 = scmp.eq.s32.totalorder %s32, 0
      %p67 = por %p65, %p66
      %p68 = scmp.ne.s32.totalorder %s54, %s55
      %p69 = scmp.eq.s32.totalorder %s33, 1
      %p70 = por %p68, %p69
      %p72 = scmp.ne.s32.totalorder %s55, %s71
      %p73 = scmp.eq.s32.totalorder %s33, 0
      %p74 = por %p72, %p73
      %s75 = ssub.s32 %s34, %s46
      %p76 = scmp.eq.s32.totalorder %s75, 0
      %s78 = sadd.s32 %s77, 1
      %s79 = scalar_select %p76, %s77, %s78
      %p82 = pneg %p76
      %p83 = scmp.eq.s32.totalorder %s27, 1
      %p84 = por %p82, %p83
      %p85 = scmp.ne.s32.totalorder %s77, %s80
      %p86 = scmp.eq.s32.totalorder %s27, 0
      %p87 = por %p85, %p86
      %p88 = scmp.ne.s32.totalorder %s77, %s80
      %p89 = scmp.eq.s32.totalorder %s32, 1
      %p90 = por %p88, %p89
      %p91 = scmp.ne.s32.totalorder %s80, %s81
      %p92 = scmp.eq.s32.totalorder %s32, 0
      %p93 = por %p91, %p92
      %p94 = scmp.ne.s32.totalorder %s80, %s81
      %p95 = scmp.eq.s32.totalorder %s33, 1
      %p96 = por %p94, %p95
      %p98 = scmp.ne.s32.totalorder %s81, %s97
      %p99 = scmp.eq.s32.totalorder %s33, 0
      %p100 = por %p98, %p99
      %s101 = ssub.s32 %s34, %s46
      %p102 = scmp.eq.s32.totalorder %s101, 0
      %s104 = sadd.s32 %s103, 1
      %s105 = scalar_select %p102, %s103, %s104
      %p108 = pneg %p102
      %p109 = scmp.eq.s32.totalorder %s27, 1
      %p110 = por %p108, %p109
      %p111 = scmp.ne.s32.totalorder %s103, %s106
      %p112 = scmp.eq.s32.totalorder %s27, 0
      %p113 = por %p111, %p112
      %p114 = scmp.ne.s32.totalorder %s103, %s106
      %p115 = scmp.eq.s32.totalorder %s32, 1
      %p116 = por %p114, %p115
      %p117 = scmp.ne.s32.totalorder %s106, %s107
      %p118 = scmp.eq.s32.totalorder %s32, 0
      %p119 = por %p117, %p118
      %p120 = scmp.ne.s32.totalorder %s106, %s107
      %p121 = scmp.eq.s32.totalorder %s33, 1
      %p122 = por %p120, %p121
      %p124 = scmp.ne.s32.totalorder %s107, %s123
      %p125 = scmp.eq.s32.totalorder %s33, 0
      %p126 = por %p124, %p125
      %s128 = sadd.s32 %s127, 1
      %p131 = scmp.eq.s32.totalorder %s27, 1
      %p132 = scmp.ne.s32.totalorder %s127, %s129
      %p133 = scmp.eq.s32.totalorder %s27, 0
      %p134 = por %p132, %p133
      %p135 = scmp.ne.s32.totalorder %s127, %s129
      %p136 = scmp.eq.s32.totalorder %s32, 1
      %p137 = por %p135, %p136
      %p138 = scmp.ne.s32.totalorder %s129, %s130
      %p139 = scmp.eq.s32.totalorder %s32, 0
      %p140 = por %p138, %p139
      %p141 = scmp.ne.s32.totalorder %s129, %s130
      %p142 = scmp.eq.s32.totalorder %s33, 1
      %p143 = por %p141, %p142
      %p145 = scmp.ne.s32.totalorder %s130, %s144
      %p146 = scmp.eq.s32.totalorder %s33, 0
      %p147 = por %p145, %p146
      %s149 = sadd.s32 %s148, 1
      %p152 = scmp.eq.s32.totalorder %s27, 1
      %p153 = scmp.ne.s32.totalorder %s148, %s150
      %p154 = scmp.eq.s32.totalorder %s27, 0
      %p155 = por %p153, %p154
      %p156 = scmp.ne.s32.totalorder %s148, %s150
      %p157 = scmp.eq.s32.totalorder %s32, 1
      %p158 = por %p156, %p157
      %p159 = scmp.ne.s32.totalorder %s150, %s151
      %p160 = scmp.eq.s32.totalorder %s32, 0
      %p161 = por %p159, %p160
      %p162 = scmp.ne.s32.totalorder %s150, %s151
      %p163 = scmp.eq.s32.totalorder %s33, 1
      %p164 = por %p162, %p163
      %p166 = scmp.ne.s32.totalorder %s151, %s165
      %p167 = scmp.eq.s32.totalorder %s33, 0
      %p168 = por %p166, %p167
      %s170 = sadd.s32 %s169, 1
      %p173 = scmp.eq.s32.totalorder %s27, 1
      %p174 = scmp.ne.s32.totalorder %s169, %s171
      %p175 = scmp.eq.s32.totalorder %s27, 0
      %p176 = por %p174, %p175
      %p177 = scmp.ne.s32.totalorder %s169, %s171
      %p178 = scmp.eq.s32.totalorder %s32, 1
      %p179 = por %p177, %p178
      %p180 = scmp.ne.s32.totalorder %s171, %s172
      %p181 = scmp.eq.s32.totalorder %s32, 0
      %p182 = por %p180, %p181
      %p183 = scmp.ne.s32.totalorder %s171, %s172
      %p184 = scmp.eq.s32.totalorder %s33, 1
      %p185 = por %p183, %p184
      %p187 = scmp.ne.s32.totalorder %s172, %s186
      %p188 = scmp.eq.s32.totalorder %s33, 0
      %p189 = por %p187, %p188
      %s191 = sadd.s32 %s190, 1
      %p194 = scmp.eq.s32.totalorder %s27, 1
      %p195 = scmp.ne.s32.totalorder %s190, %s192
      %p196 = scmp.eq.s32.totalorder %s27, 0
      %p197 = por %p195, %p196
      %p198 = scmp.ne.s32.totalorder %s190, %s192
      %p199 = scmp.eq.s32.totalorder %s32, 1
      %p200 = por %p198, %p199
      %p201 = scmp.ne.s32.totalorder %s192, %s193
      %p202 = scmp.eq.s32.totalorder %s32, 0
      %p203 = por %p201, %p202
      %p204 = scmp.ne.s32.totalorder %s192, %s193
      %p205 = scmp.eq.s32.totalorder %s33, 1
      %p206 = por %p204, %p205
      %p208 = scmp.ne.s32.totalorder %s193, %s207
      %p209 = scmp.eq.s32.totalorder %s33, 0
      %p210 = por %p208, %p209
      %s212 = sadd.s32 %s211, 1
      %p215 = scmp.eq.s32.totalorder %s27, 1
      %p216 = scmp.ne.s32.totalorder %s211, %s213
      %p217 = scmp.eq.s32.totalorder %s27, 0
      %p218 = por %p216, %p217
      %p219 = scmp.ne.s32.totalorder %s211, %s213
      %p220 = scmp.eq.s32.totalorder %s32, 1
      %p221 = por %p219, %p220
      %p222 = scmp.ne.s32.totalorder %s213, %s214
      %p223 = scmp.eq.s32.totalorder %s32, 0
      %p224 = por %p222, %p223
      %p225 = scmp.ne.s32.totalorder %s213, %s214
      %p226 = scmp.eq.s32.totalorder %s33, 1
      %p227 = por %p225, %p226
      %p229 = scmp.ne.s32.totalorder %s214, %s228
      %p230 = scmp.eq.s32.totalorder %s33, 0
      %p231 = por %p229, %p230
      %s233 = sadd.s32 %s232, 1
      %p236 = scmp.eq.s32.totalorder %s27, 1
      %p237 = scmp.ne.s32.totalorder %s232, %s234
      %p238 = scmp.eq.s32.totalorder %s27, 0
      %p239 = por %p237, %p238
      %p240 = scmp.ne.s32.totalorder %s232, %s234
      %p241 = scmp.eq.s32.totalorder %s32, 1
      %p242 = por %p240, %p241
      %p243 = scmp.ne.s32.totalorder %s234, %s235
      %p244 = scmp.eq.s32.totalorder %s32, 0
      %p245 = por %p243, %p244
      %p246 = scmp.ne.s32.totalorder %s234, %s235
      %p247 = scmp.eq.s32.totalorder %s33, 1
      %p248 = por %p246, %p247
      %p250 = scmp.ne.s32.totalorder %s235, %s249
      %p251 = scmp.eq.s32.totalorder %s33, 0
      %p252 = por %p250, %p251
      %s254 = sadd.s32 %s253, 1
      %p257 = scmp.eq.s32.totalorder %s27, 1
      %p258 = scmp.ne.s32.totalorder %s253, %s255
      %p259 = scmp.eq.s32.totalorder %s27, 0
      %p260 = por %p258, %p259
      %p261 = scmp.ne.s32.totalorder %s253, %s255
      %p262 = scmp.eq.s32.totalorder %s32, 1
      %p263 = por %p261, %p262
      %p264 = scmp.ne.s32.totalorder %s255, %s256
      %p265 = scmp.eq.s32.totalorder %s32, 0
      %p266 = por %p264, %p265
      %p267 = scmp.ne.s32.totalorder %s255, %s256
      %p268 = scmp.eq.s32.totalorder %s33, 1
      %p269 = por %p267, %p268
      %p271 = scmp.ne.s32.totalorder %s256, %s270
      %p272 = scmp.eq.s32.totalorder %s33, 0
      %p273 = por %p271, %p272
      %s275 = sadd.s32 %s274, 1
      %p278 = scmp.eq.s32.totalorder %s27, 1
      %p279 = scmp.ne.s32.totalorder %s274, %s276
      %p280 = scmp.eq.s32.totalorder %s27, 0
      %p281 = por %p279, %p280
      %p282 = scmp.ne.s32.totalorder %s274, %s276
      %p283 = scmp.eq.s32.totalorder %s32, 1
      %p284 = por %p282, %p283
      %p285 = scmp.ne.s32.totalorder %s276, %s277
      %p286 = scmp.eq.s32.totalorder %s32, 0
      %p287 = por %p285, %p286
      %p288 = scmp.ne.s32.totalorder %s276, %s277
      %p289 = scmp.eq.s32.totalorder %s33, 1
      %p290 = por %p288, %p289
      %p292 = scmp.ne.s32.totalorder %s277, %s291
      %p293 = scmp.eq.s32.totalorder %s33, 0
      %p294 = por %p292, %p293
      %s296 = sadd.s32 %s295, 1
      %p299 = scmp.eq.s32.totalorder %s27, 1
      %p300 = scmp.ne.s32.totalorder %s295, %s297
      %p301 = scmp.eq.s32.totalorder %s27, 0
      %p302 = por %p300, %p301
      %p303 = scmp.ne.s32.totalorder %s295, %s297
      %p304 = scmp.eq.s32.totalorder %s32, 1
      %p305 = por %p303, %p304
      %p306 = scmp.ne.s32.totalorder %s297, %s298
      %p307 = scmp.eq.s32.totalorder %s32, 0
      %p308 = por %p306, %p307
      %p309 = scmp.ne.s32.totalorder %s297, %s298
      %p310 = scmp.eq.s32.totalorder %s33, 1
      %p311 = por %p309, %p310
      %p313 = scmp.ne.s32.totalorder %s298, %s312
      %p314 = scmp.eq.s32.totalorder %s33, 0
      %p315 = por %p313, %p314
      %s317 = sadd.s32 %s316, 1
      %p320 = scmp.eq.s32.totalorder %s27, 1
      %p321 = scmp.ne.s32.totalorder %s316, %s318
      %p322 = scmp.eq.s32.totalorder %s27, 0
      %p323 = por %p321, %p322
      %p324 = scmp.ne.s32.totalorder %s316, %s318
      %p325 = scmp.eq.s32.totalorder %s32, 1
      %p326 = por %p324, %p325
      %p327 = scmp.ne.s32.totalorder %s318, %s319
      %p328 = scmp.eq.s32.totalorder %s32, 0
      %p329 = por %p327, %p328
      %p330 = scmp.ne.s32.totalorder %s318, %s319
      %p331 = scmp.eq.s32.totalorder %s33, 1
      %p332 = por %p330, %p331
      %p334 = scmp.ne.s32.totalorder %s319, %s333
      %p335 = scmp.eq.s32.totalorder %s33, 0
      %p336 = por %p334, %p335
      %s338 = sadd.s32 %s337, 1
      %p341 = scmp.eq.s32.totalorder %s27, 1
      %p342 = scmp.ne.s32.totalorder %s337, %s339
      %p343 = scmp.eq.s32.totalorder %s27, 0
      %p344 = por %p342, %p343
      %p345 = scmp.ne.s32.totalorder %s337, %s339
      %p346 = scmp.eq.s32.totalorder %s32, 1
      %p347 = por %p345, %p346
      %p348 = scmp.ne.s32.totalorder %s339, %s340
      %p349 = scmp.eq.s32.totalorder %s32, 0
      %p350 = por %p348, %p349
      %p351 = scmp.ne.s32.totalorder %s339, %s340
      %p352 = scmp.eq.s32.totalorder %s33, 1
      %p353 = por %p351, %p352
      %p355 = scmp.ne.s32.totalorder %s340, %s354
      %p356 = scmp.eq.s32.totalorder %s33, 0
      %p357 = por %p355, %p356
      %s358 = ssub.s32 %s34, %s46
      %s359 = ssub.s32 %s35, %s42
      %s360 = sor.u32 %s358, %s359
      %p361 = scmp.eq.s32.totalorder %s360, 0
      %s363 = sadd.s32 %s362, 1
      %s364 = scalar_select %p361, %s362, %s363
      %p367 = pneg %p361
      %p368 = scmp.eq.s32.totalorder %s27, 1
      %p369 = por %p367, %p368
      %p370 = scmp.ne.s32.totalorder %s362, %s365
      %p371 = scmp.eq.s32.totalorder %s27, 0
      %p372 = por %p370, %p371
      %p373 = scmp.ne.s32.totalorder %s362, %s365
      %p374 = scmp.eq.s32.totalorder %s32, 1
      %p375 = por %p373, %p374
      %p376 = scmp.ne.s32.totalorder %s365, %s366
      %p377 = scmp.eq.s32.totalorder %s32, 0
      %p378 = por %p376, %p377
      %p379 = scmp.ne.s32.totalorder %s365, %s366
      %p380 = scmp.eq.s32.totalorder %s33, 1
      %p381 = por %p379, %p380
      %p383 = scmp.ne.s32.totalorder %s366, %s382
      %p384 = scmp.eq.s32.totalorder %s33, 0
      %p385 = por %p383, %p384
      %p386 = scmp.le.s32.totalorder 1, %s27
      %p387 = scmp.lt.s32.totalorder %s27, 3
      %p388 = pnand %p386, %p387
      %p389 = pneg %p388
      // Predicated region
      $region9: #{tpu_custom_call.1} parent=5 // pred_check
        _
      $region10: #{tpu_custom_call.1} parent=5 // pred_check_branch
        %391 = sbr.rel (%p388) target = $region12
      $region11: #{tpu_custom_call.1} parent=5 // pred_region
        %s392 = ssub.s32 %s27, 1
        // Predicated region
        $region13: #{tpu_custom_call.1} parent=11 // pred_check
          %p393 = pneg %p140
        $region14: #{tpu_custom_call.1} parent=11 // pred_check_branch
          %395 = sbr.rel (%p393) target = $region16
        $region15: #{tpu_custom_call.1} parent=11 // pred_region
          %s397 = ssub.s32 256, 256
          %398 = vsyncadd [#allocation3], %s397
          %s399 = sshll.u32 [#allocation2], 4
          %s400 = int_to_ptr.vmem [resolvable:$true] %s399
          %405 = dma.hbm_to_vmem [thread:$0]  %s3, 256, %s400, [#allocation3], 64, 64, 4
        $region16: #{tpu_custom_call.1} parent=11 // pred_fallthru
          _
        // Predicated region
        $region17: #{tpu_custom_call.1} parent=11 // pred_check
          %p406 = pneg %p161
        $region18: #{tpu_custom_call.1} parent=11 // pred_check_branch
          %408 = sbr.rel (%p406) target = $region20
        $region19: #{tpu_custom_call.1} parent=11 // pred_region
          _
        $region20: #{tpu_custom_call.1} parent=11 // pred_fallthru
          _
        // Predicated region
        $region21: #{tpu_custom_call.1} parent=11 // pred_check
          %p409 = pneg %p182
        $region22: #{tpu_custom_call.1} parent=11 // pred_check_branch
          %411 = sbr.rel (%p409) target = $region24
        $region23: #{tpu_custom_call.1} parent=11 // pred_region
          %s413 = ssub.s32 256, 256
          %414 = vsyncadd [#allocation7], %s413
          %s415 = sshll.u32 [#allocation6], 4
          %s416 = int_to_ptr.vmem [resolvable:$true] %s415
          %421 = dma.hbm_to_vmem [thread:$0]  %s5, 256, %s416, [#allocation7], 64, 64, 4
        $region24: #{tpu_custom_call.1} parent=11 // pred_fallthru
          _
        // Predicated region
        $region25: #{tpu_custom_call.1} parent=11 // pred_check
          %p422 = pneg %p203
        $region26: #{tpu_custom_call.1} parent=11 // pred_check_branch
          %424 = sbr.rel (%p422) target = $region28
        $region27: #{tpu_custom_call.1} parent=11 // pred_region
          _
        $region28: #{tpu_custom_call.1} parent=11 // pred_fallthru
          _
        // Predicated region
        $region29: #{tpu_custom_call.1} parent=11 // pred_check
          %p425 = pneg %p224
        $region30: #{tpu_custom_call.1} parent=11 // pred_check_branch
          %427 = sbr.rel (%p425) target = $region32
        $region31: #{tpu_custom_call.1} parent=11 // pred_region
          %s429 = ssub.s32 256, 256
          %430 = vsyncadd [#allocation7], %s429
          %s431 = sshll.u32 [#allocation8], 4
          %s432 = int_to_ptr.vmem [resolvable:$true] %s431
          %437 = dma.hbm_to_vmem [thread:$0]  %s7, 256, %s432, [#allocation7], 64, 64, 4
        $region32: #{tpu_custom_call.1} parent=11 // pred_fallthru
          _
        // Predicated region
        $region33: #{tpu_custom_call.1} parent=11 // pred_check
          %p438 = pneg %p245
        $region34: #{tpu_custom_call.1} parent=11 // pred_check_branch
          %440 = sbr.rel (%p438) target = $region36
        $region35: #{tpu_custom_call.1} parent=11 // pred_region
          _
        $region36: #{tpu_custom_call.1} parent=11 // pred_fallthru
          _
        // Predicated region
        $region37: #{tpu_custom_call.1} parent=11 // pred_check
          %p441 = pneg %p266
        $region38: #{tpu_custom_call.1} parent=11 // pred_check_branch
          %443 = sbr.rel (%p441) target = $region40
        $region39: #{tpu_custom_call.1} parent=11 // pred_region
          %s445 = ssub.s32 256, 256
          %446 = vsyncadd [#allocation10], %s445
          %s447 = sshll.u32 [#allocation9], 4
          %s448 = int_to_ptr.vmem [resolvable:$true] %s447
          %453 = dma.hbm_to_vmem [thread:$0]  %s9, 256, %s448, [#allocation10], 64, 64, 4
        $region40: #{tpu_custom_call.1} parent=11 // pred_fallthru
          _
        // Predicated region
        $region41: #{tpu_custom_call.1} parent=11 // pred_check
          %p454 = pneg %p287
        $region42: #{tpu_custom_call.1} parent=11 // pred_check_branch
          %456 = sbr.rel (%p454) target = $region44
        $region43: #{tpu_custom_call.1} parent=11 // pred_region
          _
        $region44: #{tpu_custom_call.1} parent=11 // pred_fallthru
          _
        // Predicated region
        $region45: #{tpu_custom_call.1} parent=11 // pred_check
          %p457 = pneg %p308
        $region46: #{tpu_custom_call.1} parent=11 // pred_check_branch
          %459 = sbr.rel (%p457) target = $region48
        $region47: #{tpu_custom_call.1} parent=11 // pred_region
          _
        $region48: #{tpu_custom_call.1} parent=11 // pred_fallthru
          _
        // Predicated region
        $region49: #{tpu_custom_call.1} parent=11 // pred_check
          %p460 = pneg %p329
        $region50: #{tpu_custom_call.1} parent=11 // pred_check_branch
          %462 = sbr.rel (%p460) target = $region52
        $region51: #{tpu_custom_call.1} parent=11 // pred_region
          _
        $region52: #{tpu_custom_call.1} parent=11 // pred_fallthru
          _
        // Predicated region
        $region53: #{tpu_custom_call.1} parent=11 // pred_check
          %p463 = pneg %p350
        $region54: #{tpu_custom_call.1} parent=11 // pred_check_branch
          %465 = sbr.rel (%p463) target = $region56
        $region55: #{tpu_custom_call.1} parent=11 // pred_region
          %s467 = ssub.s32 16, 16
          %468 = vsyncadd [#allocation5], %s467
          %s470 = sshll.u32 %s13, 4
          %s471 = int_to_ptr.vmem [resolvable:$true] %s470
          %473 = dma.vmem_to_smem %s471, 16, [#allocation11], [#allocation5]
        $region56: #{tpu_custom_call.1} parent=11 // pred_fallthru
          _
      $region12: #{tpu_custom_call.1} parent=5 // pred_fallthru
        _
      %p474 = scmp.lt.s32.totalorder %s27, 2
      // Predicated region
      $region57: #{tpu_custom_call.1} parent=5 // pred_check
        %p475 = pneg %p474
      $region58: #{tpu_custom_call.1} parent=5 // pred_check_branch
        %477 = sbr.rel (%p475) target = $region60
      $region59: #{tpu_custom_call.1} parent=5 // pred_region
        // Predicated region
        $region61: #{tpu_custom_call.1} parent=59 // pred_check
          %p478 = pneg %p61
        $region62: #{tpu_custom_call.1} parent=59 // pred_check_branch
          %480 = sbr.rel (%p478) target = $region64
        $region63: #{tpu_custom_call.1} parent=59 // pred_region
          %p481 = scmp.lt.s32.totalorder %s34, 1
          %s482 = scalar_select %p481, %s34, 1
          %p483 = scmp.lt.s32.totalorder %s35, 0
          %s484 = scalar_select %p483, %s35, 0
          %s485 = sadd.s32 %s484, %s482
          %s486 = smul.addr %s485, 8
          %s487 = scalar_lea.vmem %s0, %s486
        $region64: #{tpu_custom_call.1} parent=59 // pred_fallthru
          _
        // Predicated region
        $region65: #{tpu_custom_call.1} parent=59 // pred_check
          %p488 = pneg %p87
        $region66: #{tpu_custom_call.1} parent=59 // pred_check_branch
          %490 = sbr.rel (%p488) target = $region68
        $region67: #{tpu_custom_call.1} parent=59 // pred_region
          %p491 = scmp.lt.s32.totalorder %s34, 1
          %s492 = scalar_select %p491, %s34, 1
          %s493 = smul.addr %s492, 8
          %s494 = scalar_lea.vmem %s1, %s493
        $region68: #{tpu_custom_call.1} parent=59 // pred_fallthru
          _
        // Predicated region
        $region69: #{tpu_custom_call.1} parent=59 // pred_check
          %p495 = pneg %p113
        $region70: #{tpu_custom_call.1} parent=59 // pred_check_branch
          %497 = sbr.rel (%p495) target = $region72
        $region71: #{tpu_custom_call.1} parent=59 // pred_region
          %p498 = scmp.lt.s32.totalorder %s34, 1
          %s499 = scalar_select %p498, %s34, 1
          %s500 = smul.addr %s499, 8
          %s501 = scalar_lea.vmem %s2, %s500
        $region72: #{tpu_custom_call.1} parent=59 // pred_fallthru
          _
      $region60: #{tpu_custom_call.1} parent=5 // pred_fallthru
        _
      %p502 = scmp.le.s32.totalorder 1, %s27
      %p503 = scmp.lt.s32.totalorder %s27, 3
      %p504 = pnand %p502, %p503
      %p505 = pneg %p504
      // Predicated region
      $region73: #{tpu_custom_call.1} parent=5 // pred_check
        _
      $region74: #{tpu_custom_call.1} parent=5 // pred_check_branch
        %507 = sbr.rel (%p504) target = $region76
      $region75: #{tpu_custom_call.1} parent=5 // pred_region
        %s508 = ssub.s32 %s27, 1
        // Predicated region
        $region77: #{tpu_custom_call.1} parent=75 // pred_check
          %p509 = pneg %p140
        $region78: #{tpu_custom_call.1} parent=75 // pred_check_branch
          %511 = sbr.rel (%p509) target = $region80
        $region79: #{tpu_custom_call.1} parent=75 // pred_region
          %512 = dma.done [#allocation3], 256
        $region80: #{tpu_custom_call.1} parent=75 // pred_fallthru
          _
        // Predicated region
        $region81: #{tpu_custom_call.1} parent=75 // pred_check
          %p513 = pneg %p182
        $region82: #{tpu_custom_call.1} parent=75 // pred_check_branch
          %515 = sbr.rel (%p513) target = $region84
        $region83: #{tpu_custom_call.1} parent=75 // pred_region
          %516 = dma.done [#allocation7], 256
        $region84: #{tpu_custom_call.1} parent=75 // pred_fallthru
          _
        // Predicated region
        $region85: #{tpu_custom_call.1} parent=75 // pred_check
          %p517 = pneg %p224
        $region86: #{tpu_custom_call.1} parent=75 // pred_check_branch
          %519 = sbr.rel (%p517) target = $region88
        $region87: #{tpu_custom_call.1} parent=75 // pred_region
          %520 = dma.done [#allocation7], 256
        $region88: #{tpu_custom_call.1} parent=75 // pred_fallthru
          _
        // Predicated region
        $region89: #{tpu_custom_call.1} parent=75 // pred_check
          %p521 = pneg %p266
        $region90: #{tpu_custom_call.1} parent=75 // pred_check_branch
          %523 = sbr.rel (%p521) target = $region92
        $region91: #{tpu_custom_call.1} parent=75 // pred_region
          %524 = dma.done [#allocation10], 256
        $region92: #{tpu_custom_call.1} parent=75 // pred_fallthru
          _
        // Predicated region
        $region93: #{tpu_custom_call.1} parent=75 // pred_check
          %p525 = pneg %p350
        $region94: #{tpu_custom_call.1} parent=75 // pred_check_branch
          %527 = sbr.rel (%p525) target = $region96
        $region95: #{tpu_custom_call.1} parent=75 // pred_region
          %528 = dma.done [#allocation5], 16
        $region96: #{tpu_custom_call.1} parent=75 // pred_fallthru
          _
        %529 = sfence
        %p530 = scmp.lt.s32.totalorder %s36, 1
        %s531 = scalar_select %p530, %s36, 1
        %p532 = scmp.lt.s32.totalorder %s37, 0
        %s533 = scalar_select %p532, %s37, 0
        %s534 = sadd.s32 %s533, %s531
        %s535 = smul.addr %s534, 8
        %s536 = scalar_lea.vmem %s0, %s535
        %p537 = pneg %p67
        %p538 = pneg %p64
        %p539 = scmp.lt.s32.totalorder %s36, 1
        %s540 = scalar_select %p539, %s36, 1
        %s541 = smul.addr %s540, 8
        %s542 = scalar_lea.vmem %s1, %s541
        %p543 = pneg %p93
        %p544 = pneg %p90
        %p545 = scmp.lt.s32.totalorder %s36, 1
        %s546 = scalar_select %p545, %s36, 1
        %s547 = smul.addr %s546, 8
        %s548 = scalar_lea.vmem %s2, %s547
        %p549 = pneg %p119
        %p550 = pneg %p116
        %p551 = pneg %p140
        %p552 = pneg %p137
        %p553 = pneg %p161
        %p554 = pneg %p158
        %p555 = pneg %p182
        %p556 = pneg %p179
        %p557 = pneg %p203
        %p558 = pneg %p200
        %p559 = pneg %p224
        %p560 = pneg %p221
        %p561 = pneg %p245
        %p562 = pneg %p242
        %p563 = pneg %p266
        %p564 = pneg %p263
        %p565 = pneg %p287
        %p566 = pneg %p284
        %p567 = pneg %p308
        %p568 = pneg %p305
        %p569 = pneg %p329
        %p570 = pneg %p326
        %p571 = pneg %p350
        %p572 = pneg %p347
        %p573 = pneg %p378
        %p574 = pneg %p375
        %s575 = sand.u32 %s365, 1
        %s576 = scalar_lea.sflag [#allocation4], %s575
        %s577 = sand.u32 %s365, 1
        %s578 = smul.addr %s577, 8
        %s579 = scalar_lea.vmem [#allocation12], %s578
        %p580 = scmp.lt.s32.totalorder %s36, 1
        %s581 = scalar_select %p580, %s36, 1
        %p582 = scmp.lt.s32.totalorder %s37, 0
        %s583 = scalar_select %p582, %s37, 0
        %s584 = sadd.s32 %s583, %s581
        %s585 = smul.addr %s584, 8
        %s586 = scalar_lea.vmem %s0, %s585
        %p587 = scmp.lt.s32.totalorder %s36, 1
        %s588 = scalar_select %p587, %s36, 1
        %s589 = smul.addr %s588, 8
        %s590 = scalar_lea.vmem %s1, %s589
        %p591 = scmp.lt.s32.totalorder %s36, 1
        %s592 = scalar_select %p591, %s36, 1
        %s593 = smul.addr %s592, 8
        %s594 = scalar_lea.vmem %s2, %s593
        %s596 = sld [smem:[#allocation11]]
        %s597 = sld [smem:[#allocation11 + $0x1]]
        %s598 = sld [smem:[#allocation11 + $0x2]]
        %v599 = vld [vmem:[%s586] sm:$0xff]
        %v600 = vld [vmem:[%s590] sm:$0xff]
        %v601 = vpack.c.bf16 %v600, %v600
        %v602 = vld [vmem:[%s594] sm:$0xff]
        %v603 = vpack.c.bf16 %v602, %v602
        %v604 = vpack.c.bf16 %v599, %v599
        %v605 = vld [vmem:[#allocation2] sm:$0xf]
        %v606 = vld [vmem:[#allocation2 + $0x4] sm:$0xf]
        %v607 = vld [vmem:[#allocation2 + $0x8] sm:$0xf]
        %v608 = vld [vmem:[#allocation2 + $0xc] sm:$0xf]
        %v609 = vld [vmem:[%s4] sm:$0x1]
        %v611 = vlaneseq
        %v612 = vshrl.u32 %v611, 7
        %v613 = vsub.s32 0, %v612
        %v614 = vrot.slane %v609, %v613
        %v620 = vunpack.c.l.b16 %v605
        %v621 = vunpack.c.l.b16 %v606
        %v622 = vunpack.c.l.b16 %v607
        %v623 = vunpack.c.l.b16 %v608
        %v624 = vpack.c.b16 %v621, %v620
        %v625 = vpack.c.b16 %v623, %v622
        %vm628 = vcmask 261120
        %v630 = vsel %vm628, %v604, 0
        %632 = vmatprep.subr.bf16.mxu0 0
        %633 = vmatpush1.bf16.msra.mxu0 0
        %634 = vmatprep.subr.bf16.mxu0 0
        %635 = vmatpush1.bf16.msra.mxu0 0
        %636 = vmatprep.subr.bf16.mxu0 0
        %637 = vmatpush1.bf16.msra.mxu0 0
        %638 = vmatprep.subr.bf16.mxu0 0
        %639 = vmatpush1.bf16.msra.mxu0 0
        %640 = vmatprep.subr.bf16.mxu0 0
        %641 = vmatpush1.bf16.msra.mxu0 0
        %642 = vmatprep.subr.bf16.mxu0 0
        %643 = vmatpush1.bf16.msra.mxu0 0
        %644 = vmatprep.subr.bf16.mxu0 0
        %645 = vmatpush1.bf16.msra.mxu0 %v625
        %646 = vmatprep.subr.bf16.mxu0 0
        %647 = vmatpush1.bf16.msra.mxu0 %v624
        %648 = vmatprep.subr.bf16.mxu0 0
        %649 = vmatpush2.bf16.msra.mxu0 0
        %650 = vmatprep.subr.bf16.mxu0 0
        %651 = vmatpush2.bf16.msra.mxu0 0
        %652 = vmatprep.subr.bf16.mxu0 0
        %653 = vmatpush2.bf16.msra.mxu0 0
        %654 = vmatprep.subr.bf16.mxu0 0
        %655 = vmatpush2.bf16.msra.mxu0 0
        %656 = vmatprep.subr.bf16.mxu0 0
        %657 = vmatpush2.bf16.msra.mxu0 0
        %658 = vmatprep.subr.bf16.mxu0 0
        %659 = vmatpush2.bf16.msra.mxu0 0
        %660 = vmatprep.subr.bf16.mxu0 0
        %661 = vmatpush2.bf16.msra.mxu0 0
        %662 = vmatprep.subr.bf16.mxu0 0
        %663 = vmatpush2.bf16.msra.mxu0 0
        %664 = vmatprep.mubr.bf16.mxu0 0
        %665 = vmatmul.mubr.bf16.gmra.mxu0 %v630
        %v666 = vpop.f32.mrf.mxu0
        %v667 = vadd.f32 %v614, %v666
        %v668 = vpop.f32.mrf.mxu0
        %v669 = vpop.f32.mrf.mxu0
        %v670 = vpop.f32.mrf.mxu0
        %671 = vdwg.mxu0
        %v672 = vpack.c.bf16 %v667, %v667
        %v673 = vld [vmem:[#allocation6] sm:$0xf]
        %v674 = vld [vmem:[#allocation6 + $0x4] sm:$0xf]
        %v675 = vld [vmem:[#allocation6 + $0x8] sm:$0xf]
        %v676 = vld [vmem:[#allocation6 + $0xc] sm:$0xf]
        %v677 = vld [vmem:[%s6] sm:$0x1]
        %v679 = vlaneseq
        %v680 = vshrl.u32 %v679, 7
        %v681 = vsub.s32 0, %v680
        %v682 = vrot.slane %v677, %v681
        %v688 = vunpack.c.l.b16 %v673
        %v689 = vunpack.c.l.b16 %v674
        %v690 = vunpack.c.l.b16 %v675
        %v691 = vunpack.c.l.b16 %v676
        %v692 = vpack.c.b16 %v689, %v688
        %v693 = vpack.c.b16 %v691, %v690
        %v697 = vsel %vm628, %v601, 0
        %699 = vmatprep.subr.bf16.mxu0 0
        %700 = vmatpush1.bf16.msra.mxu0 0
        %701 = vmatprep.subr.bf16.mxu0 0
        %702 = vmatpush1.bf16.msra.mxu0 0
        %703 = vmatprep.subr.bf16.mxu0 0
        %704 = vmatpush1.bf16.msra.mxu0 0
        %705 = vmatprep.subr.bf16.mxu0 0
        %706 = vmatpush1.bf16.msra.mxu0 0
        %707 = vmatprep.subr.bf16.mxu0 0
        %708 = vmatpush1.bf16.msra.mxu0 0
        %709 = vmatprep.subr.bf16.mxu0 0
        %710 = vmatpush1.bf16.msra.mxu0 0
        %711 = vmatprep.subr.bf16.mxu0 0
        %712 = vmatpush1.bf16.msra.mxu0 %v693
        %713 = vmatprep.subr.bf16.mxu0 0
        %714 = vmatpush1.bf16.msra.mxu0 %v692
        %715 = vmatprep.subr.bf16.mxu0 0
        %716 = vmatpush2.bf16.msra.mxu0 0
        %717 = vmatprep.subr.bf16.mxu0 0
        %718 = vmatpush2.bf16.msra.mxu0 0
        %719 = vmatprep.subr.bf16.mxu0 0
        %720 = vmatpush2.bf16.msra.mxu0 0
        %721 = vmatprep.subr.bf16.mxu0 0
        %722 = vmatpush2.bf16.msra.mxu0 0
        %723 = vmatprep.subr.bf16.mxu0 0
        %724 = vmatpush2.bf16.msra.mxu0 0
        %725 = vmatprep.subr.bf16.mxu0 0
        %726 = vmatpush2.bf16.msra.mxu0 0
        %727 = vmatprep.subr.bf16.mxu0 0
        %728 = vmatpush2.bf16.msra.mxu0 0
        %729 = vmatprep.subr.bf16.mxu0 0
        %730 = vmatpush2.bf16.msra.mxu0 0
        %731 = vmatprep.mubr.bf16.mxu0 0
        %732 = vmatmul.mubr.bf16.gmra.mxu0 %v697
        %v733 = vpop.f32.mrf.mxu0
        %v734 = vadd.f32 %v682, %v733
        %v735 = vpop.f32.mrf.mxu0
        %v736 = vpop.f32.mrf.mxu0
        %v737 = vpop.f32.mrf.mxu0
        %738 = vdwg.mxu0
        %v739 = vpack.c.bf16 %v734, %v734
        %vm740 = vcmask 31744
        %v742 = vsel %vm740, %v672, 0
        %v745 = vsel %vm740, %v739, 0
        %747 = vmatprep.subr.bf16.mxu0 0
        %748 = vmatpush1.bf16.xpose.msra.mxu0 0
        %749 = vmatprep.subr.bf16.mxu0 0
        %750 = vmatpush1.bf16.xpose.msra.mxu0 0
        %751 = vmatprep.subr.bf16.mxu0 0
        %752 = vmatpush1.bf16.xpose.msra.mxu0 0
        %753 = vmatprep.subr.bf16.mxu0 0
        %754 = vmatpush1.bf16.xpose.msra.mxu0 0
        %755 = vmatprep.subr.bf16.mxu0 0
        %756 = vmatpush1.bf16.xpose.msra.mxu0 0
        %757 = vmatprep.subr.bf16.mxu0 0
        %758 = vmatpush1.bf16.xpose.msra.mxu0 0
        %759 = vmatprep.subr.bf16.mxu0 0
        %760 = vmatpush1.bf16.xpose.msra.mxu0 0
        %761 = vmatprep.subr.bf16.mxu0 0
        %762 = vmatpush1.bf16.xpose.msra.mxu0 %v745
        %763 = vmatprep.subr.bf16.mxu0 0
        %764 = vmatpush2.bf16.xpose.msra.mxu0 0
        %765 = vmatprep.subr.bf16.mxu0 0
        %766 = vmatpush2.bf16.xpose.msra.mxu0 0
        %767 = vmatprep.subr.bf16.mxu0 0
        %768 = vmatpush2.bf16.xpose.msra.mxu0 0
        %769 = vmatprep.subr.bf16.mxu0 0
        %770 = vmatpush2.bf16.xpose.msra.mxu0 0
        %771 = vmatprep.subr.bf16.mxu0 0
        %772 = vmatpush2.bf16.xpose.msra.mxu0 0
        %773 = vmatprep.subr.bf16.mxu0 0
        %774 = vmatpush2.bf16.xpose.msra.mxu0 0
        %775 = vmatprep.subr.bf16.mxu0 0
        %776 = vmatpush2.bf16.xpose.msra.mxu0 0
        %777 = vmatprep.subr.bf16.mxu0 0
        %778 = vmatpush2.bf16.xpose.msra.mxu0 0
        %779 = vmatprep.mubr.bf16.mxu0 0
        %780 = vmatmul.mubr.bf16.gmra.mxu0 %v742
        %v781 = vpop.f32.mrf.mxu0
        %v782 = vadd.f32 0.0, %v781
        %v783 = vpop.f32.mrf.mxu0
        %v784 = vpop.f32.mrf.mxu0
        %v785 = vpop.f32.mrf.mxu0
        %786 = vdwg.mxu0
        %vm787 = vcmask 64512
        %v788 = vsel %vm787, %v782, -inf
        %789 = vmax.xlane.f32.xlu0 %v788
        %v790 = vpop.xlane.xlu0 %789
        %v791 = vsub.f32 %v782, %v790
        %v792 = vmul.f32 %v791, 1.442695
        %v793 = vpow.pop %v792
        %v794 = vsel %vm787, %v793, 0.0
        %795 = vadd.xlane.f32.xlu0 %v794
        %v796 = vpop.xlane.xlu0 %795
        %v797 = vrcp.pop %v796
        %v798 = vmul.f32 %v793, %v797
        %v799 = vpack.c.bf16 %v798, %v798
        %801 = vrot.lane.b32.xlu0 %v739, 96
        %v802 = vpop.permute.xlu0 %801
        %v804 = vsel %vm787, %v799, 0
        %vm806 = vcmask 1043456
        %v808 = vsel %vm806, %v802, 0
        %810 = vmatprep.subr.bf16.mxu0 0
        %811 = vmatpush1.bf16.msra.mxu0 0
        %812 = vmatprep.subr.bf16.mxu0 0
        %813 = vmatpush1.bf16.msra.mxu0 0
        %814 = vmatprep.subr.bf16.mxu0 0
        %815 = vmatpush1.bf16.msra.mxu0 0
        %816 = vmatprep.subr.bf16.mxu0 0
        %817 = vmatpush1.bf16.msra.mxu0 0
        %818 = vmatprep.subr.bf16.mxu0 0
        %819 = vmatpush1.bf16.msra.mxu0 0
        %820 = vmatprep.subr.bf16.mxu0 0
        %821 = vmatpush1.bf16.msra.mxu0 0
        %822 = vmatprep.subr.bf16.mxu0 0
        %823 = vmatpush1.bf16.msra.mxu0 0
        %824 = vmatprep.subr.bf16.mxu0 0
        %825 = vmatpush1.bf16.msra.mxu0 %v808
        %826 = vmatprep.subr.bf16.mxu0 0
        %827 = vmatpush2.bf16.msra.mxu0 0
        %828 = vmatprep.subr.bf16.mxu0 0
        %829 = vmatpush2.bf16.msra.mxu0 0
        %830 = vmatprep.subr.bf16.mxu0 0
        %831 = vmatpush2.bf16.msra.mxu0 0
        %832 = vmatprep.subr.bf16.mxu0 0
        %833 = vmatpush2.bf16.msra.mxu0 0
        %834 = vmatprep.subr.bf16.mxu0 0
        %835 = vmatpush2.bf16.msra.mxu0 0
        %836 = vmatprep.subr.bf16.mxu0 0
        %837 = vmatpush2.bf16.msra.mxu0 0
        %838 = vmatprep.subr.bf16.mxu0 0
        %839 = vmatpush2.bf16.msra.mxu0 0
        %840 = vmatprep.subr.bf16.mxu0 0
        %841 = vmatpush2.bf16.msra.mxu0 0
        %842 = vmatprep.mubr.bf16.mxu0 0
        %843 = vmatmul.mubr.bf16.gmra.mxu0 %v804
        %v844 = vpop.f32.mrf.mxu0
        %v845 = vadd.f32 0.0, %v844
        %v846 = vpop.f32.mrf.mxu0
        %v847 = vpop.f32.mrf.mxu0
        %v848 = vpop.f32.mrf.mxu0
        %849 = vdwg.mxu0
        %851 = vrot.lane.b32.xlu0 %v672, 124
        %v852 = vpop.permute.xlu0 %851
        %853 = vrot.lane.b32.xlu0 %v739, 124
        %v854 = vpop.permute.xlu0 %853
        %v856 = vsel %vm740, %v852, 0
        %v859 = vsel %vm740, %v854, 0
        %861 = vmatprep.subr.bf16.mxu0 0
        %862 = vmatpush1.bf16.xpose.msra.mxu0 0
        %863 = vmatprep.subr.bf16.mxu0 0
        %864 = vmatpush1.bf16.xpose.msra.mxu0 0
        %865 = vmatprep.subr.bf16.mxu0 0
        %866 = vmatpush1.bf16.xpose.msra.mxu0 0
        %867 = vmatprep.subr.bf16.mxu0 0
        %868 = vmatpush1.bf16.xpose.msra.mxu0 0
        %869 = vmatprep.subr.bf16.mxu0 0
        %870 = vmatpush1.bf16.xpose.msra.mxu0 0
        %871 = vmatprep.subr.bf16.mxu0 0
        %872 = vmatpush1.bf16.xpose.msra.mxu0 0
        %873 = vmatprep.subr.bf16.mxu0 0
        %874 = vmatpush1.bf16.xpose.msra.mxu0 0
        %875 = vmatprep.subr.bf16.mxu0 0
        %876 = vmatpush1.bf16.xpose.msra.mxu0 %v859
        %877 = vmatprep.subr.bf16.mxu0 0
        %878 = vmatpush2.bf16.xpose.msra.mxu0 0
        %879 = vmatprep.subr.bf16.mxu0 0
        %880 = vmatpush2.bf16.xpose.msra.mxu0 0
        %881 = vmatprep.subr.bf16.mxu0 0
        %882 = vmatpush2.bf16.xpose.msra.mxu0 0
        %883 = vmatprep.subr.bf16.mxu0 0
        %884 = vmatpush2.bf16.xpose.msra.mxu0 0
        %885 = vmatprep.subr.bf16.mxu0 0
        %886 = vmatpush2.bf16.xpose.msra.mxu0 0
        %887 = vmatprep.subr.bf16.mxu0 0
        %888 = vmatpush2.bf16.xpose.msra.mxu0 0
        %889 = vmatprep.subr.bf16.mxu0 0
        %890 = vmatpush2.bf16.xpose.msra.mxu0 0
        %891 = vmatprep.subr.bf16.mxu0 0
        %892 = vmatpush2.bf16.xpose.msra.mxu0 0
        %893 = vmatprep.mubr.bf16.mxu0 0
        %894 = vmatmul.mubr.bf16.gmra.mxu0 %v856
        %v895 = vpop.f32.mrf.mxu0
        %v896 = vadd.f32 0.0, %v895
        %v897 = vpop.f32.mrf.mxu0
        %v898 = vpop.f32.mrf.mxu0
        %v899 = vpop.f32.mrf.mxu0
        %900 = vdwg.mxu0
        %v901 = vsel %vm787, %v896, -inf
        %902 = vmax.xlane.f32.xlu0 %v901
        %v903 = vpop.xlane.xlu0 %902
        %v904 = vsub.f32 %v896, %v903
        %v905 = vmul.f32 %v904, 1.442695
        %v906 = vpow.pop %v905
        %v907 = vsel %vm787, %v906, 0.0
        %908 = vadd.xlane.f32.xlu0 %v907
        %v909 = vpop.xlane.xlu0 %908
        %v910 = vrcp.pop %v909
        %v911 = vmul.f32 %v906, %v910
        %v912 = vpack.c.bf16 %v911, %v911
        %913 = vrot.lane.b32.xlu0 %v739, 92
        %v914 = vpop.permute.xlu0 %913
        %v916 = vsel %vm787, %v912, 0
        %v919 = vsel %vm806, %v914, 0
        %921 = vmatprep.subr.bf16.mxu0 0
        %922 = vmatpush1.bf16.msra.mxu0 0
        %923 = vmatprep.subr.bf16.mxu0 0
        %924 = vmatpush1.bf16.msra.mxu0 0
        %925 = vmatprep.subr.bf16.mxu0 0
        %926 = vmatpush1.bf16.msra.mxu0 0
        %927 = vmatprep.subr.bf16.mxu0 0
        %928 = vmatpush1.bf16.msra.mxu0 0
        %929 = vmatprep.subr.bf16.mxu0 0
        %930 = vmatpush1.bf16.msra.mxu0 0
        %931 = vmatprep.subr.bf16.mxu0 0
        %932 = vmatpush1.bf16.msra.mxu0 0
        %933 = vmatprep.subr.bf16.mxu0 0
        %934 = vmatpush1.bf16.msra.mxu0 0
        %935 = vmatprep.subr.bf16.mxu0 0
        %936 = vmatpush1.bf16.msra.mxu0 %v919
        %937 = vmatprep.subr.bf16.mxu0 0
        %938 = vmatpush2.bf16.msra.mxu0 0
        %939 = vmatprep.subr.bf16.mxu0 0
        %940 = vmatpush2.bf16.msra.mxu0 0
        %941 = vmatprep.subr.bf16.mxu0 0
        %942 = vmatpush2.bf16.msra.mxu0 0
        %943 = vmatprep.subr.bf16.mxu0 0
        %944 = vmatpush2.bf16.msra.mxu0 0
        %945 = vmatprep.subr.bf16.mxu0 0
        %946 = vmatpush2.bf16.msra.mxu0 0
        %947 = vmatprep.subr.bf16.mxu0 0
        %948 = vmatpush2.bf16.msra.mxu0 0
        %949 = vmatprep.subr.bf16.mxu0 0
        %950 = vmatpush2.bf16.msra.mxu0 0
        %951 = vmatprep.subr.bf16.mxu0 0
        %952 = vmatpush2.bf16.msra.mxu0 0
        %953 = vmatprep.mubr.bf16.mxu0 0
        %954 = vmatmul.mubr.bf16.gmra.mxu0 %v916
        %v955 = vpop.f32.mrf.mxu0
        %v956 = vadd.f32 0.0, %v955
        %v957 = vpop.f32.mrf.mxu0
        %v958 = vpop.f32.mrf.mxu0
        %v959 = vpop.f32.mrf.mxu0
        %960 = vdwg.mxu0
        %961 = vrot.lane.b32.xlu0 %v672, 120
        %v962 = vpop.permute.xlu0 %961
        %963 = vrot.lane.b32.xlu0 %v739, 120
        %v964 = vpop.permute.xlu0 %963
        %v966 = vsel %vm740, %v962, 0
        %v969 = vsel %vm740, %v964, 0
        %971 = vmatprep.subr.bf16.mxu0 0
        %972 = vmatpush1.bf16.xpose.msra.mxu0 0
        %973 = vmatprep.subr.bf16.mxu0 0
        %974 = vmatpush1.bf16.xpose.msra.mxu0 0
        %975 = vmatprep.subr.bf16.mxu0 0
        %976 = vmatpush1.bf16.xpose.msra.mxu0 0
        %977 = vmatprep.subr.bf16.mxu0 0
        %978 = vmatpush1.bf16.xpose.msra.mxu0 0
        %979 = vmatprep.subr.bf16.mxu0 0
        %980 = vmatpush1.bf16.xpose.msra.mxu0 0
        %981 = vmatprep.subr.bf16.mxu0 0
        %982 = vmatpush1.bf16.xpose.msra.mxu0 0
        %983 = vmatprep.subr.bf16.mxu0 0
        %984 = vmatpush1.bf16.xpose.msra.mxu0 0
        %985 = vmatprep.subr.bf16.mxu0 0
        %986 = vmatpush1.bf16.xpose.msra.mxu0 %v969
        %987 = vmatprep.subr.bf16.mxu0 0
        %988 = vmatpush2.bf16.xpose.msra.mxu0 0
        %989 = vmatprep.subr.bf16.mxu0 0
        %990 = vmatpush2.bf16.xpose.msra.mxu0 0
        %991 = vmatprep.subr.bf16.mxu0 0
        %992 = vmatpush2.bf16.xpose.msra.mxu0 0
        %993 = vmatprep.subr.bf16.mxu0 0
        %994 = vmatpush2.bf16.xpose.msra.mxu0 0
        %995 = vmatprep.subr.bf16.mxu0 0
        %996 = vmatpush2.bf16.xpose.msra.mxu0 0
        %997 = vmatprep.subr.bf16.mxu0 0
        %998 = vmatpush2.bf16.xpose.msra.mxu0 0
        %999 = vmatprep.subr.bf16.mxu0 0
        %1000 = vmatpush2.bf16.xpose.msra.mxu0 0
        %1001 = vmatprep.subr.bf16.mxu0 0
        %1002 = vmatpush2.bf16.xpose.msra.mxu0 0
        %1003 = vmatprep.mubr.bf16.mxu0 0
        %1004 = vmatmul.mubr.bf16.gmra.mxu0 %v966
        %v1005 = vpop.f32.mrf.mxu0
        %v1006 = vadd.f32 0.0, %v1005
        %v1007 = vpop.f32.mrf.mxu0
        %v1008 = vpop.f32.mrf.mxu0
        %v1009 = vpop.f32.mrf.mxu0
        %1010 = vdwg.mxu0
        %v1011 = vsel %vm787, %v1006, -inf
        %1012 = vmax.xlane.f32.xlu0 %v1011
        %v1013 = vpop.xlane.xlu0 %1012
        %v1014 = vsub.f32 %v1006, %v1013
        %v1015 = vmul.f32 %v1014, 1.442695
        %v1016 = vpow.pop %v1015
        %v1017 = vsel %vm787, %v1016, 0.0
        %1018 = vadd.xlane.f32.xlu0 %v1017
        %v1019 = vpop.xlane.xlu0 %1018
        %v1020 = vrcp.pop %v1019
        %v1021 = vmul.f32 %v1016, %v1020
        %v1022 = vpack.c.bf16 %v1021, %v1021
        %1023 = vrot.lane.b32.xlu0 %v739, 88
        %v1024 = vpop.permute.xlu0 %1023
        %v1026 = vsel %vm787, %v1022, 0
        %v1029 = vsel %vm806, %v1024, 0
        %1031 = vmatprep.subr.bf16.mxu0 0
        %1032 = vmatpush1.bf16.msra.mxu0 0
        %1033 = vmatprep.subr.bf16.mxu0 0
        %1034 = vmatpush1.bf16.msra.mxu0 0
        %1035 = vmatprep.subr.bf16.mxu0 0
        %1036 = vmatpush1.bf16.msra.mxu0 0
        %1037 = vmatprep.subr.bf16.mxu0 0
        %1038 = vmatpush1.bf16.msra.mxu0 0
        %1039 = vmatprep.subr.bf16.mxu0 0
        %1040 = vmatpush1.bf16.msra.mxu0 0
        %1041 = vmatprep.subr.bf16.mxu0 0
        %1042 = vmatpush1.bf16.msra.mxu0 0
        %1043 = vmatprep.subr.bf16.mxu0 0
        %1044 = vmatpush1.bf16.msra.mxu0 0
        %1045 = vmatprep.subr.bf16.mxu0 0
        %1046 = vmatpush1.bf16.msra.mxu0 %v1029
        %1047 = vmatprep.subr.bf16.mxu0 0
        %1048 = vmatpush2.bf16.msra.mxu0 0
        %1049 = vmatprep.subr.bf16.mxu0 0
        %1050 = vmatpush2.bf16.msra.mxu0 0
        %1051 = vmatprep.subr.bf16.mxu0 0
        %1052 = vmatpush2.bf16.msra.mxu0 0
        %1053 = vmatprep.subr.bf16.mxu0 0
        %1054 = vmatpush2.bf16.msra.mxu0 0
        %1055 = vmatprep.subr.bf16.mxu0 0
        %1056 = vmatpush2.bf16.msra.mxu0 0
        %1057 = vmatprep.subr.bf16.mxu0 0
        %1058 = vmatpush2.bf16.msra.mxu0 0
        %1059 = vmatprep.subr.bf16.mxu0 0
        %1060 = vmatpush2.bf16.msra.mxu0 0
        %1061 = vmatprep.subr.bf16.mxu0 0
        %1062 = vmatpush2.bf16.msra.mxu0 0
        %1063 = vmatprep.mubr.bf16.mxu0 0
        %1064 = vmatmul.mubr.bf16.gmra.mxu0 %v1026
        %v1065 = vpop.f32.mrf.mxu0
        %v1066 = vadd.f32 0.0, %v1065
        %v1067 = vpop.f32.mrf.mxu0
        %v1068 = vpop.f32.mrf.mxu0
        %v1069 = vpop.f32.mrf.mxu0
        %1070 = vdwg.mxu0
        %1071 = vrot.lane.b32.xlu0 %v672, 116
        %v1072 = vpop.permute.xlu0 %1071
        %1073 = vrot.lane.b32.xlu0 %v739, 116
        %v1074 = vpop.permute.xlu0 %1073
        %v1076 = vsel %vm740, %v1072, 0
        %v1079 = vsel %vm740, %v1074, 0
        %1081 = vmatprep.subr.bf16.mxu0 0
        %1082 = vmatpush1.bf16.xpose.msra.mxu0 0
        %1083 = vmatprep.subr.bf16.mxu0 0
        %1084 = vmatpush1.bf16.xpose.msra.mxu0 0
        %1085 = vmatprep.subr.bf16.mxu0 0
        %1086 = vmatpush1.bf16.xpose.msra.mxu0 0
        %1087 = vmatprep.subr.bf16.mxu0 0
        %1088 = vmatpush1.bf16.xpose.msra.mxu0 0
        %1089 = vmatprep.subr.bf16.mxu0 0
        %1090 = vmatpush1.bf16.xpose.msra.mxu0 0
        %1091 = vmatprep.subr.bf16.mxu0 0
        %1092 = vmatpush1.bf16.xpose.msra.mxu0 0
        %1093 = vmatprep.subr.bf16.mxu0 0
        %1094 = vmatpush1.bf16.xpose.msra.mxu0 0
        %1095 = vmatprep.subr.bf16.mxu0 0
        %1096 = vmatpush1.bf16.xpose.msra.mxu0 %v1079
        %1097 = vmatprep.subr.bf16.mxu0 0
        %1098 = vmatpush2.bf16.xpose.msra.mxu0 0
        %1099 = vmatprep.subr.bf16.mxu0 0
        %1100 = vmatpush2.bf16.xpose.msra.mxu0 0
        %1101 = vmatprep.subr.bf16.mxu0 0
        %1102 = vmatpush2.bf16.xpose.msra.mxu0 0
        %1103 = vmatprep.subr.bf16.mxu0 0
        %1104 = vmatpush2.bf16.xpose.msra.mxu0 0
        %1105 = vmatprep.subr.bf16.mxu0 0
        %1106 = vmatpush2.bf16.xpose.msra.mxu0 0
        %1107 = vmatprep.subr.bf16.mxu0 0
        %1108 = vmatpush2.bf16.xpose.msra.mxu0 0
        %1109 = vmatprep.subr.bf16.mxu0 0
        %1110 = vmatpush2.bf16.xpose.msra.mxu0 0
        %1111 = vmatprep.subr.bf16.mxu0 0
        %1112 = vmatpush2.bf16.xpose.msra.mxu0 0
        %1113 = vmatprep.mubr.bf16.mxu0 0
        %1114 = vmatmul.mubr.bf16.gmra.mxu0 %v1076
        %v1115 = vpop.f32.mrf.mxu0
        %v1116 = vadd.f32 0.0, %v1115
        %v1117 = vpop.f32.mrf.mxu0
        %v1118 = vpop.f32.mrf.mxu0
        %v1119 = vpop.f32.mrf.mxu0
        %1120 = vdwg.mxu0
        %v1121 = vsel %vm787, %v1116, -inf
        %1122 = vmax.xlane.f32.xlu0 %v1121
        %v1123 = vpop.xlane.xlu0 %1122
        %v1124 = vsub.f32 %v1116, %v1123
        %v1125 = vmul.f32 %v1124, 1.442695
        %v1126 = vpow.pop %v1125
        %v1127 = vsel %vm787, %v1126, 0.0
        %1128 = vadd.xlane.f32.xlu0 %v1127
        %v1129 = vpop.xlane.xlu0 %1128
        %v1130 = vrcp.pop %v1129
        %v1131 = vmul.f32 %v1126, %v1130
        %v1132 = vpack.c.bf16 %v1131, %v1131
        %1133 = vrot.lane.b32.xlu0 %v739, 84
        %v1134 = vpop.permute.xlu0 %1133
        %v1136 = vsel %vm787, %v1132, 0
        %v1139 = vsel %vm806, %v1134, 0
        %1141 = vmatprep.subr.bf16.mxu0 0
        %1142 = vmatpush1.bf16.msra.mxu0 0
        %1143 = vmatprep.subr.bf16.mxu0 0
        %1144 = vmatpush1.bf16.msra.mxu0 0
        %1145 = vmatprep.subr.bf16.mxu0 0
        %1146 = vmatpush1.bf16.msra.mxu0 0
        %1147 = vmatprep.subr.bf16.mxu0 0
        %1148 = vmatpush1.bf16.msra.mxu0 0
        %1149 = vmatprep.subr.bf16.mxu0 0
        %1150 = vmatpush1.bf16.msra.mxu0 0
        %1151 = vmatprep.subr.bf16.mxu0 0
        %1152 = vmatpush1.bf16.msra.mxu0 0
        %1153 = vmatprep.subr.bf16.mxu0 0
        %1154 = vmatpush1.bf16.msra.mxu0 0
        %1155 = vmatprep.subr.bf16.mxu0 0
        %1156 = vmatpush1.bf16.msra.mxu0 %v1139
        %1157 = vmatprep.subr.bf16.mxu0 0
        %1158 = vmatpush2.bf16.msra.mxu0 0
        %1159 = vmatprep.subr.bf16.mxu0 0
        %1160 = vmatpush2.bf16.msra.mxu0 0
        %1161 = vmatprep.subr.bf16.mxu0 0
        %1162 = vmatpush2.bf16.msra.mxu0 0
        %1163 = vmatprep.subr.bf16.mxu0 0
        %1164 = vmatpush2.bf16.msra.mxu0 0
        %1165 = vmatprep.subr.bf16.mxu0 0
        %1166 = vmatpush2.bf16.msra.mxu0 0
        %1167 = vmatprep.subr.bf16.mxu0 0
        %1168 = vmatpush2.bf16.msra.mxu0 0
        %1169 = vmatprep.subr.bf16.mxu0 0
        %1170 = vmatpush2.bf16.msra.mxu0 0
        %1171 = vmatprep.subr.bf16.mxu0 0
        %1172 = vmatpush2.bf16.msra.mxu0 0
        %1173 = vmatprep.mubr.bf16.mxu0 0
        %1174 = vmatmul.mubr.bf16.gmra.mxu0 %v1136
        %v1175 = vpop.f32.mrf.mxu0
        %v1176 = vadd.f32 0.0, %v1175
        %v1177 = vpop.f32.mrf.mxu0
        %v1178 = vpop.f32.mrf.mxu0
        %v1179 = vpop.f32.mrf.mxu0
        %1180 = vdwg.mxu0
        %1181 = vrot.lane.b32.xlu0 %v672, 112
        %v1182 = vpop.permute.xlu0 %1181
        %1183 = vrot.lane.b32.xlu0 %v739, 112
        %v1184 = vpop.permute.xlu0 %1183
        %v1186 = vsel %vm740, %v1182, 0
        %v1189 = vsel %vm740, %v1184, 0
        %1191 = vmatprep.subr.bf16.mxu0 0
        %1192 = vmatpush1.bf16.xpose.msra.mxu0 0
        %1193 = vmatprep.subr.bf16.mxu0 0
        %1194 = vmatpush1.bf16.xpose.msra.mxu0 0
        %1195 = vmatprep.subr.bf16.mxu0 0
        %1196 = vmatpush1.bf16.xpose.msra.mxu0 0
        %1197 = vmatprep.subr.bf16.mxu0 0
        %1198 = vmatpush1.bf16.xpose.msra.mxu0 0
        %1199 = vmatprep.subr.bf16.mxu0 0
        %1200 = vmatpush1.bf16.xpose.msra.mxu0 0
        %1201 = vmatprep.subr.bf16.mxu0 0
        %1202 = vmatpush1.bf16.xpose.msra.mxu0 0
        %1203 = vmatprep.subr.bf16.mxu0 0
        %1204 = vmatpush1.bf16.xpose.msra.mxu0 0
        %1205 = vmatprep.subr.bf16.mxu0 0
        %1206 = vmatpush1.bf16.xpose.msra.mxu0 %v1189
        %1207 = vmatprep.subr.bf16.mxu0 0
        %1208 = vmatpush2.bf16.xpose.msra.mxu0 0
        %1209 = vmatprep.subr.bf16.mxu0 0
        %1210 = vmatpush2.bf16.xpose.msra.mxu0 0
        %1211 = vmatprep.subr.bf16.mxu0 0
        %1212 = vmatpush2.bf16.xpose.msra.mxu0 0
        %1213 = vmatprep.subr.bf16.mxu0 0
        %1214 = vmatpush2.bf16.xpose.msra.mxu0 0
        %1215 = vmatprep.subr.bf16.mxu0 0
        %1216 = vmatpush2.bf16.xpose.msra.mxu0 0
        %1217 = vmatprep.subr.bf16.mxu0 0
        %1218 = vmatpush2.bf16.xpose.msra.mxu0 0
        %1219 = vmatprep.subr.bf16.mxu0 0
        %1220 = vmatpush2.bf16.xpose.msra.mxu0 0
        %1221 = vmatprep.subr.bf16.mxu0 0
        %1222 = vmatpush2.bf16.xpose.msra.mxu0 0
        %1223 = vmatprep.mubr.bf16.mxu0 0
        %1224 = vmatmul.mubr.bf16.gmra.mxu0 %v1186
        %v1225 = vpop.f32.mrf.mxu0
        %v1226 = vadd.f32 0.0, %v1225
        %v1227 = vpop.f32.mrf.mxu0
        %v1228 = vpop.f32.mrf.mxu0
        %v1229 = vpop.f32.mrf.mxu0
        %1230 = vdwg.mxu0
        %v1231 = vsel %vm787, %v1226, -inf
        %1232 = vmax.xlane.f32.xlu0 %v1231
        %v1233 = vpop.xlane.xlu0 %1232
        %v1234 = vsub.f32 %v1226, %v1233
        %v1235 = vmul.f32 %v1234, 1.442695
        %v1236 = vpow.pop %v1235
        %v1237 = vsel %vm787, %v1236, 0.0
        %1238 = vadd.xlane.f32.xlu0 %v1237
        %v1239 = vpop.xlane.xlu0 %1238
        %v1240 = vrcp.pop %v1239
        %v1241 = vmul.f32 %v1236, %v1240
        %v1242 = vpack.c.bf16 %v1241, %v1241
        %1243 = vrot.lane.b32.xlu0 %v739, 80
        %v1244 = vpop.permute.xlu0 %1243
        %v1246 = vsel %vm787, %v1242, 0
        %v1249 = vsel %vm806, %v1244, 0
        %1251 = vmatprep.subr.bf16.mxu0 0
        %1252 = vmatpush1.bf16.msra.mxu0 0
        %1253 = vmatprep.subr.bf16.mxu0 0
        %1254 = vmatpush1.bf16.msra.mxu0 0
        %1255 = vmatprep.subr.bf16.mxu0 0
        %1256 = vmatpush1.bf16.msra.mxu0 0
        %1257 = vmatprep.subr.bf16.mxu0 0
        %1258 = vmatpush1.bf16.msra.mxu0 0
        %1259 = vmatprep.subr.bf16.mxu0 0
        %1260 = vmatpush1.bf16.msra.mxu0 0
        %1261 = vmatprep.subr.bf16.mxu0 0
        %1262 = vmatpush1.bf16.msra.mxu0 0
        %1263 = vmatprep.subr.bf16.mxu0 0
        %1264 = vmatpush1.bf16.msra.mxu0 0
        %1265 = vmatprep.subr.bf16.mxu0 0
        %1266 = vmatpush1.bf16.msra.mxu0 %v1249
        %1267 = vmatprep.subr.bf16.mxu0 0
        %1268 = vmatpush2.bf16.msra.mxu0 0
        %1269 = vmatprep.subr.bf16.mxu0 0
        %1270 = vmatpush2.bf16.msra.mxu0 0
        %1271 = vmatprep.subr.bf16.mxu0 0
        %1272 = vmatpush2.bf16.msra.mxu0 0
        %1273 = vmatprep.subr.bf16.mxu0 0
        %1274 = vmatpush2.bf16.msra.mxu0 0
        %1275 = vmatprep.subr.bf16.mxu0 0
        %1276 = vmatpush2.bf16.msra.mxu0 0
        %1277 = vmatprep.subr.bf16.mxu0 0
        %1278 = vmatpush2.bf16.msra.mxu0 0
        %1279 = vmatprep.subr.bf16.mxu0 0
        %1280 = vmatpush2.bf16.msra.mxu0 0
        %1281 = vmatprep.subr.bf16.mxu0 0
        %1282 = vmatpush2.bf16.msra.mxu0 0
        %1283 = vmatprep.mubr.bf16.mxu0 0
        %1284 = vmatmul.mubr.bf16.gmra.mxu0 %v1246
        %v1285 = vpop.f32.mrf.mxu0
        %v1286 = vadd.f32 0.0, %v1285
        %v1287 = vpop.f32.mrf.mxu0
        %v1288 = vpop.f32.mrf.mxu0
        %v1289 = vpop.f32.mrf.mxu0
        %1290 = vdwg.mxu0
        %1291 = vrot.lane.b32.xlu0 %v672, 108
        %v1292 = vpop.permute.xlu0 %1291
        %1293 = vrot.lane.b32.xlu0 %v739, 108
        %v1294 = vpop.permute.xlu0 %1293
        %v1296 = vsel %vm740, %v1292, 0
        %v1299 = vsel %vm740, %v1294, 0
        %1301 = vmatprep.subr.bf16.mxu0 0
        %1302 = vmatpush1.bf16.xpose.msra.mxu0 0
        %1303 = vmatprep.subr.bf16.mxu0 0
        %1304 = vmatpush1.bf16.xpose.msra.mxu0 0
        %1305 = vmatprep.subr.bf16.mxu0 0
        %1306 = vmatpush1.bf16.xpose.msra.mxu0 0
        %1307 = vmatprep.subr.bf16.mxu0 0
        %1308 = vmatpush1.bf16.xpose.msra.mxu0 0
        %1309 = vmatprep.subr.bf16.mxu0 0
        %1310 = vmatpush1.bf16.xpose.msra.mxu0 0
        %1311 = vmatprep.subr.bf16.mxu0 0
        %1312 = vmatpush1.bf16.xpose.msra.mxu0 0
        %1313 = vmatprep.subr.bf16.mxu0 0
        %1314 = vmatpush1.bf16.xpose.msra.mxu0 0
        %1315 = vmatprep.subr.bf16.mxu0 0
        %1316 = vmatpush1.bf16.xpose.msra.mxu0 %v1299
        %1317 = vmatprep.subr.bf16.mxu0 0
        %1318 = vmatpush2.bf16.xpose.msra.mxu0 0
        %1319 = vmatprep.subr.bf16.mxu0 0
        %1320 = vmatpush2.bf16.xpose.msra.mxu0 0
        %1321 = vmatprep.subr.bf16.mxu0 0
        %1322 = vmatpush2.bf16.xpose.msra.mxu0 0
        %1323 = vmatprep.subr.bf16.mxu0 0
        %1324 = vmatpush2.bf16.xpose.msra.mxu0 0
        %1325 = vmatprep.subr.bf16.mxu0 0
        %1326 = vmatpush2.bf16.xpose.msra.mxu0 0
        %1327 = vmatprep.subr.bf16.mxu0 0
        %1328 = vmatpush2.bf16.xpose.msra.mxu0 0
        %1329 = vmatprep.subr.bf16.mxu0 0
        %1330 = vmatpush2.bf16.xpose.msra.mxu0 0
        %1331 = vmatprep.subr.bf16.mxu0 0
        %1332 = vmatpush2.bf16.xpose.msra.mxu0 0
        %1333 = vmatprep.mubr.bf16.mxu0 0
        %1334 = vmatmul.mubr.bf16.gmra.mxu0 %v1296
        %v1335 = vpop.f32.mrf.mxu0
        %v1336 = vadd.f32 0.0, %v1335
        %v1337 = vpop.f32.mrf.mxu0
        %v1338 = vpop.f32.mrf.mxu0
        %v1339 = vpop.f32.mrf.mxu0
        %1340 = vdwg.mxu0
        %v1341 = vsel %vm787, %v1336, -inf
        %1342 = vmax.xlane.f32.xlu0 %v1341
        %v1343 = vpop.xlane.xlu0 %1342
        %v1344 = vsub.f32 %v1336, %v1343
        %v1345 = vmul.f32 %v1344, 1.442695
        %v1346 = vpow.pop %v1345
        %v1347 = vsel %vm787, %v1346, 0.0
        %1348 = vadd.xlane.f32.xlu0 %v1347
        %v1349 = vpop.xlane.xlu0 %1348
        %v1350 = vrcp.pop %v1349
        %v1351 = vmul.f32 %v1346, %v1350
        %v1352 = vpack.c.bf16 %v1351, %v1351
        %1353 = vrot.lane.b32.xlu0 %v739, 76
        %v1354 = vpop.permute.xlu0 %1353
        %v1356 = vsel %vm787, %v1352, 0
        %v1359 = vsel %vm806, %v1354, 0
        %1361 = vmatprep.subr.bf16.mxu0 0
        %1362 = vmatpush1.bf16.msra.mxu0 0
        %1363 = vmatprep.subr.bf16.mxu0 0
        %1364 = vmatpush1.bf16.msra.mxu0 0
        %1365 = vmatprep.subr.bf16.mxu0 0
        %1366 = vmatpush1.bf16.msra.mxu0 0
        %1367 = vmatprep.subr.bf16.mxu0 0
        %1368 = vmatpush1.bf16.msra.mxu0 0
        %1369 = vmatprep.subr.bf16.mxu0 0
        %1370 = vmatpush1.bf16.msra.mxu0 0
        %1371 = vmatprep.subr.bf16.mxu0 0
        %1372 = vmatpush1.bf16.msra.mxu0 0
        %1373 = vmatprep.subr.bf16.mxu0 0
        %1374 = vmatpush1.bf16.msra.mxu0 0
        %1375 = vmatprep.subr.bf16.mxu0 0
        %1376 = vmatpush1.bf16.msra.mxu0 %v1359
        %1377 = vmatprep.subr.bf16.mxu0 0
        %1378 = vmatpush2.bf16.msra.mxu0 0
        %1379 = vmatprep.subr.bf16.mxu0 0
        %1380 = vmatpush2.bf16.msra.mxu0 0
        %1381 = vmatprep.subr.bf16.mxu0 0
        %1382 = vmatpush2.bf16.msra.mxu0 0
        %1383 = vmatprep.subr.bf16.mxu0 0
        %1384 = vmatpush2.bf16.msra.mxu0 0
        %1385 = vmatprep.subr.bf16.mxu0 0
        %1386 = vmatpush2.bf16.msra.mxu0 0
        %1387 = vmatprep.subr.bf16.mxu0 0
        %1388 = vmatpush2.bf16.msra.mxu0 0
        %1389 = vmatprep.subr.bf16.mxu0 0
        %1390 = vmatpush2.bf16.msra.mxu0 0
        %1391 = vmatprep.subr.bf16.mxu0 0
        %1392 = vmatpush2.bf16.msra.mxu0 0
        %1393 = vmatprep.mubr.bf16.mxu0 0
        %1394 = vmatmul.mubr.bf16.gmra.mxu0 %v1356
        %v1395 = vpop.f32.mrf.mxu0
        %v1396 = vadd.f32 0.0, %v1395
        %v1397 = vpop.f32.mrf.mxu0
        %v1398 = vpop.f32.mrf.mxu0
        %v1399 = vpop.f32.mrf.mxu0
        %1400 = vdwg.mxu0
        %1401 = vrot.lane.b32.xlu0 %v672, 104
        %v1402 = vpop.permute.xlu0 %1401
        %1403 = vrot.lane.b32.xlu0 %v739, 104
        %v1404 = vpop.permute.xlu0 %1403
        %v1406 = vsel %vm740, %v1402, 0
        %v1409 = vsel %vm740, %v1404, 0
        %1411 = vmatprep.subr.bf16.mxu0 0
        %1412 = vmatpush1.bf16.xpose.msra.mxu0 0
        %1413 = vmatprep.subr.bf16.mxu0 0
        %1414 = vmatpush1.bf16.xpose.msra.mxu0 0
        %1415 = vmatprep.subr.bf16.mxu0 0
        %1416 = vmatpush1.bf16.xpose.msra.mxu0 0
        %1417 = vmatprep.subr.bf16.mxu0 0
        %1418 = vmatpush1.bf16.xpose.msra.mxu0 0
        %1419 = vmatprep.subr.bf16.mxu0 0
        %1420 = vmatpush1.bf16.xpose.msra.mxu0 0
        %1421 = vmatprep.subr.bf16.mxu0 0
        %1422 = vmatpush1.bf16.xpose.msra.mxu0 0
        %1423 = vmatprep.subr.bf16.mxu0 0
        %1424 = vmatpush1.bf16.xpose.msra.mxu0 0
        %1425 = vmatprep.subr.bf16.mxu0 0
        %1426 = vmatpush1.bf16.xpose.msra.mxu0 %v1409
        %1427 = vmatprep.subr.bf16.mxu0 0
        %1428 = vmatpush2.bf16.xpose.msra.mxu0 0
        %1429 = vmatprep.subr.bf16.mxu0 0
        %1430 = vmatpush2.bf16.xpose.msra.mxu0 0
        %1431 = vmatprep.subr.bf16.mxu0 0
        %1432 = vmatpush2.bf16.xpose.msra.mxu0 0
        %1433 = vmatprep.subr.bf16.mxu0 0
        %1434 = vmatpush2.bf16.xpose.msra.mxu0 0
        %1435 = vmatprep.subr.bf16.mxu0 0
        %1436 = vmatpush2.bf16.xpose.msra.mxu0 0
        %1437 = vmatprep.subr.bf16.mxu0 0
        %1438 = vmatpush2.bf16.xpose.msra.mxu0 0
        %1439 = vmatprep.subr.bf16.mxu0 0
        %1440 = vmatpush2.bf16.xpose.msra.mxu0 0
        %1441 = vmatprep.subr.bf16.mxu0 0
        %1442 = vmatpush2.bf16.xpose.msra.mxu0 0
        %1443 = vmatprep.mubr.bf16.mxu0 0
        %1444 = vmatmul.mubr.bf16.gmra.mxu0 %v1406
        %v1445 = vpop.f32.mrf.mxu0
        %v1446 = vadd.f32 0.0, %v1445
        %v1447 = vpop.f32.mrf.mxu0
        %v1448 = vpop.f32.mrf.mxu0
        %v1449 = vpop.f32.mrf.mxu0
        %1450 = vdwg.mxu0
        %v1451 = vsel %vm787, %v1446, -inf
        %1452 = vmax.xlane.f32.xlu0 %v1451
        %v1453 = vpop.xlane.xlu0 %1452
        %v1454 = vsub.f32 %v1446, %v1453
        %v1455 = vmul.f32 %v1454, 1.442695
        %v1456 = vpow.pop %v1455
        %v1457 = vsel %vm787, %v1456, 0.0
        %1458 = vadd.xlane.f32.xlu0 %v1457
        %v1459 = vpop.xlane.xlu0 %1458
        %v1460 = vrcp.pop %v1459
        %v1461 = vmul.f32 %v1456, %v1460
        %v1462 = vpack.c.bf16 %v1461, %v1461
        %1463 = vrot.lane.b32.xlu0 %v739, 72
        %v1464 = vpop.permute.xlu0 %1463
        %v1466 = vsel %vm787, %v1462, 0
        %v1469 = vsel %vm806, %v1464, 0
        %1471 = vmatprep.subr.bf16.mxu0 0
        %1472 = vmatpush1.bf16.msra.mxu0 0
        %1473 = vmatprep.subr.bf16.mxu0 0
        %1474 = vmatpush1.bf16.msra.mxu0 0
        %1475 = vmatprep.subr.bf16.mxu0 0
        %1476 = vmatpush1.bf16.msra.mxu0 0
        %1477 = vmatprep.subr.bf16.mxu0 0
        %1478 = vmatpush1.bf16.msra.mxu0 0
        %1479 = vmatprep.subr.bf16.mxu0 0
        %1480 = vmatpush1.bf16.msra.mxu0 0
        %1481 = vmatprep.subr.bf16.mxu0 0
        %1482 = vmatpush1.bf16.msra.mxu0 0
        %1483 = vmatprep.subr.bf16.mxu0 0
        %1484 = vmatpush1.bf16.msra.mxu0 0
        %1485 = vmatprep.subr.bf16.mxu0 0
        %1486 = vmatpush1.bf16.msra.mxu0 %v1469
        %1487 = vmatprep.subr.bf16.mxu0 0
        %1488 = vmatpush2.bf16.msra.mxu0 0
        %1489 = vmatprep.subr.bf16.mxu0 0
        %1490 = vmatpush2.bf16.msra.mxu0 0
        %1491 = vmatprep.subr.bf16.mxu0 0
        %1492 = vmatpush2.bf16.msra.mxu0 0
        %1493 = vmatprep.subr.bf16.mxu0 0
        %1494 = vmatpush2.bf16.msra.mxu0 0
        %1495 = vmatprep.subr.bf16.mxu0 0
        %1496 = vmatpush2.bf16.msra.mxu0 0
        %1497 = vmatprep.subr.bf16.mxu0 0
        %1498 = vmatpush2.bf16.msra.mxu0 0
        %1499 = vmatprep.subr.bf16.mxu0 0
        %1500 = vmatpush2.bf16.msra.mxu0 0
        %1501 = vmatprep.subr.bf16.mxu0 0
        %1502 = vmatpush2.bf16.msra.mxu0 0
        %1503 = vmatprep.mubr.bf16.mxu0 0
        %1504 = vmatmul.mubr.bf16.gmra.mxu0 %v1466
        %v1505 = vpop.f32.mrf.mxu0
        %v1506 = vadd.f32 0.0, %v1505
        %v1507 = vpop.f32.mrf.mxu0
        %v1508 = vpop.f32.mrf.mxu0
        %v1509 = vpop.f32.mrf.mxu0
        %1510 = vdwg.mxu0
        %1511 = vrot.lane.b32.xlu0 %v672, 100
        %v1512 = vpop.permute.xlu0 %1511
        %1513 = vrot.lane.b32.xlu0 %v739, 100
        %v1514 = vpop.permute.xlu0 %1513
        %v1516 = vsel %vm740, %v1512, 0
        %v1519 = vsel %vm740, %v1514, 0
        %1521 = vmatprep.subr.bf16.mxu0 0
        %1522 = vmatpush1.bf16.xpose.msra.mxu0 0
        %1523 = vmatprep.subr.bf16.mxu0 0
        %1524 = vmatpush1.bf16.xpose.msra.mxu0 0
        %1525 = vmatprep.subr.bf16.mxu0 0
        %1526 = vmatpush1.bf16.xpose.msra.mxu0 0
        %1527 = vmatprep.subr.bf16.mxu0 0
        %1528 = vmatpush1.bf16.xpose.msra.mxu0 0
        %1529 = vmatprep.subr.bf16.mxu0 0
        %1530 = vmatpush1.bf16.xpose.msra.mxu0 0
        %1531 = vmatprep.subr.bf16.mxu0 0
        %1532 = vmatpush1.bf16.xpose.msra.mxu0 0
        %1533 = vmatprep.subr.bf16.mxu0 0
        %1534 = vmatpush1.bf16.xpose.msra.mxu0 0
        %1535 = vmatprep.subr.bf16.mxu0 0
        %1536 = vmatpush1.bf16.xpose.msra.mxu0 %v1519
        %1537 = vmatprep.subr.bf16.mxu0 0
        %1538 = vmatpush2.bf16.xpose.msra.mxu0 0
        %1539 = vmatprep.subr.bf16.mxu0 0
        %1540 = vmatpush2.bf16.xpose.msra.mxu0 0
        %1541 = vmatprep.subr.bf16.mxu0 0
        %1542 = vmatpush2.bf16.xpose.msra.mxu0 0
        %1543 = vmatprep.subr.bf16.mxu0 0
        %1544 = vmatpush2.bf16.xpose.msra.mxu0 0
        %1545 = vmatprep.subr.bf16.mxu0 0
        %1546 = vmatpush2.bf16.xpose.msra.mxu0 0
        %1547 = vmatprep.subr.bf16.mxu0 0
        %1548 = vmatpush2.bf16.xpose.msra.mxu0 0
        %1549 = vmatprep.subr.bf16.mxu0 0
        %1550 = vmatpush2.bf16.xpose.msra.mxu0 0
        %1551 = vmatprep.subr.bf16.mxu0 0
        %1552 = vmatpush2.bf16.xpose.msra.mxu0 0
        %1553 = vmatprep.mubr.bf16.mxu0 0
        %1554 = vmatmul.mubr.bf16.gmra.mxu0 %v1516
        %v1555 = vpop.f32.mrf.mxu0
        %v1556 = vadd.f32 0.0, %v1555
        %v1557 = vpop.f32.mrf.mxu0
        %v1558 = vpop.f32.mrf.mxu0
        %v1559 = vpop.f32.mrf.mxu0
        %1560 = vdwg.mxu0
        %v1561 = vsel %vm787, %v1556, -inf
        %1562 = vmax.xlane.f32.xlu0 %v1561
        %v1563 = vpop.xlane.xlu0 %1562
        %v1564 = vsub.f32 %v1556, %v1563
        %v1565 = vmul.f32 %v1564, 1.442695
        %v1566 = vpow.pop %v1565
        %v1567 = vsel %vm787, %v1566, 0.0
        %1568 = vadd.xlane.f32.xlu0 %v1567
        %v1569 = vpop.xlane.xlu0 %1568
        %v1570 = vrcp.pop %v1569
        %v1571 = vmul.f32 %v1566, %v1570
        %v1572 = vpack.c.bf16 %v1571, %v1571
        %1573 = vrot.lane.b32.xlu0 %v739, 68
        %v1574 = vpop.permute.xlu0 %1573
        %v1576 = vsel %vm787, %v1572, 0
        %v1579 = vsel %vm806, %v1574, 0
        %1581 = vmatprep.subr.bf16.mxu0 0
        %1582 = vmatpush1.bf16.msra.mxu0 0
        %1583 = vmatprep.subr.bf16.mxu0 0
        %1584 = vmatpush1.bf16.msra.mxu0 0
        %1585 = vmatprep.subr.bf16.mxu0 0
        %1586 = vmatpush1.bf16.msra.mxu0 0
        %1587 = vmatprep.subr.bf16.mxu0 0
        %1588 = vmatpush1.bf16.msra.mxu0 0
        %1589 = vmatprep.subr.bf16.mxu0 0
        %1590 = vmatpush1.bf16.msra.mxu0 0
        %1591 = vmatprep.subr.bf16.mxu0 0
        %1592 = vmatpush1.bf16.msra.mxu0 0
        %1593 = vmatprep.subr.bf16.mxu0 0
        %1594 = vmatpush1.bf16.msra.mxu0 0
        %1595 = vmatprep.subr.bf16.mxu0 0
        %1596 = vmatpush1.bf16.msra.mxu0 %v1579
        %1597 = vmatprep.subr.bf16.mxu0 0
        %1598 = vmatpush2.bf16.msra.mxu0 0
        %1599 = vmatprep.subr.bf16.mxu0 0
        %1600 = vmatpush2.bf16.msra.mxu0 0
        %1601 = vmatprep.subr.bf16.mxu0 0
        %1602 = vmatpush2.bf16.msra.mxu0 0
        %1603 = vmatprep.subr.bf16.mxu0 0
        %1604 = vmatpush2.bf16.msra.mxu0 0
        %1605 = vmatprep.subr.bf16.mxu0 0
        %1606 = vmatpush2.bf16.msra.mxu0 0
        %1607 = vmatprep.subr.bf16.mxu0 0
        %1608 = vmatpush2.bf16.msra.mxu0 0
        %1609 = vmatprep.subr.bf16.mxu0 0
        %1610 = vmatpush2.bf16.msra.mxu0 0
        %1611 = vmatprep.subr.bf16.mxu0 0
        %1612 = vmatpush2.bf16.msra.mxu0 0
        %1613 = vmatprep.mubr.bf16.mxu0 0
        %1614 = vmatmul.mubr.bf16.gmra.mxu0 %v1576
        %v1615 = vpop.f32.mrf.mxu0
        %v1616 = vadd.f32 0.0, %v1615
        %v1617 = vpop.f32.mrf.mxu0
        %v1618 = vpop.f32.mrf.mxu0
        %v1619 = vpop.f32.mrf.mxu0
        %1620 = vdwg.mxu0
        %1622 = vrot.lane.b32.xlu0 %v956, 4
        %v1623 = vpop.permute.xlu0 %1622
        %1626 = vrot.lane.b32.xlu0 %v1066, 8
        %v1627 = vpop.permute.xlu0 %1626
        %1630 = vrot.lane.b32.xlu0 %v1176, 12
        %v1631 = vpop.permute.xlu0 %1630
        %1634 = vrot.lane.b32.xlu0 %v1286, 16
        %v1635 = vpop.permute.xlu0 %1634
        %1638 = vrot.lane.b32.xlu0 %v1396, 20
        %v1639 = vpop.permute.xlu0 %1638
        %1642 = vrot.lane.b32.xlu0 %v1506, 24
        %v1643 = vpop.permute.xlu0 %1642
        %1646 = vrot.lane.b32.xlu0 %v1616, 28
        %v1647 = vpop.permute.xlu0 %1646
        %v1649 = vsel %vm740, %v845, %v1623
        %v1650 = vsel %vm787, %v1649, %v1627
        %vm1651 = vcmask 97280
        %v1652 = vsel %vm1651, %v1650, %v1631
        %vm1653 = vcmask 130048
        %v1654 = vsel %vm1653, %v1652, %v1635
        %vm1655 = vcmask 162816
        %v1656 = vsel %vm1655, %v1654, %v1639
        %vm1657 = vcmask 195584
        %v1658 = vsel %vm1657, %v1656, %v1643
        %vm1659 = vcmask 228352
        %v1660 = vsel %vm1659, %v1658, %v1647
        %v1661 = vpack.c.bf16 %v1660, %v1660
        %v1662 = vld [vmem:[#allocation8] sm:$0xf]
        %v1663 = vld [vmem:[#allocation8 + $0x4] sm:$0xf]
        %v1664 = vld [vmem:[#allocation8 + $0x8] sm:$0xf]
        %v1665 = vld [vmem:[#allocation8 + $0xc] sm:$0xf]
        %v1666 = vld [vmem:[%s8] sm:$0x1]
        %v1668 = vlaneseq
        %v1669 = vshrl.u32 %v1668, 7
        %v1670 = vsub.s32 0, %v1669
        %v1671 = vrot.slane %v1666, %v1670
        %v1677 = vunpack.c.l.b16 %v1662
        %v1678 = vunpack.c.l.b16 %v1663
        %v1679 = vunpack.c.l.b16 %v1664
        %v1680 = vunpack.c.l.b16 %v1665
        %v1681 = vpack.c.b16 %v1678, %v1677
        %v1682 = vpack.c.b16 %v1680, %v1679
        %v1686 = vsel %vm628, %v1661, 0
        %1688 = vmatprep.subr.bf16.mxu0 0
        %1689 = vmatpush1.bf16.msra.mxu0 0
        %1690 = vmatprep.subr.bf16.mxu0 0
        %1691 = vmatpush1.bf16.msra.mxu0 0
        %1692 = vmatprep.subr.bf16.mxu0 0
        %1693 = vmatpush1.bf16.msra.mxu0 0
        %1694 = vmatprep.subr.bf16.mxu0 0
        %1695 = vmatpush1.bf16.msra.mxu0 0
        %1696 = vmatprep.subr.bf16.mxu0 0
        %1697 = vmatpush1.bf16.msra.mxu0 0
        %1698 = vmatprep.subr.bf16.mxu0 0
        %1699 = vmatpush1.bf16.msra.mxu0 0
        %1700 = vmatprep.subr.bf16.mxu0 0
        %1701 = vmatpush1.bf16.msra.mxu0 %v1682
        %1702 = vmatprep.subr.bf16.mxu0 0
        %1703 = vmatpush1.bf16.msra.mxu0 %v1681
        %1704 = vmatprep.subr.bf16.mxu0 0
        %1705 = vmatpush2.bf16.msra.mxu0 0
        %1706 = vmatprep.subr.bf16.mxu0 0
        %1707 = vmatpush2.bf16.msra.mxu0 0
        %1708 = vmatprep.subr.bf16.mxu0 0
        %1709 = vmatpush2.bf16.msra.mxu0 0
        %1710 = vmatprep.subr.bf16.mxu0 0
        %1711 = vmatpush2.bf16.msra.mxu0 0
        %1712 = vmatprep.subr.bf16.mxu0 0
        %1713 = vmatpush2.bf16.msra.mxu0 0
        %1714 = vmatprep.subr.bf16.mxu0 0
        %1715 = vmatpush2.bf16.msra.mxu0 0
        %1716 = vmatprep.subr.bf16.mxu0 0
        %1717 = vmatpush2.bf16.msra.mxu0 0
        %1718 = vmatprep.subr.bf16.mxu0 0
        %1719 = vmatpush2.bf16.msra.mxu0 0
        %1720 = vmatprep.mubr.bf16.mxu0 0
        %1721 = vmatmul.mubr.bf16.gmra.mxu0 %v1686
        %v1722 = vpop.f32.mrf.mxu0
        %v1723 = vadd.f32 %v1671, %v1722
        %v1724 = vpop.f32.mrf.mxu0
        %v1725 = vpop.f32.mrf.mxu0
        %v1726 = vpop.f32.mrf.mxu0
        %1727 = vdwg.mxu0
        %v1728 = vmul.f32 %v1723, 0.5
        %v1729 = vmul.f32 %v1723, 0.044715
        %v1730 = vmul.f32 %v1729, %v1723
        %v1731 = vmul.f32 %v1730, %v1723
        %v1732 = vadd.f32 %v1723, %v1731
        %v1733 = vmul.f32 %v1732, 0.7978846
        %v1734 = vtanh.pop %v1733
        %v1735 = vadd.f32 %v1734, 1.0
        %v1736 = vmul.f32 %v1728, %v1735
        %v1737 = vstv %s596
        %v1738 = vmul.f32 %v1737, %v1736
        %v1739 = vadd.f32 %v599, %v1738
        %v1740 = vpack.c.bf16 %v1739, %v1739
        %v1741 = vld [vmem:[#allocation2] sm:$0xf]
        %v1742 = vld [vmem:[#allocation2 + $0x4] sm:$0xf]
        %v1743 = vld [vmem:[#allocation2 + $0x8] sm:$0xf]
        %v1744 = vld [vmem:[#allocation2 + $0xc] sm:$0xf]
        %v1745 = vld [vmem:[%s4] sm:$0x1]
        %v1747 = vlaneseq
        %v1748 = vshrl.u32 %v1747, 7
        %v1749 = vsub.s32 0, %v1748
        %v1750 = vrot.slane %v1745, %v1749
        %v1756 = vunpack.c.l.b16 %v1741
        %v1757 = vunpack.c.l.b16 %v1742
        %v1758 = vunpack.c.l.b16 %v1743
        %v1759 = vunpack.c.l.b16 %v1744
        %v1760 = vpack.c.b16 %v1757, %v1756
        %v1761 = vpack.c.b16 %v1759, %v1758
        %v1765 = vsel %vm628, %v1740, 0
        %1767 = vmatprep.subr.bf16.mxu0 0
        %1768 = vmatpush1.bf16.msra.mxu0 0
        %1769 = vmatprep.subr.bf16.mxu0 0
        %1770 = vmatpush1.bf16.msra.mxu0 0
        %1771 = vmatprep.subr.bf16.mxu0 0
        %1772 = vmatpush1.bf16.msra.mxu0 0
        %1773 = vmatprep.subr.bf16.mxu0 0
        %1774 = vmatpush1.bf16.msra.mxu0 0
        %1775 = vmatprep.subr.bf16.mxu0 0
        %1776 = vmatpush1.bf16.msra.mxu0 0
        %1777 = vmatprep.subr.bf16.mxu0 0
        %1778 = vmatpush1.bf16.msra.mxu0 0
        %1779 = vmatprep.subr.bf16.mxu0 0
        %1780 = vmatpush1.bf16.msra.mxu0 %v1761
        %1781 = vmatprep.subr.bf16.mxu0 0
        %1782 = vmatpush1.bf16.msra.mxu0 %v1760
        %1783 = vmatprep.subr.bf16.mxu0 0
        %1784 = vmatpush2.bf16.msra.mxu0 0
        %1785 = vmatprep.subr.bf16.mxu0 0
        %1786 = vmatpush2.bf16.msra.mxu0 0
        %1787 = vmatprep.subr.bf16.mxu0 0
        %1788 = vmatpush2.bf16.msra.mxu0 0
        %1789 = vmatprep.subr.bf16.mxu0 0
        %1790 = vmatpush2.bf16.msra.mxu0 0
        %1791 = vmatprep.subr.bf16.mxu0 0
        %1792 = vmatpush2.bf16.msra.mxu0 0
        %1793 = vmatprep.subr.bf16.mxu0 0
        %1794 = vmatpush2.bf16.msra.mxu0 0
        %1795 = vmatprep.subr.bf16.mxu0 0
        %1796 = vmatpush2.bf16.msra.mxu0 0
        %1797 = vmatprep.subr.bf16.mxu0 0
        %1798 = vmatpush2.bf16.msra.mxu0 0
        %1799 = vmatprep.mubr.bf16.mxu0 0
        %1800 = vmatmul.mubr.bf16.gmra.mxu0 %v1765
        %v1801 = vpop.f32.mrf.mxu0
        %v1802 = vadd.f32 %v1750, %v1801
        %v1803 = vpop.f32.mrf.mxu0
        %v1804 = vpop.f32.mrf.mxu0
        %v1805 = vpop.f32.mrf.mxu0
        %1806 = vdwg.mxu0
        %v1807 = vpack.c.bf16 %v1802, %v1802
        %v1808 = vld [vmem:[#allocation6] sm:$0xf]
        %v1809 = vld [vmem:[#allocation6 + $0x4] sm:$0xf]
        %v1810 = vld [vmem:[#allocation6 + $0x8] sm:$0xf]
        %v1811 = vld [vmem:[#allocation6 + $0xc] sm:$0xf]
        %v1812 = vld [vmem:[%s6] sm:$0x1]
        %v1814 = vlaneseq
        %v1815 = vshrl.u32 %v1814, 7
        %v1816 = vsub.s32 0, %v1815
        %v1817 = vrot.slane %v1812, %v1816
        %v1823 = vunpack.c.l.b16 %v1808
        %v1824 = vunpack.c.l.b16 %v1809
        %v1825 = vunpack.c.l.b16 %v1810
        %v1826 = vunpack.c.l.b16 %v1811
        %v1827 = vpack.c.b16 %v1824, %v1823
        %v1828 = vpack.c.b16 %v1826, %v1825
        %v1832 = vsel %vm628, %v603, 0
        %1834 = vmatprep.subr.bf16.mxu0 0
        %1835 = vmatpush1.bf16.msra.mxu0 0
        %1836 = vmatprep.subr.bf16.mxu0 0
        %1837 = vmatpush1.bf16.msra.mxu0 0
        %1838 = vmatprep.subr.bf16.mxu0 0
        %1839 = vmatpush1.bf16.msra.mxu0 0
        %1840 = vmatprep.subr.bf16.mxu0 0
        %1841 = vmatpush1.bf16.msra.mxu0 0
        %1842 = vmatprep.subr.bf16.mxu0 0
        %1843 = vmatpush1.bf16.msra.mxu0 0
        %1844 = vmatprep.subr.bf16.mxu0 0
        %1845 = vmatpush1.bf16.msra.mxu0 0
        %1846 = vmatprep.subr.bf16.mxu0 0
        %1847 = vmatpush1.bf16.msra.mxu0 %v1828
        %1848 = vmatprep.subr.bf16.mxu0 0
        %1849 = vmatpush1.bf16.msra.mxu0 %v1827
        %1850 = vmatprep.subr.bf16.mxu0 0
        %1851 = vmatpush2.bf16.msra.mxu0 0
        %1852 = vmatprep.subr.bf16.mxu0 0
        %1853 = vmatpush2.bf16.msra.mxu0 0
        %1854 = vmatprep.subr.bf16.mxu0 0
        %1855 = vmatpush2.bf16.msra.mxu0 0
        %1856 = vmatprep.subr.bf16.mxu0 0
        %1857 = vmatpush2.bf16.msra.mxu0 0
        %1858 = vmatprep.subr.bf16.mxu0 0
        %1859 = vmatpush2.bf16.msra.mxu0 0
        %1860 = vmatprep.subr.bf16.mxu0 0
        %1861 = vmatpush2.bf16.msra.mxu0 0
        %1862 = vmatprep.subr.bf16.mxu0 0
        %1863 = vmatpush2.bf16.msra.mxu0 0
        %1864 = vmatprep.subr.bf16.mxu0 0
        %1865 = vmatpush2.bf16.msra.mxu0 0
        %1866 = vmatprep.mubr.bf16.mxu0 0
        %1867 = vmatmul.mubr.bf16.gmra.mxu0 %v1832
        %v1868 = vpop.f32.mrf.mxu0
        %v1869 = vadd.f32 %v1817, %v1868
        %v1870 = vpop.f32.mrf.mxu0
        %v1871 = vpop.f32.mrf.mxu0
        %v1872 = vpop.f32.mrf.mxu0
        %1873 = vdwg.mxu0
        %v1874 = vpack.c.bf16 %v1869, %v1869
        %v1876 = vsel %vm740, %v1807, 0
        %v1879 = vsel %vm740, %v1874, 0
        %1881 = vmatprep.subr.bf16.mxu0 0
        %1882 = vmatpush1.bf16.xpose.msra.mxu0 0
        %1883 = vmatprep.subr.bf16.mxu0 0
        %1884 = vmatpush1.bf16.xpose.msra.mxu0 0
        %1885 = vmatprep.subr.bf16.mxu0 0
        %1886 = vmatpush1.bf16.xpose.msra.mxu0 0
        %1887 = vmatprep.subr.bf16.mxu0 0
        %1888 = vmatpush1.bf16.xpose.msra.mxu0 0
        %1889 = vmatprep.subr.bf16.mxu0 0
        %1890 = vmatpush1.bf16.xpose.msra.mxu0 0
        %1891 = vmatprep.subr.bf16.mxu0 0
        %1892 = vmatpush1.bf16.xpose.msra.mxu0 0
        %1893 = vmatprep.subr.bf16.mxu0 0
        %1894 = vmatpush1.bf16.xpose.msra.mxu0 0
        %1895 = vmatprep.subr.bf16.mxu0 0
        %1896 = vmatpush1.bf16.xpose.msra.mxu0 %v1879
        %1897 = vmatprep.subr.bf16.mxu0 0
        %1898 = vmatpush2.bf16.xpose.msra.mxu0 0
        %1899 = vmatprep.subr.bf16.mxu0 0
        %1900 = vmatpush2.bf16.xpose.msra.mxu0 0
        %1901 = vmatprep.subr.bf16.mxu0 0
        %1902 = vmatpush2.bf16.xpose.msra.mxu0 0
        %1903 = vmatprep.subr.bf16.mxu0 0
        %1904 = vmatpush2.bf16.xpose.msra.mxu0 0
        %1905 = vmatprep.subr.bf16.mxu0 0
        %1906 = vmatpush2.bf16.xpose.msra.mxu0 0
        %1907 = vmatprep.subr.bf16.mxu0 0
        %1908 = vmatpush2.bf16.xpose.msra.mxu0 0
        %1909 = vmatprep.subr.bf16.mxu0 0
        %1910 = vmatpush2.bf16.xpose.msra.mxu0 0
        %1911 = vmatprep.subr.bf16.mxu0 0
        %1912 = vmatpush2.bf16.xpose.msra.mxu0 0
        %1913 = vmatprep.mubr.bf16.mxu0 0
        %1914 = vmatmul.mubr.bf16.gmra.mxu0 %v1876
        %v1915 = vpop.f32.mrf.mxu0
        %v1916 = vadd.f32 0.0, %v1915
        %v1917 = vpop.f32.mrf.mxu0
        %v1918 = vpop.f32.mrf.mxu0
        %v1919 = vpop.f32.mrf.mxu0
        %1920 = vdwg.mxu0
        %v1921 = vsel %vm787, %v1916, -inf
        %1922 = vmax.xlane.f32.xlu0 %v1921
        %v1923 = vpop.xlane.xlu0 %1922
        %v1924 = vsub.f32 %v1916, %v1923
        %v1925 = vmul.f32 %v1924, 1.442695
        %v1926 = vpow.pop %v1925
        %v1927 = vsel %vm787, %v1926, 0.0
        %1928 = vadd.xlane.f32.xlu0 %v1927
        %v1929 = vpop.xlane.xlu0 %1928
        %v1930 = vrcp.pop %v1929
        %v1931 = vmul.f32 %v1926, %v1930
        %v1932 = vpack.c.bf16 %v1931, %v1931
        %1934 = vrot.lane.b32.xlu0 %v1874, 96
        %v1935 = vpop.permute.xlu0 %1934
        %v1937 = vsel %vm787, %v1932, 0
        %v1940 = vsel %vm806, %v1935, 0
        %1942 = vmatprep.subr.bf16.mxu0 0
        %1943 = vmatpush1.bf16.msra.mxu0 0
        %1944 = vmatprep.subr.bf16.mxu0 0
        %1945 = vmatpush1.bf16.msra.mxu0 0
        %1946 = vmatprep.subr.bf16.mxu0 0
        %1947 = vmatpush1.bf16.msra.mxu0 0
        %1948 = vmatprep.subr.bf16.mxu0 0
        %1949 = vmatpush1.bf16.msra.mxu0 0
        %1950 = vmatprep.subr.bf16.mxu0 0
        %1951 = vmatpush1.bf16.msra.mxu0 0
        %1952 = vmatprep.subr.bf16.mxu0 0
        %1953 = vmatpush1.bf16.msra.mxu0 0
        %1954 = vmatprep.subr.bf16.mxu0 0
        %1955 = vmatpush1.bf16.msra.mxu0 0
        %1956 = vmatprep.subr.bf16.mxu0 0
        %1957 = vmatpush1.bf16.msra.mxu0 %v1940
        %1958 = vmatprep.subr.bf16.mxu0 0
        %1959 = vmatpush2.bf16.msra.mxu0 0
        %1960 = vmatprep.subr.bf16.mxu0 0
        %1961 = vmatpush2.bf16.msra.mxu0 0
        %1962 = vmatprep.subr.bf16.mxu0 0
        %1963 = vmatpush2.bf16.msra.mxu0 0
        %1964 = vmatprep.subr.bf16.mxu0 0
        %1965 = vmatpush2.bf16.msra.mxu0 0
        %1966 = vmatprep.subr.bf16.mxu0 0
        %1967 = vmatpush2.bf16.msra.mxu0 0
        %1968 = vmatprep.subr.bf16.mxu0 0
        %1969 = vmatpush2.bf16.msra.mxu0 0
        %1970 = vmatprep.subr.bf16.mxu0 0
        %1971 = vmatpush2.bf16.msra.mxu0 0
        %1972 = vmatprep.subr.bf16.mxu0 0
        %1973 = vmatpush2.bf16.msra.mxu0 0
        %1974 = vmatprep.mubr.bf16.mxu0 0
        %1975 = vmatmul.mubr.bf16.gmra.mxu0 %v1937
        %v1976 = vpop.f32.mrf.mxu0
        %v1977 = vadd.f32 0.0, %v1976
        %v1978 = vpop.f32.mrf.mxu0
        %v1979 = vpop.f32.mrf.mxu0
        %v1980 = vpop.f32.mrf.mxu0
        %1981 = vdwg.mxu0
        %1983 = vrot.lane.b32.xlu0 %v1807, 124
        %v1984 = vpop.permute.xlu0 %1983
        %1985 = vrot.lane.b32.xlu0 %v1874, 124
        %v1986 = vpop.permute.xlu0 %1985
        %v1988 = vsel %vm740, %v1984, 0
        %v1991 = vsel %vm740, %v1986, 0
        %1993 = vmatprep.subr.bf16.mxu0 0
        %1994 = vmatpush1.bf16.xpose.msra.mxu0 0
        %1995 = vmatprep.subr.bf16.mxu0 0
        %1996 = vmatpush1.bf16.xpose.msra.mxu0 0
        %1997 = vmatprep.subr.bf16.mxu0 0
        %1998 = vmatpush1.bf16.xpose.msra.mxu0 0
        %1999 = vmatprep.subr.bf16.mxu0 0
        %2000 = vmatpush1.bf16.xpose.msra.mxu0 0
        %2001 = vmatprep.subr.bf16.mxu0 0
        %2002 = vmatpush1.bf16.xpose.msra.mxu0 0
        %2003 = vmatprep.subr.bf16.mxu0 0
        %2004 = vmatpush1.bf16.xpose.msra.mxu0 0
        %2005 = vmatprep.subr.bf16.mxu0 0
        %2006 = vmatpush1.bf16.xpose.msra.mxu0 0
        %2007 = vmatprep.subr.bf16.mxu0 0
        %2008 = vmatpush1.bf16.xpose.msra.mxu0 %v1991
        %2009 = vmatprep.subr.bf16.mxu0 0
        %2010 = vmatpush2.bf16.xpose.msra.mxu0 0
        %2011 = vmatprep.subr.bf16.mxu0 0
        %2012 = vmatpush2.bf16.xpose.msra.mxu0 0
        %2013 = vmatprep.subr.bf16.mxu0 0
        %2014 = vmatpush2.bf16.xpose.msra.mxu0 0
        %2015 = vmatprep.subr.bf16.mxu0 0
        %2016 = vmatpush2.bf16.xpose.msra.mxu0 0
        %2017 = vmatprep.subr.bf16.mxu0 0
        %2018 = vmatpush2.bf16.xpose.msra.mxu0 0
        %2019 = vmatprep.subr.bf16.mxu0 0
        %2020 = vmatpush2.bf16.xpose.msra.mxu0 0
        %2021 = vmatprep.subr.bf16.mxu0 0
        %2022 = vmatpush2.bf16.xpose.msra.mxu0 0
        %2023 = vmatprep.subr.bf16.mxu0 0
        %2024 = vmatpush2.bf16.xpose.msra.mxu0 0
        %2025 = vmatprep.mubr.bf16.mxu0 0
        %2026 = vmatmul.mubr.bf16.gmra.mxu0 %v1988
        %v2027 = vpop.f32.mrf.mxu0
        %v2028 = vadd.f32 0.0, %v2027
        %v2029 = vpop.f32.mrf.mxu0
        %v2030 = vpop.f32.mrf.mxu0
        %v2031 = vpop.f32.mrf.mxu0
        %2032 = vdwg.mxu0
        %v2033 = vsel %vm787, %v2028, -inf
        %2034 = vmax.xlane.f32.xlu0 %v2033
        %v2035 = vpop.xlane.xlu0 %2034
        %v2036 = vsub.f32 %v2028, %v2035
        %v2037 = vmul.f32 %v2036, 1.442695
        %v2038 = vpow.pop %v2037
        %v2039 = vsel %vm787, %v2038, 0.0
        %2040 = vadd.xlane.f32.xlu0 %v2039
        %v2041 = vpop.xlane.xlu0 %2040
        %v2042 = vrcp.pop %v2041
        %v2043 = vmul.f32 %v2038, %v2042
        %v2044 = vpack.c.bf16 %v2043, %v2043
        %2045 = vrot.lane.b32.xlu0 %v1874, 92
        %v2046 = vpop.permute.xlu0 %2045
        %v2048 = vsel %vm787, %v2044, 0
        %v2051 = vsel %vm806, %v2046, 0
        %2053 = vmatprep.subr.bf16.mxu0 0
        %2054 = vmatpush1.bf16.msra.mxu0 0
        %2055 = vmatprep.subr.bf16.mxu0 0
        %2056 = vmatpush1.bf16.msra.mxu0 0
        %2057 = vmatprep.subr.bf16.mxu0 0
        %2058 = vmatpush1.bf16.msra.mxu0 0
        %2059 = vmatprep.subr.bf16.mxu0 0
        %2060 = vmatpush1.bf16.msra.mxu0 0
        %2061 = vmatprep.subr.bf16.mxu0 0
        %2062 = vmatpush1.bf16.msra.mxu0 0
        %2063 = vmatprep.subr.bf16.mxu0 0
        %2064 = vmatpush1.bf16.msra.mxu0 0
        %2065 = vmatprep.subr.bf16.mxu0 0
        %2066 = vmatpush1.bf16.msra.mxu0 0
        %2067 = vmatprep.subr.bf16.mxu0 0
        %2068 = vmatpush1.bf16.msra.mxu0 %v2051
        %2069 = vmatprep.subr.bf16.mxu0 0
        %2070 = vmatpush2.bf16.msra.mxu0 0
        %2071 = vmatprep.subr.bf16.mxu0 0
        %2072 = vmatpush2.bf16.msra.mxu0 0
        %2073 = vmatprep.subr.bf16.mxu0 0
        %2074 = vmatpush2.bf16.msra.mxu0 0
        %2075 = vmatprep.subr.bf16.mxu0 0
        %2076 = vmatpush2.bf16.msra.mxu0 0
        %2077 = vmatprep.subr.bf16.mxu0 0
        %2078 = vmatpush2.bf16.msra.mxu0 0
        %2079 = vmatprep.subr.bf16.mxu0 0
        %2080 = vmatpush2.bf16.msra.mxu0 0
        %2081 = vmatprep.subr.bf16.mxu0 0
        %2082 = vmatpush2.bf16.msra.mxu0 0
        %2083 = vmatprep.subr.bf16.mxu0 0
        %2084 = vmatpush2.bf16.msra.mxu0 0
        %2085 = vmatprep.mubr.bf16.mxu0 0
        %2086 = vmatmul.mubr.bf16.gmra.mxu0 %v2048
        %v2087 = vpop.f32.mrf.mxu0
        %v2088 = vadd.f32 0.0, %v2087
        %v2089 = vpop.f32.mrf.mxu0
        %v2090 = vpop.f32.mrf.mxu0
        %v2091 = vpop.f32.mrf.mxu0
        %2092 = vdwg.mxu0
        %2093 = vrot.lane.b32.xlu0 %v1807, 120
        %v2094 = vpop.permute.xlu0 %2093
        %2095 = vrot.lane.b32.xlu0 %v1874, 120
        %v2096 = vpop.permute.xlu0 %2095
        %v2098 = vsel %vm740, %v2094, 0
        %v2101 = vsel %vm740, %v2096, 0
        %2103 = vmatprep.subr.bf16.mxu0 0
        %2104 = vmatpush1.bf16.xpose.msra.mxu0 0
        %2105 = vmatprep.subr.bf16.mxu0 0
        %2106 = vmatpush1.bf16.xpose.msra.mxu0 0
        %2107 = vmatprep.subr.bf16.mxu0 0
        %2108 = vmatpush1.bf16.xpose.msra.mxu0 0
        %2109 = vmatprep.subr.bf16.mxu0 0
        %2110 = vmatpush1.bf16.xpose.msra.mxu0 0
        %2111 = vmatprep.subr.bf16.mxu0 0
        %2112 = vmatpush1.bf16.xpose.msra.mxu0 0
        %2113 = vmatprep.subr.bf16.mxu0 0
        %2114 = vmatpush1.bf16.xpose.msra.mxu0 0
        %2115 = vmatprep.subr.bf16.mxu0 0
        %2116 = vmatpush1.bf16.xpose.msra.mxu0 0
        %2117 = vmatprep.subr.bf16.mxu0 0
        %2118 = vmatpush1.bf16.xpose.msra.mxu0 %v2101
        %2119 = vmatprep.subr.bf16.mxu0 0
        %2120 = vmatpush2.bf16.xpose.msra.mxu0 0
        %2121 = vmatprep.subr.bf16.mxu0 0
        %2122 = vmatpush2.bf16.xpose.msra.mxu0 0
        %2123 = vmatprep.subr.bf16.mxu0 0
        %2124 = vmatpush2.bf16.xpose.msra.mxu0 0
        %2125 = vmatprep.subr.bf16.mxu0 0
        %2126 = vmatpush2.bf16.xpose.msra.mxu0 0
        %2127 = vmatprep.subr.bf16.mxu0 0
        %2128 = vmatpush2.bf16.xpose.msra.mxu0 0
        %2129 = vmatprep.subr.bf16.mxu0 0
        %2130 = vmatpush2.bf16.xpose.msra.mxu0 0
        %2131 = vmatprep.subr.bf16.mxu0 0
        %2132 = vmatpush2.bf16.xpose.msra.mxu0 0
        %2133 = vmatprep.subr.bf16.mxu0 0
        %2134 = vmatpush2.bf16.xpose.msra.mxu0 0
        %2135 = vmatprep.mubr.bf16.mxu0 0
        %2136 = vmatmul.mubr.bf16.gmra.mxu0 %v2098
        %v2137 = vpop.f32.mrf.mxu0
        %v2138 = vadd.f32 0.0, %v2137
        %v2139 = vpop.f32.mrf.mxu0
        %v2140 = vpop.f32.mrf.mxu0
        %v2141 = vpop.f32.mrf.mxu0
        %2142 = vdwg.mxu0
        %v2143 = vsel %vm787, %v2138, -inf
        %2144 = vmax.xlane.f32.xlu0 %v2143
        %v2145 = vpop.xlane.xlu0 %2144
        %v2146 = vsub.f32 %v2138, %v2145
        %v2147 = vmul.f32 %v2146, 1.442695
        %v2148 = vpow.pop %v2147
        %v2149 = vsel %vm787, %v2148, 0.0
        %2150 = vadd.xlane.f32.xlu0 %v2149
        %v2151 = vpop.xlane.xlu0 %2150
        %v2152 = vrcp.pop %v2151
        %v2153 = vmul.f32 %v2148, %v2152
        %v2154 = vpack.c.bf16 %v2153, %v2153
        %2155 = vrot.lane.b32.xlu0 %v1874, 88
        %v2156 = vpop.permute.xlu0 %2155
        %v2158 = vsel %vm787, %v2154, 0
        %v2161 = vsel %vm806, %v2156, 0
        %2163 = vmatprep.subr.bf16.mxu0 0
        %2164 = vmatpush1.bf16.msra.mxu0 0
        %2165 = vmatprep.subr.bf16.mxu0 0
        %2166 = vmatpush1.bf16.msra.mxu0 0
        %2167 = vmatprep.subr.bf16.mxu0 0
        %2168 = vmatpush1.bf16.msra.mxu0 0
        %2169 = vmatprep.subr.bf16.mxu0 0
        %2170 = vmatpush1.bf16.msra.mxu0 0
        %2171 = vmatprep.subr.bf16.mxu0 0
        %2172 = vmatpush1.bf16.msra.mxu0 0
        %2173 = vmatprep.subr.bf16.mxu0 0
        %2174 = vmatpush1.bf16.msra.mxu0 0
        %2175 = vmatprep.subr.bf16.mxu0 0
        %2176 = vmatpush1.bf16.msra.mxu0 0
        %2177 = vmatprep.subr.bf16.mxu0 0
        %2178 = vmatpush1.bf16.msra.mxu0 %v2161
        %2179 = vmatprep.subr.bf16.mxu0 0
        %2180 = vmatpush2.bf16.msra.mxu0 0
        %2181 = vmatprep.subr.bf16.mxu0 0
        %2182 = vmatpush2.bf16.msra.mxu0 0
        %2183 = vmatprep.subr.bf16.mxu0 0
        %2184 = vmatpush2.bf16.msra.mxu0 0
        %2185 = vmatprep.subr.bf16.mxu0 0
        %2186 = vmatpush2.bf16.msra.mxu0 0
        %2187 = vmatprep.subr.bf16.mxu0 0
        %2188 = vmatpush2.bf16.msra.mxu0 0
        %2189 = vmatprep.subr.bf16.mxu0 0
        %2190 = vmatpush2.bf16.msra.mxu0 0
        %2191 = vmatprep.subr.bf16.mxu0 0
        %2192 = vmatpush2.bf16.msra.mxu0 0
        %2193 = vmatprep.subr.bf16.mxu0 0
        %2194 = vmatpush2.bf16.msra.mxu0 0
        %2195 = vmatprep.mubr.bf16.mxu0 0
        %2196 = vmatmul.mubr.bf16.gmra.mxu0 %v2158
        %v2197 = vpop.f32.mrf.mxu0
        %v2198 = vadd.f32 0.0, %v2197
        %v2199 = vpop.f32.mrf.mxu0
        %v2200 = vpop.f32.mrf.mxu0
        %v2201 = vpop.f32.mrf.mxu0
        %2202 = vdwg.mxu0
        %2203 = vrot.lane.b32.xlu0 %v1807, 116
        %v2204 = vpop.permute.xlu0 %2203
        %2205 = vrot.lane.b32.xlu0 %v1874, 116
        %v2206 = vpop.permute.xlu0 %2205
        %v2208 = vsel %vm740, %v2204, 0
        %v2211 = vsel %vm740, %v2206, 0
        %2213 = vmatprep.subr.bf16.mxu0 0
        %2214 = vmatpush1.bf16.xpose.msra.mxu0 0
        %2215 = vmatprep.subr.bf16.mxu0 0
        %2216 = vmatpush1.bf16.xpose.msra.mxu0 0
        %2217 = vmatprep.subr.bf16.mxu0 0
        %2218 = vmatpush1.bf16.xpose.msra.mxu0 0
        %2219 = vmatprep.subr.bf16.mxu0 0
        %2220 = vmatpush1.bf16.xpose.msra.mxu0 0
        %2221 = vmatprep.subr.bf16.mxu0 0
        %2222 = vmatpush1.bf16.xpose.msra.mxu0 0
        %2223 = vmatprep.subr.bf16.mxu0 0
        %2224 = vmatpush1.bf16.xpose.msra.mxu0 0
        %2225 = vmatprep.subr.bf16.mxu0 0
        %2226 = vmatpush1.bf16.xpose.msra.mxu0 0
        %2227 = vmatprep.subr.bf16.mxu0 0
        %2228 = vmatpush1.bf16.xpose.msra.mxu0 %v2211
        %2229 = vmatprep.subr.bf16.mxu0 0
        %2230 = vmatpush2.bf16.xpose.msra.mxu0 0
        %2231 = vmatprep.subr.bf16.mxu0 0
        %2232 = vmatpush2.bf16.xpose.msra.mxu0 0
        %2233 = vmatprep.subr.bf16.mxu0 0
        %2234 = vmatpush2.bf16.xpose.msra.mxu0 0
        %2235 = vmatprep.subr.bf16.mxu0 0
        %2236 = vmatpush2.bf16.xpose.msra.mxu0 0
        %2237 = vmatprep.subr.bf16.mxu0 0
        %2238 = vmatpush2.bf16.xpose.msra.mxu0 0
        %2239 = vmatprep.subr.bf16.mxu0 0
        %2240 = vmatpush2.bf16.xpose.msra.mxu0 0
        %2241 = vmatprep.subr.bf16.mxu0 0
        %2242 = vmatpush2.bf16.xpose.msra.mxu0 0
        %2243 = vmatprep.subr.bf16.mxu0 0
        %2244 = vmatpush2.bf16.xpose.msra.mxu0 0
        %2245 = vmatprep.mubr.bf16.mxu0 0
        %2246 = vmatmul.mubr.bf16.gmra.mxu0 %v2208
        %v2247 = vpop.f32.mrf.mxu0
        %v2248 = vadd.f32 0.0, %v2247
        %v2249 = vpop.f32.mrf.mxu0
        %v2250 = vpop.f32.mrf.mxu0
        %v2251 = vpop.f32.mrf.mxu0
        %2252 = vdwg.mxu0
        %v2253 = vsel %vm787, %v2248, -inf
        %2254 = vmax.xlane.f32.xlu0 %v2253
        %v2255 = vpop.xlane.xlu0 %2254
        %v2256 = vsub.f32 %v2248, %v2255
        %v2257 = vmul.f32 %v2256, 1.442695
        %v2258 = vpow.pop %v2257
        %v2259 = vsel %vm787, %v2258, 0.0
        %2260 = vadd.xlane.f32.xlu0 %v2259
        %v2261 = vpop.xlane.xlu0 %2260
        %v2262 = vrcp.pop %v2261
        %v2263 = vmul.f32 %v2258, %v2262
        %v2264 = vpack.c.bf16 %v2263, %v2263
        %2265 = vrot.lane.b32.xlu0 %v1874, 84
        %v2266 = vpop.permute.xlu0 %2265
        %v2268 = vsel %vm787, %v2264, 0
        %v2271 = vsel %vm806, %v2266, 0
        %2273 = vmatprep.subr.bf16.mxu0 0
        %2274 = vmatpush1.bf16.msra.mxu0 0
        %2275 = vmatprep.subr.bf16.mxu0 0
        %2276 = vmatpush1.bf16.msra.mxu0 0
        %2277 = vmatprep.subr.bf16.mxu0 0
        %2278 = vmatpush1.bf16.msra.mxu0 0
        %2279 = vmatprep.subr.bf16.mxu0 0
        %2280 = vmatpush1.bf16.msra.mxu0 0
        %2281 = vmatprep.subr.bf16.mxu0 0
        %2282 = vmatpush1.bf16.msra.mxu0 0
        %2283 = vmatprep.subr.bf16.mxu0 0
        %2284 = vmatpush1.bf16.msra.mxu0 0
        %2285 = vmatprep.subr.bf16.mxu0 0
        %2286 = vmatpush1.bf16.msra.mxu0 0
        %2287 = vmatprep.subr.bf16.mxu0 0
        %2288 = vmatpush1.bf16.msra.mxu0 %v2271
        %2289 = vmatprep.subr.bf16.mxu0 0
        %2290 = vmatpush2.bf16.msra.mxu0 0
        %2291 = vmatprep.subr.bf16.mxu0 0
        %2292 = vmatpush2.bf16.msra.mxu0 0
        %2293 = vmatprep.subr.bf16.mxu0 0
        %2294 = vmatpush2.bf16.msra.mxu0 0
        %2295 = vmatprep.subr.bf16.mxu0 0
        %2296 = vmatpush2.bf16.msra.mxu0 0
        %2297 = vmatprep.subr.bf16.mxu0 0
        %2298 = vmatpush2.bf16.msra.mxu0 0
        %2299 = vmatprep.subr.bf16.mxu0 0
        %2300 = vmatpush2.bf16.msra.mxu0 0
        %2301 = vmatprep.subr.bf16.mxu0 0
        %2302 = vmatpush2.bf16.msra.mxu0 0
        %2303 = vmatprep.subr.bf16.mxu0 0
        %2304 = vmatpush2.bf16.msra.mxu0 0
        %2305 = vmatprep.mubr.bf16.mxu0 0
        %2306 = vmatmul.mubr.bf16.gmra.mxu0 %v2268
        %v2307 = vpop.f32.mrf.mxu0
        %v2308 = vadd.f32 0.0, %v2307
        %v2309 = vpop.f32.mrf.mxu0
        %v2310 = vpop.f32.mrf.mxu0
        %v2311 = vpop.f32.mrf.mxu0
        %2312 = vdwg.mxu0
        %2313 = vrot.lane.b32.xlu0 %v1807, 112
        %v2314 = vpop.permute.xlu0 %2313
        %2315 = vrot.lane.b32.xlu0 %v1874, 112
        %v2316 = vpop.permute.xlu0 %2315
        %v2318 = vsel %vm740, %v2314, 0
        %v2321 = vsel %vm740, %v2316, 0
        %2323 = vmatprep.subr.bf16.mxu0 0
        %2324 = vmatpush1.bf16.xpose.msra.mxu0 0
        %2325 = vmatprep.subr.bf16.mxu0 0
        %2326 = vmatpush1.bf16.xpose.msra.mxu0 0
        %2327 = vmatprep.subr.bf16.mxu0 0
        %2328 = vmatpush1.bf16.xpose.msra.mxu0 0
        %2329 = vmatprep.subr.bf16.mxu0 0
        %2330 = vmatpush1.bf16.xpose.msra.mxu0 0
        %2331 = vmatprep.subr.bf16.mxu0 0
        %2332 = vmatpush1.bf16.xpose.msra.mxu0 0
        %2333 = vmatprep.subr.bf16.mxu0 0
        %2334 = vmatpush1.bf16.xpose.msra.mxu0 0
        %2335 = vmatprep.subr.bf16.mxu0 0
        %2336 = vmatpush1.bf16.xpose.msra.mxu0 0
        %2337 = vmatprep.subr.bf16.mxu0 0
        %2338 = vmatpush1.bf16.xpose.msra.mxu0 %v2321
        %2339 = vmatprep.subr.bf16.mxu0 0
        %2340 = vmatpush2.bf16.xpose.msra.mxu0 0
        %2341 = vmatprep.subr.bf16.mxu0 0
        %2342 = vmatpush2.bf16.xpose.msra.mxu0 0
        %2343 = vmatprep.subr.bf16.mxu0 0
        %2344 = vmatpush2.bf16.xpose.msra.mxu0 0
        %2345 = vmatprep.subr.bf16.mxu0 0
        %2346 = vmatpush2.bf16.xpose.msra.mxu0 0
        %2347 = vmatprep.subr.bf16.mxu0 0
        %2348 = vmatpush2.bf16.xpose.msra.mxu0 0
        %2349 = vmatprep.subr.bf16.mxu0 0
        %2350 = vmatpush2.bf16.xpose.msra.mxu0 0
        %2351 = vmatprep.subr.bf16.mxu0 0
        %2352 = vmatpush2.bf16.xpose.msra.mxu0 0
        %2353 = vmatprep.subr.bf16.mxu0 0
        %2354 = vmatpush2.bf16.xpose.msra.mxu0 0
        %2355 = vmatprep.mubr.bf16.mxu0 0
        %2356 = vmatmul.mubr.bf16.gmra.mxu0 %v2318
        %v2357 = vpop.f32.mrf.mxu0
        %v2358 = vadd.f32 0.0, %v2357
        %v2359 = vpop.f32.mrf.mxu0
        %v2360 = vpop.f32.mrf.mxu0
        %v2361 = vpop.f32.mrf.mxu0
        %2362 = vdwg.mxu0
        %v2363 = vsel %vm787, %v2358, -inf
        %2364 = vmax.xlane.f32.xlu0 %v2363
        %v2365 = vpop.xlane.xlu0 %2364
        %v2366 = vsub.f32 %v2358, %v2365
        %v2367 = vmul.f32 %v2366, 1.442695
        %v2368 = vpow.pop %v2367
        %v2369 = vsel %vm787, %v2368, 0.0
        %2370 = vadd.xlane.f32.xlu0 %v2369
        %v2371 = vpop.xlane.xlu0 %2370
        %v2372 = vrcp.pop %v2371
        %v2373 = vmul.f32 %v2368, %v2372
        %v2374 = vpack.c.bf16 %v2373, %v2373
        %2375 = vrot.lane.b32.xlu0 %v1874, 80
        %v2376 = vpop.permute.xlu0 %2375
        %v2378 = vsel %vm787, %v2374, 0
        %v2381 = vsel %vm806, %v2376, 0
        %2383 = vmatprep.subr.bf16.mxu0 0
        %2384 = vmatpush1.bf16.msra.mxu0 0
        %2385 = vmatprep.subr.bf16.mxu0 0
        %2386 = vmatpush1.bf16.msra.mxu0 0
        %2387 = vmatprep.subr.bf16.mxu0 0
        %2388 = vmatpush1.bf16.msra.mxu0 0
        %2389 = vmatprep.subr.bf16.mxu0 0
        %2390 = vmatpush1.bf16.msra.mxu0 0
        %2391 = vmatprep.subr.bf16.mxu0 0
        %2392 = vmatpush1.bf16.msra.mxu0 0
        %2393 = vmatprep.subr.bf16.mxu0 0
        %2394 = vmatpush1.bf16.msra.mxu0 0
        %2395 = vmatprep.subr.bf16.mxu0 0
        %2396 = vmatpush1.bf16.msra.mxu0 0
        %2397 = vmatprep.subr.bf16.mxu0 0
        %2398 = vmatpush1.bf16.msra.mxu0 %v2381
        %2399 = vmatprep.subr.bf16.mxu0 0
        %2400 = vmatpush2.bf16.msra.mxu0 0
        %2401 = vmatprep.subr.bf16.mxu0 0
        %2402 = vmatpush2.bf16.msra.mxu0 0
        %2403 = vmatprep.subr.bf16.mxu0 0
        %2404 = vmatpush2.bf16.msra.mxu0 0
        %2405 = vmatprep.subr.bf16.mxu0 0
        %2406 = vmatpush2.bf16.msra.mxu0 0
        %2407 = vmatprep.subr.bf16.mxu0 0
        %2408 = vmatpush2.bf16.msra.mxu0 0
        %2409 = vmatprep.subr.bf16.mxu0 0
        %2410 = vmatpush2.bf16.msra.mxu0 0
        %2411 = vmatprep.subr.bf16.mxu0 0
        %2412 = vmatpush2.bf16.msra.mxu0 0
        %2413 = vmatprep.subr.bf16.mxu0 0
        %2414 = vmatpush2.bf16.msra.mxu0 0
        %2415 = vmatprep.mubr.bf16.mxu0 0
        %2416 = vmatmul.mubr.bf16.gmra.mxu0 %v2378
        %v2417 = vpop.f32.mrf.mxu0
        %v2418 = vadd.f32 0.0, %v2417
        %v2419 = vpop.f32.mrf.mxu0
        %v2420 = vpop.f32.mrf.mxu0
        %v2421 = vpop.f32.mrf.mxu0
        %2422 = vdwg.mxu0
        %2423 = vrot.lane.b32.xlu0 %v1807, 108
        %v2424 = vpop.permute.xlu0 %2423
        %2425 = vrot.lane.b32.xlu0 %v1874, 108
        %v2426 = vpop.permute.xlu0 %2425
        %v2428 = vsel %vm740, %v2424, 0
        %v2431 = vsel %vm740, %v2426, 0
        %2433 = vmatprep.subr.bf16.mxu0 0
        %2434 = vmatpush1.bf16.xpose.msra.mxu0 0
        %2435 = vmatprep.subr.bf16.mxu0 0
        %2436 = vmatpush1.bf16.xpose.msra.mxu0 0
        %2437 = vmatprep.subr.bf16.mxu0 0
        %2438 = vmatpush1.bf16.xpose.msra.mxu0 0
        %2439 = vmatprep.subr.bf16.mxu0 0
        %2440 = vmatpush1.bf16.xpose.msra.mxu0 0
        %2441 = vmatprep.subr.bf16.mxu0 0
        %2442 = vmatpush1.bf16.xpose.msra.mxu0 0
        %2443 = vmatprep.subr.bf16.mxu0 0
        %2444 = vmatpush1.bf16.xpose.msra.mxu0 0
        %2445 = vmatprep.subr.bf16.mxu0 0
        %2446 = vmatpush1.bf16.xpose.msra.mxu0 0
        %2447 = vmatprep.subr.bf16.mxu0 0
        %2448 = vmatpush1.bf16.xpose.msra.mxu0 %v2431
        %2449 = vmatprep.subr.bf16.mxu0 0
        %2450 = vmatpush2.bf16.xpose.msra.mxu0 0
        %2451 = vmatprep.subr.bf16.mxu0 0
        %2452 = vmatpush2.bf16.xpose.msra.mxu0 0
        %2453 = vmatprep.subr.bf16.mxu0 0
        %2454 = vmatpush2.bf16.xpose.msra.mxu0 0
        %2455 = vmatprep.subr.bf16.mxu0 0
        %2456 = vmatpush2.bf16.xpose.msra.mxu0 0
        %2457 = vmatprep.subr.bf16.mxu0 0
        %2458 = vmatpush2.bf16.xpose.msra.mxu0 0
        %2459 = vmatprep.subr.bf16.mxu0 0
        %2460 = vmatpush2.bf16.xpose.msra.mxu0 0
        %2461 = vmatprep.subr.bf16.mxu0 0
        %2462 = vmatpush2.bf16.xpose.msra.mxu0 0
        %2463 = vmatprep.subr.bf16.mxu0 0
        %2464 = vmatpush2.bf16.xpose.msra.mxu0 0
        %2465 = vmatprep.mubr.bf16.mxu0 0
        %2466 = vmatmul.mubr.bf16.gmra.mxu0 %v2428
        %v2467 = vpop.f32.mrf.mxu0
        %v2468 = vadd.f32 0.0, %v2467
        %v2469 = vpop.f32.mrf.mxu0
        %v2470 = vpop.f32.mrf.mxu0
        %v2471 = vpop.f32.mrf.mxu0
        %2472 = vdwg.mxu0
        %v2473 = vsel %vm787, %v2468, -inf
        %2474 = vmax.xlane.f32.xlu0 %v2473
        %v2475 = vpop.xlane.xlu0 %2474
        %v2476 = vsub.f32 %v2468, %v2475
        %v2477 = vmul.f32 %v2476, 1.442695
        %v2478 = vpow.pop %v2477
        %v2479 = vsel %vm787, %v2478, 0.0
        %2480 = vadd.xlane.f32.xlu0 %v2479
        %v2481 = vpop.xlane.xlu0 %2480
        %v2482 = vrcp.pop %v2481
        %v2483 = vmul.f32 %v2478, %v2482
        %v2484 = vpack.c.bf16 %v2483, %v2483
        %2485 = vrot.lane.b32.xlu0 %v1874, 76
        %v2486 = vpop.permute.xlu0 %2485
        %v2488 = vsel %vm787, %v2484, 0
        %v2491 = vsel %vm806, %v2486, 0
        %2493 = vmatprep.subr.bf16.mxu0 0
        %2494 = vmatpush1.bf16.msra.mxu0 0
        %2495 = vmatprep.subr.bf16.mxu0 0
        %2496 = vmatpush1.bf16.msra.mxu0 0
        %2497 = vmatprep.subr.bf16.mxu0 0
        %2498 = vmatpush1.bf16.msra.mxu0 0
        %2499 = vmatprep.subr.bf16.mxu0 0
        %2500 = vmatpush1.bf16.msra.mxu0 0
        %2501 = vmatprep.subr.bf16.mxu0 0
        %2502 = vmatpush1.bf16.msra.mxu0 0
        %2503 = vmatprep.subr.bf16.mxu0 0
        %2504 = vmatpush1.bf16.msra.mxu0 0
        %2505 = vmatprep.subr.bf16.mxu0 0
        %2506 = vmatpush1.bf16.msra.mxu0 0
        %2507 = vmatprep.subr.bf16.mxu0 0
        %2508 = vmatpush1.bf16.msra.mxu0 %v2491
        %2509 = vmatprep.subr.bf16.mxu0 0
        %2510 = vmatpush2.bf16.msra.mxu0 0
        %2511 = vmatprep.subr.bf16.mxu0 0
        %2512 = vmatpush2.bf16.msra.mxu0 0
        %2513 = vmatprep.subr.bf16.mxu0 0
        %2514 = vmatpush2.bf16.msra.mxu0 0
        %2515 = vmatprep.subr.bf16.mxu0 0
        %2516 = vmatpush2.bf16.msra.mxu0 0
        %2517 = vmatprep.subr.bf16.mxu0 0
        %2518 = vmatpush2.bf16.msra.mxu0 0
        %2519 = vmatprep.subr.bf16.mxu0 0
        %2520 = vmatpush2.bf16.msra.mxu0 0
        %2521 = vmatprep.subr.bf16.mxu0 0
        %2522 = vmatpush2.bf16.msra.mxu0 0
        %2523 = vmatprep.subr.bf16.mxu0 0
        %2524 = vmatpush2.bf16.msra.mxu0 0
        %2525 = vmatprep.mubr.bf16.mxu0 0
        %2526 = vmatmul.mubr.bf16.gmra.mxu0 %v2488
        %v2527 = vpop.f32.mrf.mxu0
        %v2528 = vadd.f32 0.0, %v2527
        %v2529 = vpop.f32.mrf.mxu0
        %v2530 = vpop.f32.mrf.mxu0
        %v2531 = vpop.f32.mrf.mxu0
        %2532 = vdwg.mxu0
        %2533 = vrot.lane.b32.xlu0 %v1807, 104
        %v2534 = vpop.permute.xlu0 %2533
        %2535 = vrot.lane.b32.xlu0 %v1874, 104
        %v2536 = vpop.permute.xlu0 %2535
        %v2538 = vsel %vm740, %v2534, 0
        %v2541 = vsel %vm740, %v2536, 0
        %2543 = vmatprep.subr.bf16.mxu0 0
        %2544 = vmatpush1.bf16.xpose.msra.mxu0 0
        %2545 = vmatprep.subr.bf16.mxu0 0
        %2546 = vmatpush1.bf16.xpose.msra.mxu0 0
        %2547 = vmatprep.subr.bf16.mxu0 0
        %2548 = vmatpush1.bf16.xpose.msra.mxu0 0
        %2549 = vmatprep.subr.bf16.mxu0 0
        %2550 = vmatpush1.bf16.xpose.msra.mxu0 0
        %2551 = vmatprep.subr.bf16.mxu0 0
        %2552 = vmatpush1.bf16.xpose.msra.mxu0 0
        %2553 = vmatprep.subr.bf16.mxu0 0
        %2554 = vmatpush1.bf16.xpose.msra.mxu0 0
        %2555 = vmatprep.subr.bf16.mxu0 0
        %2556 = vmatpush1.bf16.xpose.msra.mxu0 0
        %2557 = vmatprep.subr.bf16.mxu0 0
        %2558 = vmatpush1.bf16.xpose.msra.mxu0 %v2541
        %2559 = vmatprep.subr.bf16.mxu0 0
        %2560 = vmatpush2.bf16.xpose.msra.mxu0 0
        %2561 = vmatprep.subr.bf16.mxu0 0
        %2562 = vmatpush2.bf16.xpose.msra.mxu0 0
        %2563 = vmatprep.subr.bf16.mxu0 0
        %2564 = vmatpush2.bf16.xpose.msra.mxu0 0
        %2565 = vmatprep.subr.bf16.mxu0 0
        %2566 = vmatpush2.bf16.xpose.msra.mxu0 0
        %2567 = vmatprep.subr.bf16.mxu0 0
        %2568 = vmatpush2.bf16.xpose.msra.mxu0 0
        %2569 = vmatprep.subr.bf16.mxu0 0
        %2570 = vmatpush2.bf16.xpose.msra.mxu0 0
        %2571 = vmatprep.subr.bf16.mxu0 0
        %2572 = vmatpush2.bf16.xpose.msra.mxu0 0
        %2573 = vmatprep.subr.bf16.mxu0 0
        %2574 = vmatpush2.bf16.xpose.msra.mxu0 0
        %2575 = vmatprep.mubr.bf16.mxu0 0
        %2576 = vmatmul.mubr.bf16.gmra.mxu0 %v2538
        %v2577 = vpop.f32.mrf.mxu0
        %v2578 = vadd.f32 0.0, %v2577
        %v2579 = vpop.f32.mrf.mxu0
        %v2580 = vpop.f32.mrf.mxu0
        %v2581 = vpop.f32.mrf.mxu0
        %2582 = vdwg.mxu0
        %v2583 = vsel %vm787, %v2578, -inf
        %2584 = vmax.xlane.f32.xlu0 %v2583
        %v2585 = vpop.xlane.xlu0 %2584
        %v2586 = vsub.f32 %v2578, %v2585
        %v2587 = vmul.f32 %v2586, 1.442695
        %v2588 = vpow.pop %v2587
        %v2589 = vsel %vm787, %v2588, 0.0
        %2590 = vadd.xlane.f32.xlu0 %v2589
        %v2591 = vpop.xlane.xlu0 %2590
        %v2592 = vrcp.pop %v2591
        %v2593 = vmul.f32 %v2588, %v2592
        %v2594 = vpack.c.bf16 %v2593, %v2593
        %2595 = vrot.lane.b32.xlu0 %v1874, 72
        %v2596 = vpop.permute.xlu0 %2595
        %v2598 = vsel %vm787, %v2594, 0
        %v2601 = vsel %vm806, %v2596, 0
        %2603 = vmatprep.subr.bf16.mxu0 0
        %2604 = vmatpush1.bf16.msra.mxu0 0
        %2605 = vmatprep.subr.bf16.mxu0 0
        %2606 = vmatpush1.bf16.msra.mxu0 0
        %2607 = vmatprep.subr.bf16.mxu0 0
        %2608 = vmatpush1.bf16.msra.mxu0 0
        %2609 = vmatprep.subr.bf16.mxu0 0
        %2610 = vmatpush1.bf16.msra.mxu0 0
        %2611 = vmatprep.subr.bf16.mxu0 0
        %2612 = vmatpush1.bf16.msra.mxu0 0
        %2613 = vmatprep.subr.bf16.mxu0 0
        %2614 = vmatpush1.bf16.msra.mxu0 0
        %2615 = vmatprep.subr.bf16.mxu0 0
        %2616 = vmatpush1.bf16.msra.mxu0 0
        %2617 = vmatprep.subr.bf16.mxu0 0
        %2618 = vmatpush1.bf16.msra.mxu0 %v2601
        %2619 = vmatprep.subr.bf16.mxu0 0
        %2620 = vmatpush2.bf16.msra.mxu0 0
        %2621 = vmatprep.subr.bf16.mxu0 0
        %2622 = vmatpush2.bf16.msra.mxu0 0
        %2623 = vmatprep.subr.bf16.mxu0 0
        %2624 = vmatpush2.bf16.msra.mxu0 0
        %2625 = vmatprep.subr.bf16.mxu0 0
        %2626 = vmatpush2.bf16.msra.mxu0 0
        %2627 = vmatprep.subr.bf16.mxu0 0
        %2628 = vmatpush2.bf16.msra.mxu0 0
        %2629 = vmatprep.subr.bf16.mxu0 0
        %2630 = vmatpush2.bf16.msra.mxu0 0
        %2631 = vmatprep.subr.bf16.mxu0 0
        %2632 = vmatpush2.bf16.msra.mxu0 0
        %2633 = vmatprep.subr.bf16.mxu0 0
        %2634 = vmatpush2.bf16.msra.mxu0 0
        %2635 = vmatprep.mubr.bf16.mxu0 0
        %2636 = vmatmul.mubr.bf16.gmra.mxu0 %v2598
        %v2637 = vpop.f32.mrf.mxu0
        %v2638 = vadd.f32 0.0, %v2637
        %v2639 = vpop.f32.mrf.mxu0
        %v2640 = vpop.f32.mrf.mxu0
        %v2641 = vpop.f32.mrf.mxu0
        %2642 = vdwg.mxu0
        %2643 = vrot.lane.b32.xlu0 %v1807, 100
        %v2644 = vpop.permute.xlu0 %2643
        %2645 = vrot.lane.b32.xlu0 %v1874, 100
        %v2646 = vpop.permute.xlu0 %2645
        %v2648 = vsel %vm740, %v2644, 0
        %v2651 = vsel %vm740, %v2646, 0
        %2653 = vmatprep.subr.bf16.mxu0 0
        %2654 = vmatpush1.bf16.xpose.msra.mxu0 0
        %2655 = vmatprep.subr.bf16.mxu0 0
        %2656 = vmatpush1.bf16.xpose.msra.mxu0 0
        %2657 = vmatprep.subr.bf16.mxu0 0
        %2658 = vmatpush1.bf16.xpose.msra.mxu0 0
        %2659 = vmatprep.subr.bf16.mxu0 0
        %2660 = vmatpush1.bf16.xpose.msra.mxu0 0
        %2661 = vmatprep.subr.bf16.mxu0 0
        %2662 = vmatpush1.bf16.xpose.msra.mxu0 0
        %2663 = vmatprep.subr.bf16.mxu0 0
        %2664 = vmatpush1.bf16.xpose.msra.mxu0 0
        %2665 = vmatprep.subr.bf16.mxu0 0
        %2666 = vmatpush1.bf16.xpose.msra.mxu0 0
        %2667 = vmatprep.subr.bf16.mxu0 0
        %2668 = vmatpush1.bf16.xpose.msra.mxu0 %v2651
        %2669 = vmatprep.subr.bf16.mxu0 0
        %2670 = vmatpush2.bf16.xpose.msra.mxu0 0
        %2671 = vmatprep.subr.bf16.mxu0 0
        %2672 = vmatpush2.bf16.xpose.msra.mxu0 0
        %2673 = vmatprep.subr.bf16.mxu0 0
        %2674 = vmatpush2.bf16.xpose.msra.mxu0 0
        %2675 = vmatprep.subr.bf16.mxu0 0
        %2676 = vmatpush2.bf16.xpose.msra.mxu0 0
        %2677 = vmatprep.subr.bf16.mxu0 0
        %2678 = vmatpush2.bf16.xpose.msra.mxu0 0
        %2679 = vmatprep.subr.bf16.mxu0 0
        %2680 = vmatpush2.bf16.xpose.msra.mxu0 0
        %2681 = vmatprep.subr.bf16.mxu0 0
        %2682 = vmatpush2.bf16.xpose.msra.mxu0 0
        %2683 = vmatprep.subr.bf16.mxu0 0
        %2684 = vmatpush2.bf16.xpose.msra.mxu0 0
        %2685 = vmatprep.mubr.bf16.mxu0 0
        %2686 = vmatmul.mubr.bf16.gmra.mxu0 %v2648
        %v2687 = vpop.f32.mrf.mxu0
        %v2688 = vadd.f32 0.0, %v2687
        %v2689 = vpop.f32.mrf.mxu0
        %v2690 = vpop.f32.mrf.mxu0
        %v2691 = vpop.f32.mrf.mxu0
        %2692 = vdwg.mxu0
        %v2693 = vsel %vm787, %v2688, -inf
        %2694 = vmax.xlane.f32.xlu0 %v2693
        %v2695 = vpop.xlane.xlu0 %2694
        %v2696 = vsub.f32 %v2688, %v2695
        %v2697 = vmul.f32 %v2696, 1.442695
        %v2698 = vpow.pop %v2697
        %v2699 = vsel %vm787, %v2698, 0.0
        %2700 = vadd.xlane.f32.xlu0 %v2699
        %v2701 = vpop.xlane.xlu0 %2700
        %v2702 = vrcp.pop %v2701
        %v2703 = vmul.f32 %v2698, %v2702
        %v2704 = vpack.c.bf16 %v2703, %v2703
        %2705 = vrot.lane.b32.xlu0 %v1874, 68
        %v2706 = vpop.permute.xlu0 %2705
        %v2708 = vsel %vm787, %v2704, 0
        %v2711 = vsel %vm806, %v2706, 0
        %2713 = vmatprep.subr.bf16.mxu0 0
        %2714 = vmatpush1.bf16.msra.mxu0 0
        %2715 = vmatprep.subr.bf16.mxu0 0
        %2716 = vmatpush1.bf16.msra.mxu0 0
        %2717 = vmatprep.subr.bf16.mxu0 0
        %2718 = vmatpush1.bf16.msra.mxu0 0
        %2719 = vmatprep.subr.bf16.mxu0 0
        %2720 = vmatpush1.bf16.msra.mxu0 0
        %2721 = vmatprep.subr.bf16.mxu0 0
        %2722 = vmatpush1.bf16.msra.mxu0 0
        %2723 = vmatprep.subr.bf16.mxu0 0
        %2724 = vmatpush1.bf16.msra.mxu0 0
        %2725 = vmatprep.subr.bf16.mxu0 0
        %2726 = vmatpush1.bf16.msra.mxu0 0
        %2727 = vmatprep.subr.bf16.mxu0 0
        %2728 = vmatpush1.bf16.msra.mxu0 %v2711
        %2729 = vmatprep.subr.bf16.mxu0 0
        %2730 = vmatpush2.bf16.msra.mxu0 0
        %2731 = vmatprep.subr.bf16.mxu0 0
        %2732 = vmatpush2.bf16.msra.mxu0 0
        %2733 = vmatprep.subr.bf16.mxu0 0
        %2734 = vmatpush2.bf16.msra.mxu0 0
        %2735 = vmatprep.subr.bf16.mxu0 0
        %2736 = vmatpush2.bf16.msra.mxu0 0
        %2737 = vmatprep.subr.bf16.mxu0 0
        %2738 = vmatpush2.bf16.msra.mxu0 0
        %2739 = vmatprep.subr.bf16.mxu0 0
        %2740 = vmatpush2.bf16.msra.mxu0 0
        %2741 = vmatprep.subr.bf16.mxu0 0
        %2742 = vmatpush2.bf16.msra.mxu0 0
        %2743 = vmatprep.subr.bf16.mxu0 0
        %2744 = vmatpush2.bf16.msra.mxu0 0
        %2745 = vmatprep.mubr.bf16.mxu0 0
        %2746 = vmatmul.mubr.bf16.gmra.mxu0 %v2708
        %v2747 = vpop.f32.mrf.mxu0
        %v2748 = vadd.f32 0.0, %v2747
        %v2749 = vpop.f32.mrf.mxu0
        %v2750 = vpop.f32.mrf.mxu0
        %v2751 = vpop.f32.mrf.mxu0
        %2752 = vdwg.mxu0
        %2754 = vrot.lane.b32.xlu0 %v2088, 4
        %v2755 = vpop.permute.xlu0 %2754
        %2758 = vrot.lane.b32.xlu0 %v2198, 8
        %v2759 = vpop.permute.xlu0 %2758
        %2762 = vrot.lane.b32.xlu0 %v2308, 12
        %v2763 = vpop.permute.xlu0 %2762
        %2766 = vrot.lane.b32.xlu0 %v2418, 16
        %v2767 = vpop.permute.xlu0 %2766
        %2770 = vrot.lane.b32.xlu0 %v2528, 20
        %v2771 = vpop.permute.xlu0 %2770
        %2774 = vrot.lane.b32.xlu0 %v2638, 24
        %v2775 = vpop.permute.xlu0 %2774
        %2778 = vrot.lane.b32.xlu0 %v2748, 28
        %v2779 = vpop.permute.xlu0 %2778
        %v2781 = vsel %vm740, %v1977, %v2755
        %v2782 = vsel %vm787, %v2781, %v2759
        %v2783 = vsel %vm1651, %v2782, %v2763
        %v2784 = vsel %vm1653, %v2783, %v2767
        %v2785 = vsel %vm1655, %v2784, %v2771
        %v2786 = vsel %vm1657, %v2785, %v2775
        %v2787 = vsel %vm1659, %v2786, %v2779
        %v2788 = vpack.c.bf16 %v2787, %v2787
        %v2789 = vld [vmem:[#allocation8] sm:$0xf]
        %v2790 = vld [vmem:[#allocation8 + $0x4] sm:$0xf]
        %v2791 = vld [vmem:[#allocation8 + $0x8] sm:$0xf]
        %v2792 = vld [vmem:[#allocation8 + $0xc] sm:$0xf]
        %v2793 = vld [vmem:[%s8] sm:$0x1]
        %v2795 = vlaneseq
        %v2796 = vshrl.u32 %v2795, 7
        %v2797 = vsub.s32 0, %v2796
        %v2798 = vrot.slane %v2793, %v2797
        %v2804 = vunpack.c.l.b16 %v2789
        %v2805 = vunpack.c.l.b16 %v2790
        %v2806 = vunpack.c.l.b16 %v2791
        %v2807 = vunpack.c.l.b16 %v2792
        %v2808 = vpack.c.b16 %v2805, %v2804
        %v2809 = vpack.c.b16 %v2807, %v2806
        %v2813 = vsel %vm628, %v2788, 0
        %2815 = vmatprep.subr.bf16.mxu0 0
        %2816 = vmatpush1.bf16.msra.mxu0 0
        %2817 = vmatprep.subr.bf16.mxu0 0
        %2818 = vmatpush1.bf16.msra.mxu0 0
        %2819 = vmatprep.subr.bf16.mxu0 0
        %2820 = vmatpush1.bf16.msra.mxu0 0
        %2821 = vmatprep.subr.bf16.mxu0 0
        %2822 = vmatpush1.bf16.msra.mxu0 0
        %2823 = vmatprep.subr.bf16.mxu0 0
        %2824 = vmatpush1.bf16.msra.mxu0 0
        %2825 = vmatprep.subr.bf16.mxu0 0
        %2826 = vmatpush1.bf16.msra.mxu0 0
        %2827 = vmatprep.subr.bf16.mxu0 0
        %2828 = vmatpush1.bf16.msra.mxu0 %v2809
        %2829 = vmatprep.subr.bf16.mxu0 0
        %2830 = vmatpush1.bf16.msra.mxu0 %v2808
        %2831 = vmatprep.subr.bf16.mxu0 0
        %2832 = vmatpush2.bf16.msra.mxu0 0
        %2833 = vmatprep.subr.bf16.mxu0 0
        %2834 = vmatpush2.bf16.msra.mxu0 0
        %2835 = vmatprep.subr.bf16.mxu0 0
        %2836 = vmatpush2.bf16.msra.mxu0 0
        %2837 = vmatprep.subr.bf16.mxu0 0
        %2838 = vmatpush2.bf16.msra.mxu0 0
        %2839 = vmatprep.subr.bf16.mxu0 0
        %2840 = vmatpush2.bf16.msra.mxu0 0
        %2841 = vmatprep.subr.bf16.mxu0 0
        %2842 = vmatpush2.bf16.msra.mxu0 0
        %2843 = vmatprep.subr.bf16.mxu0 0
        %2844 = vmatpush2.bf16.msra.mxu0 0
        %2845 = vmatprep.subr.bf16.mxu0 0
        %2846 = vmatpush2.bf16.msra.mxu0 0
        %2847 = vmatprep.mubr.bf16.mxu0 0
        %2848 = vmatmul.mubr.bf16.gmra.mxu0 %v2813
        %v2849 = vpop.f32.mrf.mxu0
        %v2850 = vadd.f32 %v2798, %v2849
        %v2851 = vpop.f32.mrf.mxu0
        %v2852 = vpop.f32.mrf.mxu0
        %v2853 = vpop.f32.mrf.mxu0
        %2854 = vdwg.mxu0
        %v2855 = vmul.f32 %v2850, 0.5
        %v2856 = vmul.f32 %v2850, 0.044715
        %v2857 = vmul.f32 %v2856, %v2850
        %v2858 = vmul.f32 %v2857, %v2850
        %v2859 = vadd.f32 %v2850, %v2858
        %v2860 = vmul.f32 %v2859, 0.7978846
        %v2861 = vtanh.pop %v2860
        %v2862 = vadd.f32 %v2861, 1.0
        %v2863 = vmul.f32 %v2855, %v2862
        %v2864 = vstv %s597
        %v2865 = vmul.f32 %v2864, %v2863
        %v2866 = vadd.f32 %v1739, %v2865
        %v2867 = vpack.c.bf16 %v2866, %v2866
        %v2868 = vld [vmem:[#allocation9] sm:$0xf]
        %v2869 = vld [vmem:[#allocation9 + $0x4] sm:$0xf]
        %v2870 = vld [vmem:[#allocation9 + $0x8] sm:$0xf]
        %v2871 = vld [vmem:[#allocation9 + $0xc] sm:$0xf]
        %v2872 = vld [vmem:[%s10] sm:$0x1]
        %v2874 = vlaneseq
        %v2875 = vshrl.u32 %v2874, 7
        %v2876 = vsub.s32 0, %v2875
        %v2877 = vrot.slane %v2872, %v2876
        %v2883 = vunpack.c.l.b16 %v2868
        %v2884 = vunpack.c.l.b16 %v2869
        %v2885 = vunpack.c.l.b16 %v2870
        %v2886 = vunpack.c.l.b16 %v2871
        %v2887 = vpack.c.b16 %v2884, %v2883
        %v2888 = vpack.c.b16 %v2886, %v2885
        %v2892 = vsel %vm628, %v2867, 0
        %2894 = vmatprep.subr.bf16.mxu0 0
        %2895 = vmatpush1.bf16.msra.mxu0 0
        %2896 = vmatprep.subr.bf16.mxu0 0
        %2897 = vmatpush1.bf16.msra.mxu0 0
        %2898 = vmatprep.subr.bf16.mxu0 0
        %2899 = vmatpush1.bf16.msra.mxu0 0
        %2900 = vmatprep.subr.bf16.mxu0 0
        %2901 = vmatpush1.bf16.msra.mxu0 0
        %2902 = vmatprep.subr.bf16.mxu0 0
        %2903 = vmatpush1.bf16.msra.mxu0 0
        %2904 = vmatprep.subr.bf16.mxu0 0
        %2905 = vmatpush1.bf16.msra.mxu0 0
        %2906 = vmatprep.subr.bf16.mxu0 0
        %2907 = vmatpush1.bf16.msra.mxu0 %v2888
        %2908 = vmatprep.subr.bf16.mxu0 0
        %2909 = vmatpush1.bf16.msra.mxu0 %v2887
        %2910 = vmatprep.subr.bf16.mxu0 0
        %2911 = vmatpush2.bf16.msra.mxu0 0
        %2912 = vmatprep.subr.bf16.mxu0 0
        %2913 = vmatpush2.bf16.msra.mxu0 0
        %2914 = vmatprep.subr.bf16.mxu0 0
        %2915 = vmatpush2.bf16.msra.mxu0 0
        %2916 = vmatprep.subr.bf16.mxu0 0
        %2917 = vmatpush2.bf16.msra.mxu0 0
        %2918 = vmatprep.subr.bf16.mxu0 0
        %2919 = vmatpush2.bf16.msra.mxu0 0
        %2920 = vmatprep.subr.bf16.mxu0 0
        %2921 = vmatpush2.bf16.msra.mxu0 0
        %2922 = vmatprep.subr.bf16.mxu0 0
        %2923 = vmatpush2.bf16.msra.mxu0 0
        %2924 = vmatprep.subr.bf16.mxu0 0
        %2925 = vmatpush2.bf16.msra.mxu0 0
        %2926 = vmatprep.mubr.bf16.mxu0 0
        %2927 = vmatmul.mubr.bf16.gmra.mxu0 %v2892
        %v2928 = vpop.f32.mrf.mxu0
        %v2929 = vadd.f32 %v2877, %v2928
        %v2930 = vpop.f32.mrf.mxu0
        %v2931 = vpop.f32.mrf.mxu0
        %v2932 = vpop.f32.mrf.mxu0
        %2933 = vdwg.mxu0
        %v2934 = vmul.f32 %v2929, 0.5
        %v2935 = vmul.f32 %v2929, 0.044715
        %v2936 = vmul.f32 %v2935, %v2929
        %v2937 = vmul.f32 %v2936, %v2929
        %v2938 = vadd.f32 %v2929, %v2937
        %v2939 = vmul.f32 %v2938, 0.7978846
        %v2940 = vtanh.pop %v2939
        %v2941 = vadd.f32 %v2940, 1.0
        %v2942 = vmul.f32 %v2934, %v2941
        %v2943 = vpack.c.bf16 %v2942, %v2942
        %v2944 = vld [vmem:[%s11] sm:$0xf]
        %v2945 = vld [vmem:[%s11 + $0x4] sm:$0xf]
        %v2946 = vld [vmem:[%s11 + $0x8] sm:$0xf]
        %v2947 = vld [vmem:[%s11 + $0xc] sm:$0xf]
        %v2948 = vld [vmem:[%s11 + $0x10] sm:$0xf]
        %v2949 = vld [vmem:[%s11 + $0x14] sm:$0xf]
        %v2950 = vld [vmem:[%s11 + $0x18] sm:$0xf]
        %v2951 = vld [vmem:[%s11 + $0x1c] sm:$0xf]
        %v2952 = vld [vmem:[%s12] sm:$0x1]
        %v2954 = vlaneseq
        %v2955 = vshrl.u32 %v2954, 7
        %v2956 = vsub.s32 0, %v2955
        %v2957 = vrot.slane %v2952, %v2956
        %v2967 = vunpack.c.l.b16 %v2944
        %v2968 = vunpack.c.l.b16 %v2945
        %v2969 = vunpack.c.l.b16 %v2946
        %v2970 = vunpack.c.l.b16 %v2947
        %v2971 = vunpack.c.l.b16 %v2948
        %v2972 = vunpack.c.l.b16 %v2949
        %v2973 = vunpack.c.l.b16 %v2950
        %v2974 = vunpack.c.l.b16 %v2951
        %v2975 = vpack.c.b16 %v2968, %v2967
        %v2976 = vpack.c.b16 %v2970, %v2969
        %v2977 = vpack.c.b16 %v2972, %v2971
        %v2978 = vpack.c.b16 %v2974, %v2973
        %vm2983 = vcmask 523264
        %v2985 = vsel %vm2983, %v2943, 0
        %2987 = vmatprep.subr.bf16.mxu0 0
        %2988 = vmatpush1.bf16.msra.mxu0 0
        %2989 = vmatprep.subr.bf16.mxu0 0
        %2990 = vmatpush1.bf16.msra.mxu0 0
        %2991 = vmatprep.subr.bf16.mxu0 0
        %2992 = vmatpush1.bf16.msra.mxu0 0
        %2993 = vmatprep.subr.bf16.mxu0 0
        %2994 = vmatpush1.bf16.msra.mxu0 0
        %2995 = vmatprep.subr.bf16.mxu0 0
        %2996 = vmatpush1.bf16.msra.mxu0 %v2978
        %2997 = vmatprep.subr.bf16.mxu0 0
        %2998 = vmatpush1.bf16.msra.mxu0 %v2977
        %2999 = vmatprep.subr.bf16.mxu0 0
        %3000 = vmatpush1.bf16.msra.mxu0 %v2976
        %3001 = vmatprep.subr.bf16.mxu0 0
        %3002 = vmatpush1.bf16.msra.mxu0 %v2975
        %3003 = vmatprep.subr.bf16.mxu0 0
        %3004 = vmatpush2.bf16.msra.mxu0 0
        %3005 = vmatprep.subr.bf16.mxu0 0
        %3006 = vmatpush2.bf16.msra.mxu0 0
        %3007 = vmatprep.subr.bf16.mxu0 0
        %3008 = vmatpush2.bf16.msra.mxu0 0
        %3009 = vmatprep.subr.bf16.mxu0 0
        %3010 = vmatpush2.bf16.msra.mxu0 0
        %3011 = vmatprep.subr.bf16.mxu0 0
        %3012 = vmatpush2.bf16.msra.mxu0 0
        %3013 = vmatprep.subr.bf16.mxu0 0
        %3014 = vmatpush2.bf16.msra.mxu0 0
        %3015 = vmatprep.subr.bf16.mxu0 0
        %3016 = vmatpush2.bf16.msra.mxu0 0
        %3017 = vmatprep.subr.bf16.mxu0 0
        %3018 = vmatpush2.bf16.msra.mxu0 0
        %3019 = vmatprep.mubr.bf16.mxu0 0
        %3020 = vmatmul.mubr.bf16.gmra.mxu0 %v2985
        %v3021 = vpop.f32.mrf.mxu0
        %v3022 = vadd.f32 %v2957, %v3021
        %v3023 = vpop.f32.mrf.mxu0
        %v3024 = vpop.f32.mrf.mxu0
        %v3025 = vpop.f32.mrf.mxu0
        %3026 = vdwg.mxu0
        %v3027 = vmul.f32 %v3022, 0.5
        %v3028 = vmul.f32 %v3022, 0.044715
        %v3029 = vmul.f32 %v3028, %v3022
        %v3030 = vmul.f32 %v3029, %v3022
        %v3031 = vadd.f32 %v3022, %v3030
        %v3032 = vmul.f32 %v3031, 0.7978846
        %v3033 = vtanh.pop %v3032
        %v3034 = vadd.f32 %v3033, 1.0
        %v3035 = vmul.f32 %v3027, %v3034
        %v3036 = vstv %s598
        %v3037 = vmul.f32 %v3036, %v3035
        %v3038 = vadd.f32 %v2866, %v3037
        %3039 = vst.msk [vmem:[%s579] sm:$0xff] %vm628, %v3038
        %s3040 = sand.u32 %s365, 1
        %s3041 = scalar_lea.sflag [#allocation4], %s3040
        %s3042 = sand.u32 %s365, 1
        %s3043 = smul.addr %s3042, 8
        %s3044 = scalar_lea.vmem [#allocation12], %s3043
        // Predicated region
        $region97: #{tpu_custom_call.1} parent=75 // pred_check
          %p3045 = pneg %p375
        $region98: #{tpu_custom_call.1} parent=75 // pred_check_branch
          %3047 = sbr.rel (%p3045) target = $region100
        $region99: #{tpu_custom_call.1} parent=75 // pred_region
          %s3049 = ssub.s32 128, 128
          %3050 = vsyncadd %s3041, %s3049
          %s3051 = sadd.s32 %s37, %s36
          %s3052 = smul.addr %s3051, 128
          %s3053 = scalar_lea.hbm %s14, %s3052
          %s3055 = sshll.u32 %s3044, 4
          %s3056 = int_to_ptr.vmem [resolvable:$true] %s3055
          %3058 = dma.vmem_to_hbm [thread:$0]  %s3056, 128, %s3053, %s3041
        $region100: #{tpu_custom_call.1} parent=75 // pred_fallthru
          _
      $region76: #{tpu_custom_call.1} parent=5 // pred_fallthru
        _
      %p3059 = scmp.le.s32.totalorder 2, %s27
      // Predicated region
      $region101: #{tpu_custom_call.1} parent=5 // pred_check
        %p3060 = pneg %p3059
      $region102: #{tpu_custom_call.1} parent=5 // pred_check_branch
        %3062 = sbr.rel (%p3060) target = $region104
      $region103: #{tpu_custom_call.1} parent=5 // pred_region
        %s3063 = ssub.s32 %s27, 2
        // Predicated region
        $region105: #{tpu_custom_call.1} parent=103 // pred_check
          %p3064 = pneg %p381
        $region106: #{tpu_custom_call.1} parent=103 // pred_check_branch
          %3066 = sbr.rel (%p3064) target = $region108
        $region107: #{tpu_custom_call.1} parent=103 // pred_region
          %s3067 = sand.u32 %s366, 1
          %s3068 = scalar_lea.sflag [#allocation4], %s3067
          %s3069 = sand.u32 %s366, 1
          %s3070 = smul.addr %s3069, 8
          %s3071 = scalar_lea.vmem [#allocation12], %s3070
          %3072 = dma.done %s3068, 128
        $region108: #{tpu_custom_call.1} parent=103 // pred_fallthru
          _
      $region104: #{tpu_custom_call.1} parent=5 // pred_fallthru
        _
    $region6: #{tpu_custom_call.1} parent=1 // loop_footer
      %s31 = sadd.s32 1, %s27
    $region7: #{tpu_custom_call.1} parent=1 // loop_footer_branch
      %26 = sbr.rel target = $region3
    $region8: #{tpu_custom_call.1} parent=1 // loop_exit
      _
    %3073 = vsyncpa [#allocation3], 1
    %s3074 = scalar_lea.sflag [#allocation3], 1
    %3075 = vsyncpa %s3074, 1
    %3076 = vsyncpa [#allocation7], 1
    %3077 = vsyncpa [#allocation10], 1
    %3078 = vsyncpa [#allocation4], 1
    %s3079 = scalar_lea.sflag [#allocation4], 1
    %3080 = vsyncpa %s3079, 1
    %3081 = vsyncpa [#allocation5], 1
    %s3082 = scalar_lea.sflag [#allocation5], 1
    %3083 = vsyncpa %s3082, 1

</llo_original>
